<compile_context>
chip_gen: v7x
topology: tpu7x:2x2x1
jax: 0.10.0
libtpu: 0.0.40
codegen_flags: <defaults>
</compile_context>

<pallas_src>
import math

import jax
import jax.numpy as jnp
from jax.experimental import pallas as pl
from jax.experimental.pallas import tpu as pltpu

# ----- mini-BERT config (small but layout-friendly: H, FFN multiples of 128) -----
B, S, H = 2, 16, 128          # batch, sequence length, hidden size
HEADS, DH = 2, 64             # attention heads, head dim
FFN = 256                     # intermediate size
LAYERS = 2                    # encoder layers
VOCAB, TYPES = 64, 2          # vocab / token-type sizes
EPS = 1e-12                   # BERT LayerNorm eps

# rows of the packed per-layer vector array (LAYERS, 8, 3H)
VEC_QKV_B, VEC_O_B, VEC_LN1_G, VEC_LN1_B = 0, 1, 2, 3
VEC_FC1_B, VEC_FC2_B, VEC_LN2_G, VEC_LN2_B = 4, 5, 6, 7


# ---------------------------------------------------------------------------
# Single fused kernel: embedding-LN + all encoder layers + pooler + regressor
# ---------------------------------------------------------------------------
def _bert_kernel(xemb_ref, bias_ref, eg_ref, eb_ref,
                 qkvw_ref, ow_ref, fc1w_ref, fc2w_ref, vec_ref,
                 poolw_ref, poolb_ref, regw_ref, regb_ref,
                 out_ref):
    bf16, f32 = jnp.bfloat16, jnp.float32

    def layer_norm(x, g, b):
        mu = jnp.mean(x, axis=-1, keepdims=True)
        xc = x - mu
        var = jnp.mean(xc * xc, axis=-1, keepdims=True)
        return xc * jax.lax.rsqrt(var + EPS) * g + b

    # embedding LayerNorm
    x = layer_norm(xemb_ref[...], eg_ref[...], eb_ref[...])        # (B*S, H) f32

    scale = 1.0 / math.sqrt(DH)
    attn_bias = bias_ref[...]                                      # (B*HEADS*S,)^2 f32

    for l in range(LAYERS):                                        # static unroll
        vecs = vec_ref[l]                                          # (8, 3H) f32
        qkv_b = vecs[VEC_QKV_B:VEC_QKV_B + 1, :]
        o_b = vecs[VEC_O_B:VEC_O_B + 1, :H]
        ln1_g = vecs[VEC_LN1_G:VEC_LN1_G + 1, :H]
        ln1_b = vecs[VEC_LN1_B:VEC_LN1_B + 1, :H]
        fc1_b = vecs[VEC_FC1_B:VEC_FC1_B + 1, :FFN]
        fc2_b = vecs[VEC_FC2_B:VEC_FC2_B + 1, :H]
        ln2_g = vecs[VEC_LN2_G:VEC_LN2_G + 1, :H]
        ln2_b = vecs[VEC_LN2_B:VEC_LN2_B + 1, :H]

        # ---- fused QKV projection; single bf16 cast after the bias-add ----
        qkv = (jnp.dot(x.astype(bf16), qkvw_ref[l],
                       preferred_element_type=f32) + qkv_b).astype(bf16)

        # ---- block-diagonal attention: all (batch, head) pairs in 2 MXU ops ----
        # stack per-(b,h) tiles into (B*HEADS*S, DH); order = (b major, h minor)
        qall = jnp.concatenate(
            [qkv[b * S:(b + 1) * S, h * DH:(h + 1) * DH]
             for b in range(B) for h in range(HEADS)], axis=0)     # (64, DH) bf16
        kall = jnp.concatenate(
            [qkv[b * S:(b + 1) * S, H + h * DH:H + (h + 1) * DH]
             for b in range(B) for h in range(HEADS)], axis=0)
        vall = jnp.concatenate(
            [qkv[b * S:(b + 1) * S, 2 * H + h * DH:2 * H + (h + 1) * DH]
             for b in range(B) for h in range(HEADS)], axis=0)

        s = jax.lax.dot_general(qall, kall,
                                dimension_numbers=(((1,), (1,)), ((), ())),
                                preferred_element_type=f32)        # (64, 64)
        s = s * scale + attn_bias              # -1e4 on cross-block / padded keys
        s = s - jnp.max(s, axis=-1, keepdims=True)                 # stable softmax
        p = jnp.exp(s)
        p = p * pl.reciprocal(jnp.sum(p, axis=-1, keepdims=True), approx=True)
        ctx_all = jnp.dot(p.astype(bf16), vall,
                          preferred_element_type=f32)              # (64, DH)

        # rearrange back to token-major (B*S, H), lane-dense
        ctx = jnp.concatenate(
            [jnp.concatenate(
                [ctx_all[(b * HEADS + h) * S:(b * HEADS + h + 1) * S, :]
                 for h in range(HEADS)], axis=-1)
             for b in range(B)], axis=0)                           # (B*S, H) f32

        # ---- attention output projection + fused residual-add + LayerNorm ----
        attn = (jnp.dot(ctx.astype(bf16), ow_ref[l],
                        preferred_element_type=f32) + o_b)
        x = layer_norm(attn + x, ln1_g, ln1_b)

        # ---- FFN with tanh-approx GELU + fused residual-add + LayerNorm ----
        h1 = (jnp.dot(x.astype(bf16), fc1w_ref[l],
                      preferred_element_type=f32) + fc1_b)
        h1 = jax.nn.gelu(h1, approximate=True)
        h2 = (jnp.dot(h1.astype(bf16), fc2w_ref[l],
                      preferred_element_type=f32) + fc2_b)
        x = layer_norm(h2 + x, ln2_g, ln2_b)

    # ---- pooler (tanh on CLS) + STS-B head (5 * sigmoid) ----
    cls = jnp.concatenate([x[b * S:b * S + 1, :] for b in range(B)], axis=0)  # (B, H)
    pooled = jnp.tanh(
        jnp.dot(cls.astype(bf16), poolw_ref[...],
                preferred_element_type=f32) + poolb_ref[...])
    # (H -> 1) regressor as a VPU reduction instead of an N=1 MXU matmul.
    logit = jnp.sum(pooled * regw_ref[...], axis=-1, keepdims=True) + regb_ref[...]
    # lane-dense (B, 128) store; wrapper slices [:, :1]
    out_ref[...] = jnp.broadcast_to(5.0 * jax.nn.sigmoid(logit), (B, H))


# ---------------------------------------------------------------------------
# Deterministic synthetic parameters (BERT-shaped, shrunk; matmul weights bf16)
# ---------------------------------------------------------------------------
def _pack_layer_vectors(qkv_b, o_b, ln1_g, ln1_b, fc1_b, fc2_b, ln2_g, ln2_b):
    """Pack the 8 per-layer (LAYERS, 1, w) vectors into one (LAYERS, 8, 3H)."""
    def pad(v):
        return jnp.pad(v, ((0, 0), (0, 0), (0, 3 * H - v.shape[-1])))
    return jnp.concatenate(
        [pad(v) for v in (qkv_b, o_b, ln1_g, ln1_b, fc1_b, fc2_b, ln2_g, ln2_b)],
        axis=1)


def init_params(key):
    keys = iter(jax.random.split(key, 64))

    def w(shape, scale=0.02, dtype=jnp.float32):
        return (scale * jax.random.normal(next(keys), shape, jnp.float32)).astype(dtype)

    vec_pack = _pack_layer_vectors(
        jnp.zeros((LAYERS, 1, 3 * H), jnp.float32),   # qkv_b
        jnp.zeros((LAYERS, 1, H), jnp.float32),       # o_b
        jnp.ones((LAYERS, 1, H), jnp.float32),        # ln1_g
        jnp.zeros((LAYERS, 1, H), jnp.float32),       # ln1_b
        jnp.zeros((LAYERS, 1, FFN), jnp.float32),     # fc1_b
        jnp.zeros((LAYERS, 1, H), jnp.float32),       # fc2_b
        jnp.ones((LAYERS, 1, H), jnp.float32),        # ln2_g
        jnp.zeros((LAYERS, 1, H), jnp.float32))       # ln2_b

    return {
        "word_emb": w((VOCAB, H)),
        "pos_emb": w((S, H)),
        "type_emb": w((TYPES, H)),
        "emb_ln_g": jnp.ones((1, H), jnp.float32),
        "emb_ln_b": jnp.zeros((1, H), jnp.float32),
        # stacked per-layer matmul weights (bf16 -> half the DMA bytes)
        "qkv_w": w((LAYERS, H, 3 * H), dtype=jnp.bfloat16),
        "o_w": w((LAYERS, H, H), dtype=jnp.bfloat16),
        "fc1_w": w((LAYERS, H, FFN), dtype=jnp.bfloat16),
        "fc2_w": w((LAYERS, FFN, H), dtype=jnp.bfloat16),
        # packed per-layer bias / LayerNorm vectors
        "vec_pack": vec_pack,
        # pooler + regressor head
        "pool_w": w((H, H), dtype=jnp.bfloat16),
        "pool_b": jnp.zeros((1, H), jnp.float32),
        "reg_w": w((1, H)),                      # f32 row vector for VPU reduction
        "reg_b": jnp.zeros((1, 1), jnp.float32),
    }


# ---------------------------------------------------------------------------
# Full forward: embeddings (XLA gather) -> single fused Pallas call
# ---------------------------------------------------------------------------
@jax.jit
def bert_stsb_forward(params, input_ids, token_type_ids, attention_mask):
    # embedding gathers + additive attention-bias build are glue; everything
    # else runs inside the fused kernel.
    x_emb = (params["word_emb"][input_ids]
             + params["pos_emb"][None, :, :]
             + params["type_emb"][token_type_ids]).reshape(B * S, H)

    mask_f = attention_mask.astype(jnp.float32)                     # (B, S)
    # block-diagonal additive bias over stacked (b, h) tiles:
    #   0 on same-(b,h) block & valid key, -1e4 on cross-block or padded key.
    blk = jnp.repeat(jnp.arange(B * HEADS), S)                      # (B*HEADS*S,)
    same_block = (blk[:, None] == blk[None, :]).astype(jnp.float32)
    col_valid = jnp.repeat(mask_f, HEADS, axis=0).reshape(B * HEADS * S)
    attn_bias = ((same_block - 1.0) * 1e4
                 + (col_valid[None, :] - 1.0) * 1e4)                # (64, 64)

    def _vm(shape):
        return pl.BlockSpec(shape, lambda: (0,) * len(shape))

    out = pl.pallas_call(
        _bert_kernel,
        out_shape=jax.ShapeDtypeStruct((B, H), jnp.float32),
        in_specs=[
            _vm((B * S, H)),                                        # x_emb
            _vm((B * HEADS * S, B * HEADS * S)),                    # attn_bias
            _vm((1, H)), _vm((1, H)),                               # embedding LN
            _vm((LAYERS, H, 3 * H)),                                # qkv_w
            _vm((LAYERS, H, H)),                                    # o_w
            _vm((LAYERS, H, FFN)),                                  # fc1_w
            _vm((LAYERS, FFN, H)),                                  # fc2_w
            _vm((LAYERS, 8, 3 * H)),                                # packed vectors
            _vm((H, H)), _vm((1, H)),                               # pooler
            _vm((1, H)), _vm((1, 1)),                               # regressor
        ],
        out_specs=_vm((B, H)),
    )(x_emb, attn_bias,
      params["emb_ln_g"], params["emb_ln_b"],
      params["qkv_w"], params["o_w"], params["fc1_w"], params["fc2_w"],
      params["vec_pack"],
      params["pool_w"], params["pool_b"],
      params["reg_w"], params["reg_b"])

    return out[:, :1]                                               # (B, 1)


if __name__ == "__main__":
    key = jax.random.PRNGKey(0)
    pkey, ikey = jax.random.split(key)
    params = init_params(pkey)

    # Synthetic "tokenized sentence pair" batch (what the tokenizer would emit).
    input_ids = jax.random.randint(ikey, (B, S), 0, VOCAB, dtype=jnp.int32)
    token_type_ids = jnp.concatenate(
        [jnp.zeros((B, S // 2), jnp.int32), jnp.ones((B, S // 2), jnp.int32)], axis=1)
    attention_mask = jnp.stack(
        [jnp.ones((S,), jnp.int32),
         (jnp.arange(S) < 12).astype(jnp.int32)], axis=0)           # second row padded

    out = bert_stsb_forward(params, input_ids, token_type_ids, attention_mask)
    out = jax.block_until_ready(out)
    assert out.shape == (B, 1)
    assert bool(jnp.all((out >= 0.0) & (out <= 5.0)))
    print("KERNEL_OK")
</pallas_src>

<mosaic_0001>
module attributes {stable_mosaic.version = 11 : i64} {
  func.func @_bert_kernel(%arg0: memref<32x128xf32, #tpu.memory_space<vmem>>, %arg1: memref<64x64xf32, #tpu.memory_space<vmem>>, %arg2: memref<1x128xf32, #tpu.memory_space<vmem>>, %arg3: memref<1x128xf32, #tpu.memory_space<vmem>>, %arg4: memref<2x128x384xbf16, #tpu.memory_space<vmem>>, %arg5: memref<2x128x128xbf16, #tpu.memory_space<vmem>>, %arg6: memref<2x128x256xbf16, #tpu.memory_space<vmem>>, %arg7: memref<2x256x128xbf16, #tpu.memory_space<vmem>>, %arg8: memref<2x8x384xf32, #tpu.memory_space<vmem>>, %arg9: memref<128x128xbf16, #tpu.memory_space<vmem>>, %arg10: memref<1x128xf32, #tpu.memory_space<vmem>>, %arg11: memref<1x128xf32, #tpu.memory_space<vmem>>, %arg12: memref<1x1xf32, #tpu.memory_space<vmem>>, %arg13: memref<2x128xf32, #tpu.memory_space<vmem>>) attributes {dimension_semantics = [], scalar_prefetch = 0 : i64, scratch_operands = 0 : i64, tpu.core_type = #tpu.core_type<tc>} {
    %c0 = arith.constant 0 : index
    %c0_0 = arith.constant 0 : index
    %0 = vector.load %arg0[%c0, %c0_0] : memref<32x128xf32, #tpu.memory_space<vmem>>, vector<32x128xf32>
    %c0_1 = arith.constant 0 : index
    %c0_2 = arith.constant 0 : index
    %1 = vector.load %arg2[%c0_1, %c0_2] : memref<1x128xf32, #tpu.memory_space<vmem>>, vector<1x128xf32>
    %c0_3 = arith.constant 0 : index
    %c0_4 = arith.constant 0 : index
    %2 = vector.load %arg3[%c0_3, %c0_4] : memref<1x128xf32, #tpu.memory_space<vmem>>, vector<1x128xf32>
    %cst = arith.constant dense<0.000000e+00> : vector<32xf32>
    %3 = vector.multi_reduction <add>, %0, %cst [1] : vector<32x128xf32> to vector<32xf32>
    %4 = vector.shape_cast %3 : vector<32xf32> to vector<32x1xf32>
    %cst_5 = arith.constant 1.280000e+02 : f32
    %5 = vector.broadcast %cst_5 : f32 to vector<32x1xf32>
    %6 = arith.divf %4, %5 : vector<32x1xf32>
    %7 = vector.broadcast %6 : vector<32x1xf32> to vector<32x128xf32>
    %8 = arith.subf %0, %7 : vector<32x128xf32>
    %9 = arith.mulf %8, %8 : vector<32x128xf32>
    %cst_6 = arith.constant dense<0.000000e+00> : vector<32xf32>
    %10 = vector.multi_reduction <add>, %9, %cst_6 [1] : vector<32x128xf32> to vector<32xf32>
    %11 = vector.shape_cast %10 : vector<32xf32> to vector<32x1xf32>
    %cst_7 = arith.constant 1.280000e+02 : f32
    %12 = vector.broadcast %cst_7 : f32 to vector<32x1xf32>
    %13 = arith.divf %11, %12 : vector<32x1xf32>
    %cst_8 = arith.constant 9.99999996E-13 : f32
    %14 = vector.broadcast %cst_8 : f32 to vector<32x1xf32>
    %15 = arith.addf %13, %14 : vector<32x1xf32>
    %16 = math.rsqrt %15 : vector<32x1xf32>
    %17 = vector.broadcast %16 : vector<32x1xf32> to vector<32x128xf32>
    %18 = arith.mulf %8, %17 : vector<32x128xf32>
    %19 = vector.broadcast %1 : vector<1x128xf32> to vector<32x128xf32>
    %20 = arith.mulf %18, %19 : vector<32x128xf32>
    %21 = vector.broadcast %2 : vector<1x128xf32> to vector<32x128xf32>
    %22 = arith.addf %20, %21 : vector<32x128xf32>
    %c0_9 = arith.constant 0 : index
    %c0_10 = arith.constant 0 : index
    %23 = vector.load %arg1[%c0_9, %c0_10] : memref<64x64xf32, #tpu.memory_space<vmem>>, vector<64x64xf32>
    %c0_11 = arith.constant 0 : index
    %c0_12 = arith.constant 0 : index
    %c0_13 = arith.constant 0 : index
    %24 = vector.load %arg8[%c0_11, %c0_12, %c0_13] : memref<2x8x384xf32, #tpu.memory_space<vmem>>, vector<1x8x384xf32>
    %25 = vector.shape_cast %24 : vector<1x8x384xf32> to vector<8x384xf32>
    %26 = vector.extract_strided_slice %25 {offsets = [0, 0], sizes = [1, 384], strides = [1, 1]} : vector<8x384xf32> to vector<1x384xf32>
    %27 = vector.extract_strided_slice %25 {offsets = [1, 0], sizes = [1, 128], strides = [1, 1]} : vector<8x384xf32> to vector<1x128xf32>
    %28 = vector.extract_strided_slice %25 {offsets = [2, 0], sizes = [1, 128], strides = [1, 1]} : vector<8x384xf32> to vector<1x128xf32>
    %29 = vector.extract_strided_slice %25 {offsets = [3, 0], sizes = [1, 128], strides = [1, 1]} : vector<8x384xf32> to vector<1x128xf32>
    %30 = vector.extract_strided_slice %25 {offsets = [4, 0], sizes = [1, 256], strides = [1, 1]} : vector<8x384xf32> to vector<1x256xf32>
    %31 = vector.extract_strided_slice %25 {offsets = [5, 0], sizes = [1, 128], strides = [1, 1]} : vector<8x384xf32> to vector<1x128xf32>
    %32 = vector.extract_strided_slice %25 {offsets = [6, 0], sizes = [1, 128], strides = [1, 1]} : vector<8x384xf32> to vector<1x128xf32>
    %33 = vector.extract_strided_slice %25 {offsets = [7, 0], sizes = [1, 128], strides = [1, 1]} : vector<8x384xf32> to vector<1x128xf32>
    %34 = arith.truncf %22 : vector<32x128xf32> to vector<32x128xbf16>
    %c0_14 = arith.constant 0 : index
    %c0_15 = arith.constant 0 : index
    %c0_16 = arith.constant 0 : index
    %35 = vector.load %arg4[%c0_14, %c0_15, %c0_16] : memref<2x128x384xbf16, #tpu.memory_space<vmem>>, vector<1x128x384xbf16>
    %36 = vector.shape_cast %35 : vector<1x128x384xbf16> to vector<128x384xbf16>
    %cst_17 = arith.constant dense<0.000000e+00> : vector<32x384xf32>
    %37 = tpu.matmul %34, %36, %cst_17 {dimension_numbers = #tpu.dot_dimension_numbers<[1], [0], [0], [1], [0, 0, 1, 1], [], []>} : vector<32x128xbf16>, vector<128x384xbf16>, vector<32x384xf32> -> vector<32x384xf32>
    %38 = vector.broadcast %26 : vector<1x384xf32> to vector<32x384xf32>
    %39 = arith.addf %37, %38 : vector<32x384xf32>
    %40 = arith.truncf %39 : vector<32x384xf32> to vector<32x384xbf16>
    %41 = vector.extract_strided_slice %40 {offsets = [0, 0], sizes = [16, 64], strides = [1, 1]} : vector<32x384xbf16> to vector<16x64xbf16>
    %42 = vector.extract_strided_slice %40 {offsets = [0, 64], sizes = [16, 64], strides = [1, 1]} : vector<32x384xbf16> to vector<16x64xbf16>
    %43 = vector.extract_strided_slice %40 {offsets = [16, 0], sizes = [16, 64], strides = [1, 1]} : vector<32x384xbf16> to vector<16x64xbf16>
    %44 = vector.extract_strided_slice %40 {offsets = [16, 64], sizes = [16, 64], strides = [1, 1]} : vector<32x384xbf16> to vector<16x64xbf16>
    %45 = tpu.concatenate %41, %42, %43, %44 in 0 : vector<16x64xbf16>, vector<16x64xbf16>, vector<16x64xbf16>, vector<16x64xbf16> -> vector<64x64xbf16>
    %46 = vector.extract_strided_slice %40 {offsets = [0, 128], sizes = [16, 64], strides = [1, 1]} : vector<32x384xbf16> to vector<16x64xbf16>
    %47 = vector.extract_strided_slice %40 {offsets = [0, 192], sizes = [16, 64], strides = [1, 1]} : vector<32x384xbf16> to vector<16x64xbf16>
    %48 = vector.extract_strided_slice %40 {offsets = [16, 128], sizes = [16, 64], strides = [1, 1]} : vector<32x384xbf16> to vector<16x64xbf16>
    %49 = vector.extract_strided_slice %40 {offsets = [16, 192], sizes = [16, 64], strides = [1, 1]} : vector<32x384xbf16> to vector<16x64xbf16>
    %50 = tpu.concatenate %46, %47, %48, %49 in 0 : vector<16x64xbf16>, vector<16x64xbf16>, vector<16x64xbf16>, vector<16x64xbf16> -> vector<64x64xbf16>
    %51 = vector.extract_strided_slice %40 {offsets = [0, 256], sizes = [16, 64], strides = [1, 1]} : vector<32x384xbf16> to vector<16x64xbf16>
    %52 = vector.extract_strided_slice %40 {offsets = [0, 320], sizes = [16, 64], strides = [1, 1]} : vector<32x384xbf16> to vector<16x64xbf16>
    %53 = vector.extract_strided_slice %40 {offsets = [16, 256], sizes = [16, 64], strides = [1, 1]} : vector<32x384xbf16> to vector<16x64xbf16>
    %54 = vector.extract_strided_slice %40 {offsets = [16, 320], sizes = [16, 64], strides = [1, 1]} : vector<32x384xbf16> to vector<16x64xbf16>
    %55 = tpu.concatenate %51, %52, %53, %54 in 0 : vector<16x64xbf16>, vector<16x64xbf16>, vector<16x64xbf16>, vector<16x64xbf16> -> vector<64x64xbf16>
    %cst_18 = arith.constant dense<0.000000e+00> : vector<64x64xf32>
    %56 = tpu.matmul %45, %50, %cst_18 {dimension_numbers = #tpu.dot_dimension_numbers<[1], [1], [0], [0], [0, 0, 1, 0], [], []>} : vector<64x64xbf16>, vector<64x64xbf16>, vector<64x64xf32> -> vector<64x64xf32>
    %cst_19 = arith.constant 1.250000e-01 : f32
    %57 = vector.broadcast %cst_19 : f32 to vector<64x64xf32>
    %58 = arith.mulf %56, %57 : vector<64x64xf32>
    %59 = arith.addf %58, %23 : vector<64x64xf32>
    %cst_20 = arith.constant dense<0xFF800000> : vector<64xf32>
    %60 = vector.multi_reduction <maximumf>, %59, %cst_20 [1] : vector<64x64xf32> to vector<64xf32>
    %61 = vector.shape_cast %60 : vector<64xf32> to vector<64x1xf32>
    %62 = vector.broadcast %61 : vector<64x1xf32> to vector<64x64xf32>
    %63 = arith.subf %59, %62 : vector<64x64xf32>
    %64 = math.exp %63 : vector<64x64xf32>
    %cst_21 = arith.constant dense<0.000000e+00> : vector<64xf32>
    %65 = vector.multi_reduction <add>, %64, %cst_21 [1] : vector<64x64xf32> to vector<64xf32>
    %66 = vector.shape_cast %65 : vector<64xf32> to vector<64x1xf32>
    %67 = tpu.reciprocal %66 {approx = true} : vector<64x1xf32> -> vector<64x1xf32>
    %68 = vector.broadcast %67 : vector<64x1xf32> to vector<64x64xf32>
    %69 = arith.mulf %64, %68 : vector<64x64xf32>
    %70 = arith.truncf %69 : vector<64x64xf32> to vector<64x64xbf16>
    %cst_22 = arith.constant dense<0.000000e+00> : vector<64x64xf32>
    %71 = tpu.matmul %70, %55, %cst_22 {dimension_numbers = #tpu.dot_dimension_numbers<[1], [0], [0], [1], [0, 0, 1, 1], [], []>} : vector<64x64xbf16>, vector<64x64xbf16>, vector<64x64xf32> -> vector<64x64xf32>
    %72 = vector.extract_strided_slice %71 {offsets = [0, 0], sizes = [16, 64], strides = [1, 1]} : vector<64x64xf32> to vector<16x64xf32>
    %73 = vector.extract_strided_slice %71 {offsets = [16, 0], sizes = [16, 64], strides = [1, 1]} : vector<64x64xf32> to vector<16x64xf32>
    %74 = tpu.concatenate %72, %73 in 1 : vector<16x64xf32>, vector<16x64xf32> -> vector<16x128xf32>
    %75 = vector.extract_strided_slice %71 {offsets = [32, 0], sizes = [16, 64], strides = [1, 1]} : vector<64x64xf32> to vector<16x64xf32>
    %76 = vector.extract_strided_slice %71 {offsets = [48, 0], sizes = [16, 64], strides = [1, 1]} : vector<64x64xf32> to vector<16x64xf32>
    %77 = tpu.concatenate %75, %76 in 1 : vector<16x64xf32>, vector<16x64xf32> -> vector<16x128xf32>
    %78 = tpu.concatenate %74, %77 in 0 : vector<16x128xf32>, vector<16x128xf32> -> vector<32x128xf32>
    %79 = arith.truncf %78 : vector<32x128xf32> to vector<32x128xbf16>
    %c0_23 = arith.constant 0 : index
    %c0_24 = arith.constant 0 : index
    %c0_25 = arith.constant 0 : index
    %80 = vector.load %arg5[%c0_23, %c0_24, %c0_25] : memref<2x128x128xbf16, #tpu.memory_space<vmem>>, vector<1x128x128xbf16>
    %81 = vector.shape_cast %80 : vector<1x128x128xbf16> to vector<128x128xbf16>
    %cst_26 = arith.constant dense<0.000000e+00> : vector<32x128xf32>
    %82 = tpu.matmul %79, %81, %cst_26 {dimension_numbers = #tpu.dot_dimension_numbers<[1], [0], [0], [1], [0, 0, 1, 1], [], []>} : vector<32x128xbf16>, vector<128x128xbf16>, vector<32x128xf32> -> vector<32x128xf32>
    %83 = vector.broadcast %27 : vector<1x128xf32> to vector<32x128xf32>
    %84 = arith.addf %82, %83 : vector<32x128xf32>
    %85 = arith.addf %84, %22 : vector<32x128xf32>
    %cst_27 = arith.constant dense<0.000000e+00> : vector<32xf32>
    %86 = vector.multi_reduction <add>, %85, %cst_27 [1] : vector<32x128xf32> to vector<32xf32>
    %87 = vector.shape_cast %86 : vector<32xf32> to vector<32x1xf32>
    %cst_28 = arith.constant 1.280000e+02 : f32
    %88 = vector.broadcast %cst_28 : f32 to vector<32x1xf32>
    %89 = arith.divf %87, %88 : vector<32x1xf32>
    %90 = vector.broadcast %89 : vector<32x1xf32> to vector<32x128xf32>
    %91 = arith.subf %85, %90 : vector<32x128xf32>
    %92 = arith.mulf %91, %91 : vector<32x128xf32>
    %cst_29 = arith.constant dense<0.000000e+00> : vector<32xf32>
    %93 = vector.multi_reduction <add>, %92, %cst_29 [1] : vector<32x128xf32> to vector<32xf32>
    %94 = vector.shape_cast %93 : vector<32xf32> to vector<32x1xf32>
    %cst_30 = arith.constant 1.280000e+02 : f32
    %95 = vector.broadcast %cst_30 : f32 to vector<32x1xf32>
    %96 = arith.divf %94, %95 : vector<32x1xf32>
    %cst_31 = arith.constant 9.99999996E-13 : f32
    %97 = vector.broadcast %cst_31 : f32 to vector<32x1xf32>
    %98 = arith.addf %96, %97 : vector<32x1xf32>
    %99 = math.rsqrt %98 : vector<32x1xf32>
    %100 = vector.broadcast %99 : vector<32x1xf32> to vector<32x128xf32>
    %101 = arith.mulf %91, %100 : vector<32x128xf32>
    %102 = vector.broadcast %28 : vector<1x128xf32> to vector<32x128xf32>
    %103 = arith.mulf %101, %102 : vector<32x128xf32>
    %104 = vector.broadcast %29 : vector<1x128xf32> to vector<32x128xf32>
    %105 = arith.addf %103, %104 : vector<32x128xf32>
    %106 = arith.truncf %105 : vector<32x128xf32> to vector<32x128xbf16>
    %c0_32 = arith.constant 0 : index
    %c0_33 = arith.constant 0 : index
    %c0_34 = arith.constant 0 : index
    %107 = vector.load %arg6[%c0_32, %c0_33, %c0_34] : memref<2x128x256xbf16, #tpu.memory_space<vmem>>, vector<1x128x256xbf16>
    %108 = vector.shape_cast %107 : vector<1x128x256xbf16> to vector<128x256xbf16>
    %cst_35 = arith.constant dense<0.000000e+00> : vector<32x256xf32>
    %109 = tpu.matmul %106, %108, %cst_35 {dimension_numbers = #tpu.dot_dimension_numbers<[1], [0], [0], [1], [0, 0, 1, 1], [], []>} : vector<32x128xbf16>, vector<128x256xbf16>, vector<32x256xf32> -> vector<32x256xf32>
    %110 = vector.broadcast %30 : vector<1x256xf32> to vector<32x256xf32>
    %111 = arith.addf %109, %110 : vector<32x256xf32>
    %112 = arith.mulf %111, %111 : vector<32x256xf32>
    %113 = arith.mulf %111, %112 : vector<32x256xf32>
    %cst_36 = arith.constant 4.471500e-02 : f32
    %114 = vector.broadcast %cst_36 : f32 to vector<32x256xf32>
    %115 = arith.mulf %114, %113 : vector<32x256xf32>
    %116 = arith.addf %111, %115 : vector<32x256xf32>
    %cst_37 = arith.constant 0.797884583 : f32
    %117 = vector.broadcast %cst_37 : f32 to vector<32x256xf32>
    %118 = arith.mulf %117, %116 : vector<32x256xf32>
    %119 = math.tanh %118 : vector<32x256xf32>
    %cst_38 = arith.constant 1.000000e+00 : f32
    %120 = vector.broadcast %cst_38 : f32 to vector<32x256xf32>
    %121 = arith.addf %120, %119 : vector<32x256xf32>
    %cst_39 = arith.constant 5.000000e-01 : f32
    %122 = vector.broadcast %cst_39 : f32 to vector<32x256xf32>
    %123 = arith.mulf %122, %121 : vector<32x256xf32>
    %124 = arith.mulf %111, %123 : vector<32x256xf32>
    %125 = arith.truncf %124 : vector<32x256xf32> to vector<32x256xbf16>
    %c0_40 = arith.constant 0 : index
    %c0_41 = arith.constant 0 : index
    %c0_42 = arith.constant 0 : index
    %126 = vector.load %arg7[%c0_40, %c0_41, %c0_42] : memref<2x256x128xbf16, #tpu.memory_space<vmem>>, vector<1x256x128xbf16>
    %127 = vector.shape_cast %126 : vector<1x256x128xbf16> to vector<256x128xbf16>
    %cst_43 = arith.constant dense<0.000000e+00> : vector<32x128xf32>
    %128 = tpu.matmul %125, %127, %cst_43 {dimension_numbers = #tpu.dot_dimension_numbers<[1], [0], [0], [1], [0, 0, 1, 1], [], []>} : vector<32x256xbf16>, vector<256x128xbf16>, vector<32x128xf32> -> vector<32x128xf32>
    %129 = vector.broadcast %31 : vector<1x128xf32> to vector<32x128xf32>
    %130 = arith.addf %128, %129 : vector<32x128xf32>
    %131 = arith.addf %130, %105 : vector<32x128xf32>
    %cst_44 = arith.constant dense<0.000000e+00> : vector<32xf32>
    %132 = vector.multi_reduction <add>, %131, %cst_44 [1] : vector<32x128xf32> to vector<32xf32>
    %133 = vector.shape_cast %132 : vector<32xf32> to vector<32x1xf32>
    %cst_45 = arith.constant 1.280000e+02 : f32
    %134 = vector.broadcast %cst_45 : f32 to vector<32x1xf32>
    %135 = arith.divf %133, %134 : vector<32x1xf32>
    %136 = vector.broadcast %135 : vector<32x1xf32> to vector<32x128xf32>
    %137 = arith.subf %131, %136 : vector<32x128xf32>
    %138 = arith.mulf %137, %137 : vector<32x128xf32>
    %cst_46 = arith.constant dense<0.000000e+00> : vector<32xf32>
    %139 = vector.multi_reduction <add>, %138, %cst_46 [1] : vector<32x128xf32> to vector<32xf32>
    %140 = vector.shape_cast %139 : vector<32xf32> to vector<32x1xf32>
    %cst_47 = arith.constant 1.280000e+02 : f32
    %141 = vector.broadcast %cst_47 : f32 to vector<32x1xf32>
    %142 = arith.divf %140, %141 : vector<32x1xf32>
    %cst_48 = arith.constant 9.99999996E-13 : f32
    %143 = vector.broadcast %cst_48 : f32 to vector<32x1xf32>
    %144 = arith.addf %142, %143 : vector<32x1xf32>
    %145 = math.rsqrt %144 : vector<32x1xf32>
    %146 = vector.broadcast %145 : vector<32x1xf32> to vector<32x128xf32>
    %147 = arith.mulf %137, %146 : vector<32x128xf32>
    %148 = vector.broadcast %32 : vector<1x128xf32> to vector<32x128xf32>
    %149 = arith.mulf %147, %148 : vector<32x128xf32>
    %150 = vector.broadcast %33 : vector<1x128xf32> to vector<32x128xf32>
    %151 = arith.addf %149, %150 : vector<32x128xf32>
    %c1 = arith.constant 1 : index
    %c0_49 = arith.constant 0 : index
    %c0_50 = arith.constant 0 : index
    %152 = vector.load %arg8[%c1, %c0_49, %c0_50] : memref<2x8x384xf32, #tpu.memory_space<vmem>>, vector<1x8x384xf32>
    %153 = vector.shape_cast %152 : vector<1x8x384xf32> to vector<8x384xf32>
    %154 = vector.extract_strided_slice %153 {offsets = [0, 0], sizes = [1, 384], strides = [1, 1]} : vector<8x384xf32> to vector<1x384xf32>
    %155 = vector.extract_strided_slice %153 {offsets = [1, 0], sizes = [1, 128], strides = [1, 1]} : vector<8x384xf32> to vector<1x128xf32>
    %156 = vector.extract_strided_slice %153 {offsets = [2, 0], sizes = [1, 128], strides = [1, 1]} : vector<8x384xf32> to vector<1x128xf32>
    %157 = vector.extract_strided_slice %153 {offsets = [3, 0], sizes = [1, 128], strides = [1, 1]} : vector<8x384xf32> to vector<1x128xf32>
    %158 = vector.extract_strided_slice %153 {offsets = [4, 0], sizes = [1, 256], strides = [1, 1]} : vector<8x384xf32> to vector<1x256xf32>
    %159 = vector.extract_strided_slice %153 {offsets = [5, 0], sizes = [1, 128], strides = [1, 1]} : vector<8x384xf32> to vector<1x128xf32>
    %160 = vector.extract_strided_slice %153 {offsets = [6, 0], sizes = [1, 128], strides = [1, 1]} : vector<8x384xf32> to vector<1x128xf32>
    %161 = vector.extract_strided_slice %153 {offsets = [7, 0], sizes = [1, 128], strides = [1, 1]} : vector<8x384xf32> to vector<1x128xf32>
    %162 = arith.truncf %151 : vector<32x128xf32> to vector<32x128xbf16>
    %c1_51 = arith.constant 1 : index
    %c0_52 = arith.constant 0 : index
    %c0_53 = arith.constant 0 : index
    %163 = vector.load %arg4[%c1_51, %c0_52, %c0_53] : memref<2x128x384xbf16, #tpu.memory_space<vmem>>, vector<1x128x384xbf16>
    %164 = vector.shape_cast %163 : vector<1x128x384xbf16> to vector<128x384xbf16>
    %cst_54 = arith.constant dense<0.000000e+00> : vector<32x384xf32>
    %165 = tpu.matmul %162, %164, %cst_54 {dimension_numbers = #tpu.dot_dimension_numbers<[1], [0], [0], [1], [0, 0, 1, 1], [], []>} : vector<32x128xbf16>, vector<128x384xbf16>, vector<32x384xf32> -> vector<32x384xf32>
    %166 = vector.broadcast %154 : vector<1x384xf32> to vector<32x384xf32>
    %167 = arith.addf %165, %166 : vector<32x384xf32>
    %168 = arith.truncf %167 : vector<32x384xf32> to vector<32x384xbf16>
    %169 = vector.extract_strided_slice %168 {offsets = [0, 0], sizes = [16, 64], strides = [1, 1]} : vector<32x384xbf16> to vector<16x64xbf16>
    %170 = vector.extract_strided_slice %168 {offsets = [0, 64], sizes = [16, 64], strides = [1, 1]} : vector<32x384xbf16> to vector<16x64xbf16>
    %171 = vector.extract_strided_slice %168 {offsets = [16, 0], sizes = [16, 64], strides = [1, 1]} : vector<32x384xbf16> to vector<16x64xbf16>
    %172 = vector.extract_strided_slice %168 {offsets = [16, 64], sizes = [16, 64], strides = [1, 1]} : vector<32x384xbf16> to vector<16x64xbf16>
    %173 = tpu.concatenate %169, %170, %171, %172 in 0 : vector<16x64xbf16>, vector<16x64xbf16>, vector<16x64xbf16>, vector<16x64xbf16> -> vector<64x64xbf16>
    %174 = vector.extract_strided_slice %168 {offsets = [0, 128], sizes = [16, 64], strides = [1, 1]} : vector<32x384xbf16> to vector<16x64xbf16>
    %175 = vector.extract_strided_slice %168 {offsets = [0, 192], sizes = [16, 64], strides = [1, 1]} : vector<32x384xbf16> to vector<16x64xbf16>
    %176 = vector.extract_strided_slice %168 {offsets = [16, 128], sizes = [16, 64], strides = [1, 1]} : vector<32x384xbf16> to vector<16x64xbf16>
    %177 = vector.extract_strided_slice %168 {offsets = [16, 192], sizes = [16, 64], strides = [1, 1]} : vector<32x384xbf16> to vector<16x64xbf16>
    %178 = tpu.concatenate %174, %175, %176, %177 in 0 : vector<16x64xbf16>, vector<16x64xbf16>, vector<16x64xbf16>, vector<16x64xbf16> -> vector<64x64xbf16>
    %179 = vector.extract_strided_slice %168 {offsets = [0, 256], sizes = [16, 64], strides = [1, 1]} : vector<32x384xbf16> to vector<16x64xbf16>
    %180 = vector.extract_strided_slice %168 {offsets = [0, 320], sizes = [16, 64], strides = [1, 1]} : vector<32x384xbf16> to vector<16x64xbf16>
    %181 = vector.extract_strided_slice %168 {offsets = [16, 256], sizes = [16, 64], strides = [1, 1]} : vector<32x384xbf16> to vector<16x64xbf16>
    %182 = vector.extract_strided_slice %168 {offsets = [16, 320], sizes = [16, 64], strides = [1, 1]} : vector<32x384xbf16> to vector<16x64xbf16>
    %183 = tpu.concatenate %179, %180, %181, %182 in 0 : vector<16x64xbf16>, vector<16x64xbf16>, vector<16x64xbf16>, vector<16x64xbf16> -> vector<64x64xbf16>
    %cst_55 = arith.constant dense<0.000000e+00> : vector<64x64xf32>
    %184 = tpu.matmul %173, %178, %cst_55 {dimension_numbers = #tpu.dot_dimension_numbers<[1], [1], [0], [0], [0, 0, 1, 0], [], []>} : vector<64x64xbf16>, vector<64x64xbf16>, vector<64x64xf32> -> vector<64x64xf32>
    %cst_56 = arith.constant 1.250000e-01 : f32
    %185 = vector.broadcast %cst_56 : f32 to vector<64x64xf32>
    %186 = arith.mulf %184, %185 : vector<64x64xf32>
    %187 = arith.addf %186, %23 : vector<64x64xf32>
    %cst_57 = arith.constant dense<0xFF800000> : vector<64xf32>
    %188 = vector.multi_reduction <maximumf>, %187, %cst_57 [1] : vector<64x64xf32> to vector<64xf32>
    %189 = vector.shape_cast %188 : vector<64xf32> to vector<64x1xf32>
    %190 = vector.broadcast %189 : vector<64x1xf32> to vector<64x64xf32>
    %191 = arith.subf %187, %190 : vector<64x64xf32>
    %192 = math.exp %191 : vector<64x64xf32>
    %cst_58 = arith.constant dense<0.000000e+00> : vector<64xf32>
    %193 = vector.multi_reduction <add>, %192, %cst_58 [1] : vector<64x64xf32> to vector<64xf32>
    %194 = vector.shape_cast %193 : vector<64xf32> to vector<64x1xf32>
    %195 = tpu.reciprocal %194 {approx = true} : vector<64x1xf32> -> vector<64x1xf32>
    %196 = vector.broadcast %195 : vector<64x1xf32> to vector<64x64xf32>
    %197 = arith.mulf %192, %196 : vector<64x64xf32>
    %198 = arith.truncf %197 : vector<64x64xf32> to vector<64x64xbf16>
    %cst_59 = arith.constant dense<0.000000e+00> : vector<64x64xf32>
    %199 = tpu.matmul %198, %183, %cst_59 {dimension_numbers = #tpu.dot_dimension_numbers<[1], [0], [0], [1], [0, 0, 1, 1], [], []>} : vector<64x64xbf16>, vector<64x64xbf16>, vector<64x64xf32> -> vector<64x64xf32>
    %200 = vector.extract_strided_slice %199 {offsets = [0, 0], sizes = [16, 64], strides = [1, 1]} : vector<64x64xf32> to vector<16x64xf32>
    %201 = vector.extract_strided_slice %199 {offsets = [16, 0], sizes = [16, 64], strides = [1, 1]} : vector<64x64xf32> to vector<16x64xf32>
    %202 = tpu.concatenate %200, %201 in 1 : vector<16x64xf32>, vector<16x64xf32> -> vector<16x128xf32>
    %203 = vector.extract_strided_slice %199 {offsets = [32, 0], sizes = [16, 64], strides = [1, 1]} : vector<64x64xf32> to vector<16x64xf32>
    %204 = vector.extract_strided_slice %199 {offsets = [48, 0], sizes = [16, 64], strides = [1, 1]} : vector<64x64xf32> to vector<16x64xf32>
    %205 = tpu.concatenate %203, %204 in 1 : vector<16x64xf32>, vector<16x64xf32> -> vector<16x128xf32>
    %206 = tpu.concatenate %202, %205 in 0 : vector<16x128xf32>, vector<16x128xf32> -> vector<32x128xf32>
    %207 = arith.truncf %206 : vector<32x128xf32> to vector<32x128xbf16>
    %c1_60 = arith.constant 1 : index
    %c0_61 = arith.constant 0 : index
    %c0_62 = arith.constant 0 : index
    %208 = vector.load %arg5[%c1_60, %c0_61, %c0_62] : memref<2x128x128xbf16, #tpu.memory_space<vmem>>, vector<1x128x128xbf16>
    %209 = vector.shape_cast %208 : vector<1x128x128xbf16> to vector<128x128xbf16>
    %cst_63 = arith.constant dense<0.000000e+00> : vector<32x128xf32>
    %210 = tpu.matmul %207, %209, %cst_63 {dimension_numbers = #tpu.dot_dimension_numbers<[1], [0], [0], [1], [0, 0, 1, 1], [], []>} : vector<32x128xbf16>, vector<128x128xbf16>, vector<32x128xf32> -> vector<32x128xf32>
    %211 = vector.broadcast %155 : vector<1x128xf32> to vector<32x128xf32>
    %212 = arith.addf %210, %211 : vector<32x128xf32>
    %213 = arith.addf %212, %151 : vector<32x128xf32>
    %cst_64 = arith.constant dense<0.000000e+00> : vector<32xf32>
    %214 = vector.multi_reduction <add>, %213, %cst_64 [1] : vector<32x128xf32> to vector<32xf32>
    %215 = vector.shape_cast %214 : vector<32xf32> to vector<32x1xf32>
    %cst_65 = arith.constant 1.280000e+02 : f32
    %216 = vector.broadcast %cst_65 : f32 to vector<32x1xf32>
    %217 = arith.divf %215, %216 : vector<32x1xf32>
    %218 = vector.broadcast %217 : vector<32x1xf32> to vector<32x128xf32>
    %219 = arith.subf %213, %218 : vector<32x128xf32>
    %220 = arith.mulf %219, %219 : vector<32x128xf32>
    %cst_66 = arith.constant dense<0.000000e+00> : vector<32xf32>
    %221 = vector.multi_reduction <add>, %220, %cst_66 [1] : vector<32x128xf32> to vector<32xf32>
    %222 = vector.shape_cast %221 : vector<32xf32> to vector<32x1xf32>
    %cst_67 = arith.constant 1.280000e+02 : f32
    %223 = vector.broadcast %cst_67 : f32 to vector<32x1xf32>
    %224 = arith.divf %222, %223 : vector<32x1xf32>
    %cst_68 = arith.constant 9.99999996E-13 : f32
    %225 = vector.broadcast %cst_68 : f32 to vector<32x1xf32>
    %226 = arith.addf %224, %225 : vector<32x1xf32>
    %227 = math.rsqrt %226 : vector<32x1xf32>
    %228 = vector.broadcast %227 : vector<32x1xf32> to vector<32x128xf32>
    %229 = arith.mulf %219, %228 : vector<32x128xf32>
    %230 = vector.broadcast %156 : vector<1x128xf32> to vector<32x128xf32>
    %231 = arith.mulf %229, %230 : vector<32x128xf32>
    %232 = vector.broadcast %157 : vector<1x128xf32> to vector<32x128xf32>
    %233 = arith.addf %231, %232 : vector<32x128xf32>
    %234 = arith.truncf %233 : vector<32x128xf32> to vector<32x128xbf16>
    %c1_69 = arith.constant 1 : index
    %c0_70 = arith.constant 0 : index
    %c0_71 = arith.constant 0 : index
    %235 = vector.load %arg6[%c1_69, %c0_70, %c0_71] : memref<2x128x256xbf16, #tpu.memory_space<vmem>>, vector<1x128x256xbf16>
    %236 = vector.shape_cast %235 : vector<1x128x256xbf16> to vector<128x256xbf16>
    %cst_72 = arith.constant dense<0.000000e+00> : vector<32x256xf32>
    %237 = tpu.matmul %234, %236, %cst_72 {dimension_numbers = #tpu.dot_dimension_numbers<[1], [0], [0], [1], [0, 0, 1, 1], [], []>} : vector<32x128xbf16>, vector<128x256xbf16>, vector<32x256xf32> -> vector<32x256xf32>
    %238 = vector.broadcast %158 : vector<1x256xf32> to vector<32x256xf32>
    %239 = arith.addf %237, %238 : vector<32x256xf32>
    %240 = arith.mulf %239, %239 : vector<32x256xf32>
    %241 = arith.mulf %239, %240 : vector<32x256xf32>
    %cst_73 = arith.constant 4.471500e-02 : f32
    %242 = vector.broadcast %cst_73 : f32 to vector<32x256xf32>
    %243 = arith.mulf %242, %241 : vector<32x256xf32>
    %244 = arith.addf %239, %243 : vector<32x256xf32>
    %cst_74 = arith.constant 0.797884583 : f32
    %245 = vector.broadcast %cst_74 : f32 to vector<32x256xf32>
    %246 = arith.mulf %245, %244 : vector<32x256xf32>
    %247 = math.tanh %246 : vector<32x256xf32>
    %cst_75 = arith.constant 1.000000e+00 : f32
    %248 = vector.broadcast %cst_75 : f32 to vector<32x256xf32>
    %249 = arith.addf %248, %247 : vector<32x256xf32>
    %cst_76 = arith.constant 5.000000e-01 : f32
    %250 = vector.broadcast %cst_76 : f32 to vector<32x256xf32>
    %251 = arith.mulf %250, %249 : vector<32x256xf32>
    %252 = arith.mulf %239, %251 : vector<32x256xf32>
    %253 = arith.truncf %252 : vector<32x256xf32> to vector<32x256xbf16>
    %c1_77 = arith.constant 1 : index
    %c0_78 = arith.constant 0 : index
    %c0_79 = arith.constant 0 : index
    %254 = vector.load %arg7[%c1_77, %c0_78, %c0_79] : memref<2x256x128xbf16, #tpu.memory_space<vmem>>, vector<1x256x128xbf16>
    %255 = vector.shape_cast %254 : vector<1x256x128xbf16> to vector<256x128xbf16>
    %cst_80 = arith.constant dense<0.000000e+00> : vector<32x128xf32>
    %256 = tpu.matmul %253, %255, %cst_80 {dimension_numbers = #tpu.dot_dimension_numbers<[1], [0], [0], [1], [0, 0, 1, 1], [], []>} : vector<32x256xbf16>, vector<256x128xbf16>, vector<32x128xf32> -> vector<32x128xf32>
    %257 = vector.broadcast %159 : vector<1x128xf32> to vector<32x128xf32>
    %258 = arith.addf %256, %257 : vector<32x128xf32>
    %259 = arith.addf %258, %233 : vector<32x128xf32>
    %cst_81 = arith.constant dense<0.000000e+00> : vector<32xf32>
    %260 = vector.multi_reduction <add>, %259, %cst_81 [1] : vector<32x128xf32> to vector<32xf32>
    %261 = vector.shape_cast %260 : vector<32xf32> to vector<32x1xf32>
    %cst_82 = arith.constant 1.280000e+02 : f32
    %262 = vector.broadcast %cst_82 : f32 to vector<32x1xf32>
    %263 = arith.divf %261, %262 : vector<32x1xf32>
    %264 = vector.broadcast %263 : vector<32x1xf32> to vector<32x128xf32>
    %265 = arith.subf %259, %264 : vector<32x128xf32>
    %266 = arith.mulf %265, %265 : vector<32x128xf32>
    %cst_83 = arith.constant dense<0.000000e+00> : vector<32xf32>
    %267 = vector.multi_reduction <add>, %266, %cst_83 [1] : vector<32x128xf32> to vector<32xf32>
    %268 = vector.shape_cast %267 : vector<32xf32> to vector<32x1xf32>
    %cst_84 = arith.constant 1.280000e+02 : f32
    %269 = vector.broadcast %cst_84 : f32 to vector<32x1xf32>
    %270 = arith.divf %268, %269 : vector<32x1xf32>
    %cst_85 = arith.constant 9.99999996E-13 : f32
    %271 = vector.broadcast %cst_85 : f32 to vector<32x1xf32>
    %272 = arith.addf %270, %271 : vector<32x1xf32>
    %273 = math.rsqrt %272 : vector<32x1xf32>
    %274 = vector.broadcast %273 : vector<32x1xf32> to vector<32x128xf32>
    %275 = arith.mulf %265, %274 : vector<32x128xf32>
    %276 = vector.broadcast %160 : vector<1x128xf32> to vector<32x128xf32>
    %277 = arith.mulf %275, %276 : vector<32x128xf32>
    %278 = vector.broadcast %161 : vector<1x128xf32> to vector<32x128xf32>
    %279 = arith.addf %277, %278 : vector<32x128xf32>
    %280 = vector.extract_strided_slice %279 {offsets = [0, 0], sizes = [1, 128], strides = [1, 1]} : vector<32x128xf32> to vector<1x128xf32>
    %281 = vector.extract_strided_slice %279 {offsets = [16, 0], sizes = [1, 128], strides = [1, 1]} : vector<32x128xf32> to vector<1x128xf32>
    %282 = tpu.concatenate %280, %281 in 0 : vector<1x128xf32>, vector<1x128xf32> -> vector<2x128xf32>
    %283 = arith.truncf %282 : vector<2x128xf32> to vector<2x128xbf16>
    %c0_86 = arith.constant 0 : index
    %c0_87 = arith.constant 0 : index
    %284 = vector.load %arg9[%c0_86, %c0_87] : memref<128x128xbf16, #tpu.memory_space<vmem>>, vector<128x128xbf16>
    %cst_88 = arith.constant dense<0.000000e+00> : vector<2x128xf32>
    %285 = tpu.matmul %283, %284, %cst_88 {dimension_numbers = #tpu.dot_dimension_numbers<[1], [0], [0], [1], [0, 0, 1, 1], [], []>} : vector<2x128xbf16>, vector<128x128xbf16>, vector<2x128xf32> -> vector<2x128xf32>
    %c0_89 = arith.constant 0 : index
    %c0_90 = arith.constant 0 : index
    %286 = vector.load %arg10[%c0_89, %c0_90] : memref<1x128xf32, #tpu.memory_space<vmem>>, vector<1x128xf32>
    %287 = vector.broadcast %286 : vector<1x128xf32> to vector<2x128xf32>
    %288 = arith.addf %285, %287 : vector<2x128xf32>
    %289 = math.tanh %288 : vector<2x128xf32>
    %c0_91 = arith.constant 0 : index
    %c0_92 = arith.constant 0 : index
    %290 = vector.load %arg11[%c0_91, %c0_92] : memref<1x128xf32, #tpu.memory_space<vmem>>, vector<1x128xf32>
    %291 = vector.broadcast %290 : vector<1x128xf32> to vector<2x128xf32>
    %292 = arith.mulf %289, %291 : vector<2x128xf32>
    %cst_93 = arith.constant dense<0.000000e+00> : vector<2xf32>
    %293 = vector.multi_reduction <add>, %292, %cst_93 [1] : vector<2x128xf32> to vector<2xf32>
    %294 = vector.shape_cast %293 : vector<2xf32> to vector<2x1xf32>
    %c0_94 = arith.constant 0 : index
    %c0_95 = arith.constant 0 : index
    %295 = vector.load %arg12[%c0_94, %c0_95] : memref<1x1xf32, #tpu.memory_space<vmem>>, vector<1x1xf32>
    %296 = vector.broadcast %295 : vector<1x1xf32> to vector<2x1xf32>
    %297 = arith.addf %294, %296 : vector<2x1xf32>
    %298 = arith.negf %297 : vector<2x1xf32>
    %299 = math.exp %298 : vector<2x1xf32>
    %cst_96 = arith.constant 1.000000e+00 : f32
    %300 = vector.broadcast %cst_96 : f32 to vector<2x1xf32>
    %301 = arith.addf %300, %299 : vector<2x1xf32>
    %302 = arith.divf %300, %301 : vector<2x1xf32>
    %cst_97 = arith.constant 5.000000e+00 : f32
    %303 = vector.broadcast %cst_97 : f32 to vector<2x1xf32>
    %304 = arith.mulf %303, %302 : vector<2x1xf32>
    %305 = vector.shape_cast %304 : vector<2x1xf32> to vector<2x1xf32>
    %306 = vector.broadcast %305 : vector<2x1xf32> to vector<2x128xf32>
    %c0_98 = arith.constant 0 : index
    %c0_99 = arith.constant 0 : index
    %307 = vector.load %arg13[%c0_98, %c0_99] : memref<2x128xf32, #tpu.memory_space<vmem>>, vector<2x128xf32>
    tpu.vector_store %arg13[%c0_98, %c0_99], %306 {strides = array<i32>} : memref<2x128xf32, #tpu.memory_space<vmem>>, vector<2x128xf32>,
    return
  }
}

</mosaic_0001>

<llo_original>
// kernel: eq.8
$region0: #{eq.8}
  %s0 = inlined_call_operand.vmem [shape: s32[4,16], index: 0, kind: input, shape index: {}]
  %s1 = inlined_call_operand.vmem [shape: s32[64], index: 1, kind: output, shape index: {}]
  $region1: #{eq.8} parent=0
    #allocation0 [shape = 'u8[4096]{0}', space=vmem, size = 0x1000, scoped, tag = 'scoped mem for output reshape']
    #allocation1 [shape = 'u8[4096]{0}', space=vmem, size = 0x1000, scoped, tag = 'scoped mem for input reshape']
    %s3 = sshllo.u32 0, 4
    %v4 = vld [vmem:[%s0] sm:%s3]
    %5 = vst [vmem:[#allocation1] sm:%s3] %v4
    %v6 = vld [vmem:[#allocation1] sm:$0x1]
    %vm7 = vcmask 130048
    %8 = vst.msk [vmem:[#allocation0] sm:$0x1] %vm7, %v6
    %s9 = scalar_lea.vmem [#allocation1], 3
    %v10 = vld [vmem:[%s9] sm:$0x1]
    %11 = vrot.lane.b32.xlu0 %v10, 48
    %v12 = vpop.permute.xlu0 %11
    %vm13 = vcmask 523648
    %14 = vst.msk [vmem:[#allocation0] sm:$0x1] %vm13, %v12
    %s15 = scalar_lea.vmem [#allocation1], 2
    %v16 = vld [vmem:[%s15] sm:$0x1]
    %17 = vrot.lane.b32.xlu0 %v16, 32
    %v18 = vpop.permute.xlu0 %17
    %vm19 = vcmask 392448
    %20 = vst.msk [vmem:[#allocation0] sm:$0x1] %vm19, %v18
    %s21 = scalar_lea.vmem [#allocation1], 1
    %v22 = vld [vmem:[%s21] sm:$0x1]
    %23 = vrot.lane.b32.xlu0 %v22, 16
    %v24 = vpop.permute.xlu0 %23
    %vm25 = vcmask 261248
    %26 = vst.msk [vmem:[#allocation0] sm:$0x1] %vm25, %v24
    %s28 = sshllo.u32 0, 1
    %v30 = vld [vmem:[#allocation0] sm:%s28]
    %s31 = sshllo.u32 0, 1
    %32 = vst [vmem:[%s1] sm:%s31] %v30

// kernel: bert_stsb_forward.1
$region0: #{bert_stsb_forward.1}
  #allocation0 [shape = 'u32[]', space=smem, size = 0x4, offset = 0x4, fixed_abs, tag = 'smem constant byte address 0x4 - core index']
  #allocation1 [shape = 'u32[144,128]{1,0:T(1,128)}', space=vmem, size = 0x12000, scoped, tag = 'internal scratch']
  #allocation2 [shape = 'f32[1,1]{1,0:T(1,128)S(1)}', space=vmem, size = 0x200, scoped, tag = 'scoped memory for bert_stsb_forward.1']
  %s0 = inlined_call_operand.vmem [shape: f32[32,128], index: 0, kind: input, shape index: {}]
  %s1 = inlined_call_operand.vmem [shape: f32[64,64], index: 1, kind: input, shape index: {}]
  %s2 = inlined_call_operand.vmem [shape: f32[1,128], index: 2, kind: input, shape index: {}]
  %s3 = inlined_call_operand.vmem [shape: f32[1,128], index: 3, kind: input, shape index: {}]
  %s4 = inlined_call_operand.vmem [shape: bf16[2,128,384], index: 4, kind: input, shape index: {}]
  %s5 = inlined_call_operand.hbm [shape: bf16[2,128,128], index: 5, kind: input, shape index: {}]
  %s6 = inlined_call_operand.vmem [shape: bf16[2,128,256], index: 6, kind: input, shape index: {}]
  %s7 = inlined_call_operand.hbm [shape: bf16[2,256,128], index: 7, kind: input, shape index: {}]
  %s8 = inlined_call_operand.vmem [shape: f32[2,8,384], index: 8, kind: input, shape index: {}]
  %s9 = inlined_call_operand.vmem [shape: bf16[128,128], index: 9, kind: input, shape index: {}]
  %s10 = inlined_call_operand.vmem [shape: f32[1,128], index: 10, kind: input, shape index: {}]
  %s11 = inlined_call_operand.vmem [shape: f32[1,128], index: 11, kind: input, shape index: {}]
  %s12 = inlined_call_operand.<no memory space> [shape: f32[1,1], index: 12, kind: input, shape index: {}]
  %s13 = inlined_call_operand.vmem [shape: f32[2,128], index: 13, kind: output, shape index: {}]
  %s14 = sld [smem:[#allocation0]]
  $region70: #{bert_stsb_forward.1} parent=0
    _
  %s16 = ssub.s32 1, %s14
  %s17 = scalar_select 0, %s16, %s14
  %v18 = vstv %s12
  %19 = vst [vmem:[#allocation2] sm:$0x1] %v18
  $region1: #{bert_stsb_forward.1} parent=0
    #allocation3 [shape = 'u8[65536]{0}', space=vmem, size = 0x10000, scoped, tag = 'input window, operand 5, single buffered']
    #allocation4 [shape = 's32[1]{0}', space=sflag, size = 0x4, scoped, tag = 'scoped memory for bert_stsb_forward.1']
    #allocation5 [shape = 'u8[131072]{0}', space=vmem, size = 0x20000, scoped, tag = 'input window, operand 7, single buffered']
    #allocation6 [shape = 's32[1]{0}', space=sflag, size = 0x4, scoped, tag = 'scoped memory for bert_stsb_forward.1']
    %20 = vsyncpa [#allocation4], 0
    %21 = vsyncpa [#allocation6], 0
    // Predicated region
    $region2: #{bert_stsb_forward.1} parent=1 // pred_check
      _
    $region3: #{bert_stsb_forward.1} parent=1 // pred_check_branch
      %23 = sbr.rel (0) target = $region5
    $region4: #{bert_stsb_forward.1} parent=1 // pred_region
      _
    $region5: #{bert_stsb_forward.1} parent=1 // pred_fallthru
      _
    // Predicated region
    $region6: #{bert_stsb_forward.1} parent=1 // pred_check
      _
    $region7: #{bert_stsb_forward.1} parent=1 // pred_check_branch
      %25 = sbr.rel (0) target = $region9
    $region8: #{bert_stsb_forward.1} parent=1 // pred_region
      _
    $region9: #{bert_stsb_forward.1} parent=1 // pred_fallthru
      _
    // Predicated region
    $region10: #{bert_stsb_forward.1} parent=1 // pred_check
      _
    $region11: #{bert_stsb_forward.1} parent=1 // pred_check_branch
      %27 = sbr.rel (0) target = $region13
    $region12: #{bert_stsb_forward.1} parent=1 // pred_region
      _
    $region13: #{bert_stsb_forward.1} parent=1 // pred_fallthru
      _
    // Predicated region
    $region14: #{bert_stsb_forward.1} parent=1 // pred_check
      _
    $region15: #{bert_stsb_forward.1} parent=1 // pred_check_branch
      %29 = sbr.rel (0) target = $region17
    $region16: #{bert_stsb_forward.1} parent=1 // pred_region
      _
    $region17: #{bert_stsb_forward.1} parent=1 // pred_fallthru
      _
    // Predicated region
    $region18: #{bert_stsb_forward.1} parent=1 // pred_check
      _
    $region19: #{bert_stsb_forward.1} parent=1 // pred_check_branch
      %31 = sbr.rel (0) target = $region21
    $region20: #{bert_stsb_forward.1} parent=1 // pred_region
      _
    $region21: #{bert_stsb_forward.1} parent=1 // pred_fallthru
      _
    // Predicated region
    $region22: #{bert_stsb_forward.1} parent=1 // pred_check
      _
    $region23: #{bert_stsb_forward.1} parent=1 // pred_check_branch
      %33 = sbr.rel (0) target = $region25
    $region24: #{bert_stsb_forward.1} parent=1 // pred_region
      %s35 = ssub.s32 2048, 2048
      %36 = vsyncadd [#allocation4], %s35
      %s37 = sshll.u32 [#allocation3], 4
      %s38 = int_to_ptr.vmem [resolvable:$true] %s37
      %43 = dma.hbm_to_vmem [thread:$0]  %s5, 2048, %s38, [#allocation4], 64, 64, 4
    $region25: #{bert_stsb_forward.1} parent=1 // pred_fallthru
      _
    // Predicated region
    $region26: #{bert_stsb_forward.1} parent=1 // pred_check
      _
    $region27: #{bert_stsb_forward.1} parent=1 // pred_check_branch
      %45 = sbr.rel (0) target = $region29
    $region28: #{bert_stsb_forward.1} parent=1 // pred_region
      _
    $region29: #{bert_stsb_forward.1} parent=1 // pred_fallthru
      _
    // Predicated region
    $region30: #{bert_stsb_forward.1} parent=1 // pred_check
      _
    $region31: #{bert_stsb_forward.1} parent=1 // pred_check_branch
      %47 = sbr.rel (0) target = $region33
    $region32: #{bert_stsb_forward.1} parent=1 // pred_region
      %s49 = ssub.s32 4096, 4096
      %50 = vsyncadd [#allocation6], %s49
      %s51 = sshll.u32 [#allocation5], 4
      %s52 = int_to_ptr.vmem [resolvable:$true] %s51
      %57 = dma.hbm_to_vmem [thread:$0]  %s7, 4096, %s52, [#allocation6], 64, 64, 4
    $region33: #{bert_stsb_forward.1} parent=1 // pred_fallthru
      _
    // Predicated region
    $region34: #{bert_stsb_forward.1} parent=1 // pred_check
      _
    $region35: #{bert_stsb_forward.1} parent=1 // pred_check_branch
      %59 = sbr.rel (0) target = $region37
    $region36: #{bert_stsb_forward.1} parent=1 // pred_region
      _
    $region37: #{bert_stsb_forward.1} parent=1 // pred_fallthru
      _
    // Predicated region
    $region38: #{bert_stsb_forward.1} parent=1 // pred_check
      _
    $region39: #{bert_stsb_forward.1} parent=1 // pred_check_branch
      %61 = sbr.rel (0) target = $region41
    $region40: #{bert_stsb_forward.1} parent=1 // pred_region
      _
    $region41: #{bert_stsb_forward.1} parent=1 // pred_fallthru
      _
    // Predicated region
    $region42: #{bert_stsb_forward.1} parent=1 // pred_check
      _
    $region43: #{bert_stsb_forward.1} parent=1 // pred_check_branch
      %63 = sbr.rel (0) target = $region45
    $region44: #{bert_stsb_forward.1} parent=1 // pred_region
      _
    $region45: #{bert_stsb_forward.1} parent=1 // pred_fallthru
      _
    // Predicated region
    $region46: #{bert_stsb_forward.1} parent=1 // pred_check
      _
    $region47: #{bert_stsb_forward.1} parent=1 // pred_check_branch
      %65 = sbr.rel (0) target = $region49
    $region48: #{bert_stsb_forward.1} parent=1 // pred_region
      _
    $region49: #{bert_stsb_forward.1} parent=1 // pred_fallthru
      _
    // Predicated region
    $region50: #{bert_stsb_forward.1} parent=1 // pred_check
      _
    $region51: #{bert_stsb_forward.1} parent=1 // pred_check_branch
      %67 = sbr.rel (0) target = $region53
    $region52: #{bert_stsb_forward.1} parent=1 // pred_region
      _
    $region53: #{bert_stsb_forward.1} parent=1 // pred_fallthru
      _
    // Predicated region
    $region54: #{bert_stsb_forward.1} parent=1 // pred_check
      _
    $region55: #{bert_stsb_forward.1} parent=1 // pred_check_branch
      %69 = sbr.rel (0) target = $region57
    $region56: #{bert_stsb_forward.1} parent=1 // pred_region
      %70 = dma.done [#allocation4], 2048
    $region57: #{bert_stsb_forward.1} parent=1 // pred_fallthru
      _
    // Predicated region
    $region58: #{bert_stsb_forward.1} parent=1 // pred_check
      _
    $region59: #{bert_stsb_forward.1} parent=1 // pred_check_branch
      %72 = sbr.rel (0) target = $region61
    $region60: #{bert_stsb_forward.1} parent=1 // pred_region
      %73 = dma.done [#allocation6], 4096
    $region61: #{bert_stsb_forward.1} parent=1 // pred_fallthru
      _
    %v75 = vld [vmem:[%s0] sm:$0xff]
    %v76 = vld [vmem:[%s0 + $0x8] sm:$0xff]
    %v77 = vld [vmem:[%s0 + $0x10] sm:$0xff]
    %v78 = vld [vmem:[%s0 + $0x18] sm:$0xff]
    %v79 = vld [vmem:[%s2] sm:$0x1]
    %v80 = vld [vmem:[%s3] sm:$0x1]
    %81 = vadd.xlane.f32.xlu0 %v75
    %v82 = vpop.xlane.xlu0 %81
    %83 = vadd.xlane.f32.xlu0 %v76
    %v84 = vpop.xlane.xlu0 %83
    %85 = vadd.xlane.f32.xlu0 %v77
    %v86 = vpop.xlane.xlu0 %85
    %87 = vadd.xlane.f32.xlu0 %v78
    %v88 = vpop.xlane.xlu0 %87
    %v89 = vrcp.pop 128.0
    %v90 = vmul.f32 %v82, %v89
    %v91 = vmul.f32 %v84, %v89
    %v92 = vmul.f32 %v86, %v89
    %v93 = vmul.f32 %v88, %v89
    %v94 = vsub.f32 %v75, %v90
    %v95 = vsub.f32 %v76, %v91
    %v96 = vsub.f32 %v77, %v92
    %v97 = vsub.f32 %v78, %v93
    %v98 = vmul.f32 %v94, %v94
    %v99 = vmul.f32 %v95, %v95
    %v100 = vmul.f32 %v96, %v96
    %v101 = vmul.f32 %v97, %v97
    %102 = vadd.xlane.f32.xlu0 %v98
    %v103 = vpop.xlane.xlu0 %102
    %104 = vadd.xlane.f32.xlu0 %v99
    %v105 = vpop.xlane.xlu0 %104
    %106 = vadd.xlane.f32.xlu0 %v100
    %v107 = vpop.xlane.xlu0 %106
    %108 = vadd.xlane.f32.xlu0 %v101
    %v109 = vpop.xlane.xlu0 %108
    %v110 = vmul.f32 %v103, %v89
    %v111 = vmul.f32 %v105, %v89
    %v112 = vmul.f32 %v107, %v89
    %v113 = vmul.f32 %v109, %v89
    %v114 = vadd.f32 %v110, 1e-12
    %v115 = vadd.f32 %v111, 1e-12
    %v116 = vadd.f32 %v112, 1e-12
    %v117 = vadd.f32 %v113, 1e-12
    %v118 = vrsqrt.pop %v114
    %v119 = vrsqrt.pop %v115
    %v120 = vrsqrt.pop %v116
    %v121 = vrsqrt.pop %v117
    %v122 = vmul.f32 %v94, %v118
    %v123 = vmul.f32 %v95, %v119
    %v124 = vmul.f32 %v96, %v120
    %v125 = vmul.f32 %v97, %v121
    %v127 = vlaneseq
    %v128 = vshrl.u32 %v127, 7
    %v129 = vsub.s32 0, %v128
    %v130 = vrot.slane %v79, %v129
    %v132 = vmul.f32 %v122, %v130
    %v133 = vmul.f32 %v123, %v130
    %v134 = vmul.f32 %v124, %v130
    %v135 = vmul.f32 %v125, %v130
    %v137 = vlaneseq
    %v138 = vshrl.u32 %v137, 7
    %v139 = vsub.s32 0, %v138
    %v140 = vrot.slane %v80, %v139
    %v142 = vadd.f32 %v132, %v140
    %v143 = vadd.f32 %v133, %v140
    %v144 = vadd.f32 %v134, %v140
    %v145 = vadd.f32 %v135, %v140
    %v146 = vld [vmem:[%s1] sm:$0xff]
    %v147 = vld [vmem:[%s1 + $0x8] sm:$0xff]
    %v148 = vld [vmem:[%s1 + $0x10] sm:$0xff]
    %v149 = vld [vmem:[%s1 + $0x18] sm:$0xff]
    %v150 = vld [vmem:[%s1 + $0x20] sm:$0xff]
    %v151 = vld [vmem:[%s1 + $0x28] sm:$0xff]
    %v152 = vld [vmem:[%s1 + $0x30] sm:$0xff]
    %v153 = vld [vmem:[%s1 + $0x38] sm:$0xff]
    %v154 = vld [vmem:[%s8] sm:$0xff]
    %v155 = vld [vmem:[%s8 + $0x8] sm:$0xff]
    %v156 = vld [vmem:[%s8 + $0x10] sm:$0xff]
    %v157 = vpack.c.bf16 %v143, %v142
    %v158 = vpack.c.bf16 %v145, %v144
    %v159 = vld [vmem:[%s4] sm:$0xff]
    %v160 = vld [vmem:[%s4 + $0x8] sm:$0xf]
    %v161 = vld [vmem:[%s4 + $0xc] sm:$0xff]
    %v162 = vld [vmem:[%s4 + $0x14] sm:$0xf]
    %v163 = vld [vmem:[%s4 + $0x18] sm:$0xff]
    %v164 = vld [vmem:[%s4 + $0x20] sm:$0xf]
    %v165 = vld [vmem:[%s4 + $0x24] sm:$0xff]
    %v166 = vld [vmem:[%s4 + $0x2c] sm:$0xf]
    %v167 = vld [vmem:[%s4 + $0x30] sm:$0xff]
    %v168 = vld [vmem:[%s4 + $0x38] sm:$0xf]
    %v169 = vld [vmem:[%s4 + $0x3c] sm:$0xff]
    %v170 = vld [vmem:[%s4 + $0x44] sm:$0xf]
    %v171 = vld [vmem:[%s4 + $0x48] sm:$0xff]
    %v172 = vld [vmem:[%s4 + $0x50] sm:$0xf]
    %v173 = vld [vmem:[%s4 + $0x54] sm:$0xff]
    %v174 = vld [vmem:[%s4 + $0x5c] sm:$0xf]
    %v175 = vld [vmem:[%s4 + $0x60] sm:$0xff]
    %v176 = vld [vmem:[%s4 + $0x68] sm:$0xf]
    %v177 = vld [vmem:[%s4 + $0x6c] sm:$0xff]
    %v178 = vld [vmem:[%s4 + $0x74] sm:$0xf]
    %v179 = vld [vmem:[%s4 + $0x78] sm:$0xff]
    %v180 = vld [vmem:[%s4 + $0x80] sm:$0xf]
    %v181 = vld [vmem:[%s4 + $0x84] sm:$0xff]
    %v182 = vld [vmem:[%s4 + $0x8c] sm:$0xf]
    %v183 = vld [vmem:[%s4 + $0x90] sm:$0xff]
    %v184 = vld [vmem:[%s4 + $0x98] sm:$0xf]
    %v185 = vld [vmem:[%s4 + $0x9c] sm:$0xff]
    %v186 = vld [vmem:[%s4 + $0xa4] sm:$0xf]
    %v187 = vld [vmem:[%s4 + $0xa8] sm:$0xff]
    %v188 = vld [vmem:[%s4 + $0xb0] sm:$0xf]
    %v189 = vld [vmem:[%s4 + $0xb4] sm:$0xff]
    %v190 = vld [vmem:[%s4 + $0xbc] sm:$0xf]
    %v191 = vlaneseq
    %v192 = vshrl.u32 %v191, 7
    %v193 = vsub.s32 0, %v192
    %v194 = vrot.slane %v154, %v193
    %v195 = vlaneseq
    %v196 = vshrl.u32 %v195, 7
    %v197 = vsub.s32 0, %v196
    %v198 = vrot.slane %v155, %v197
    %v199 = vlaneseq
    %v200 = vshrl.u32 %v199, 7
    %v201 = vsub.s32 0, %v200
    %v202 = vrot.slane %v156, %v201
    %v235 = vunpack.c.l.b16 %v159
    %v236 = vunpack.c.h.b16 %v159
    %v237 = vunpack.c.l.b16 %v160
    %v238 = vunpack.c.l.b16 %v161
    %v239 = vunpack.c.h.b16 %v161
    %v240 = vunpack.c.l.b16 %v162
    %v241 = vunpack.c.l.b16 %v163
    %v242 = vunpack.c.h.b16 %v163
    %v243 = vunpack.c.l.b16 %v164
    %v244 = vunpack.c.l.b16 %v165
    %v245 = vunpack.c.h.b16 %v165
    %v246 = vunpack.c.l.b16 %v166
    %v247 = vunpack.c.l.b16 %v167
    %v248 = vunpack.c.h.b16 %v167
    %v249 = vunpack.c.l.b16 %v168
    %v250 = vunpack.c.l.b16 %v169
    %v251 = vunpack.c.h.b16 %v169
    %v252 = vunpack.c.l.b16 %v170
    %v253 = vunpack.c.l.b16 %v171
    %v254 = vunpack.c.h.b16 %v171
    %v255 = vunpack.c.l.b16 %v172
    %v256 = vunpack.c.l.b16 %v173
    %v257 = vunpack.c.h.b16 %v173
    %v258 = vunpack.c.l.b16 %v174
    %v259 = vunpack.c.l.b16 %v175
    %v260 = vunpack.c.h.b16 %v175
    %v261 = vunpack.c.l.b16 %v176
    %v262 = vunpack.c.l.b16 %v177
    %v263 = vunpack.c.h.b16 %v177
    %v264 = vunpack.c.l.b16 %v178
    %v265 = vunpack.c.l.b16 %v179
    %v266 = vunpack.c.h.b16 %v179
    %v267 = vunpack.c.l.b16 %v180
    %v268 = vunpack.c.l.b16 %v181
    %v269 = vunpack.c.h.b16 %v181
    %v270 = vunpack.c.l.b16 %v182
    %v271 = vunpack.c.l.b16 %v183
    %v272 = vunpack.c.h.b16 %v183
    %v273 = vunpack.c.l.b16 %v184
    %v274 = vunpack.c.l.b16 %v185
    %v275 = vunpack.c.h.b16 %v185
    %v276 = vunpack.c.l.b16 %v186
    %v277 = vunpack.c.l.b16 %v187
    %v278 = vunpack.c.h.b16 %v187
    %v279 = vunpack.c.l.b16 %v188
    %v280 = vunpack.c.l.b16 %v189
    %v281 = vunpack.c.h.b16 %v189
    %v282 = vunpack.c.l.b16 %v190
    %v283 = vpack.c.b16 %v238, %v235
    %v284 = vpack.c.b16 %v239, %v236
    %v285 = vpack.c.b16 %v240, %v237
    %v286 = vpack.c.b16 %v244, %v241
    %v287 = vpack.c.b16 %v245, %v242
    %v288 = vpack.c.b16 %v246, %v243
    %v289 = vpack.c.b16 %v250, %v247
    %v290 = vpack.c.b16 %v251, %v248
    %v291 = vpack.c.b16 %v252, %v249
    %v292 = vpack.c.b16 %v256, %v253
    %v293 = vpack.c.b16 %v257, %v254
    %v294 = vpack.c.b16 %v258, %v255
    %v295 = vpack.c.b16 %v262, %v259
    %v296 = vpack.c.b16 %v263, %v260
    %v297 = vpack.c.b16 %v264, %v261
    %v298 = vpack.c.b16 %v268, %v265
    %v299 = vpack.c.b16 %v269, %v266
    %v300 = vpack.c.b16 %v270, %v267
    %v301 = vpack.c.b16 %v274, %v271
    %v302 = vpack.c.b16 %v275, %v272
    %v303 = vpack.c.b16 %v276, %v273
    %v304 = vpack.c.b16 %v280, %v277
    %v305 = vpack.c.b16 %v281, %v278
    %v306 = vpack.c.b16 %v282, %v279
    %331 = vmatprep.subr.bf16.mxu0 %v284
    %332 = vmatpush1.bf16.msra.mxu0 %v283
    %333 = vmatprep.subr.bf16.mxu0 %v287
    %334 = vmatpush1.bf16.msra.mxu0 %v286
    %335 = vmatprep.subr.bf16.mxu0 %v290
    %336 = vmatpush1.bf16.msra.mxu0 %v289
    %337 = vmatprep.subr.bf16.mxu0 %v293
    %338 = vmatpush1.bf16.msra.mxu0 %v292
    %339 = vmatprep.subr.bf16.mxu0 %v296
    %340 = vmatpush1.bf16.msra.mxu0 %v295
    %341 = vmatprep.subr.bf16.mxu0 %v299
    %342 = vmatpush1.bf16.msra.mxu0 %v298
    %343 = vmatprep.subr.bf16.mxu0 %v302
    %344 = vmatpush1.bf16.msra.mxu0 %v301
    %345 = vmatprep.subr.bf16.mxu0 %v305
    %346 = vmatpush1.bf16.msra.mxu0 %v304
    %347 = vmatprep.subr.bf16.mxu0 0
    %348 = vmatpush1.bf16.msra.mxu0 0
    %349 = vmatprep.subr.bf16.mxu0 0
    %350 = vmatpush1.bf16.msra.mxu0 0
    %351 = vmatprep.subr.bf16.mxu0 0
    %352 = vmatpush1.bf16.msra.mxu0 0
    %353 = vmatprep.subr.bf16.mxu0 0
    %354 = vmatpush1.bf16.msra.mxu0 0
    %355 = vmatprep.subr.bf16.mxu0 0
    %356 = vmatpush1.bf16.msra.mxu0 0
    %357 = vmatprep.subr.bf16.mxu0 0
    %358 = vmatpush1.bf16.msra.mxu0 0
    %359 = vmatprep.subr.bf16.mxu0 0
    %360 = vmatpush1.bf16.msra.mxu0 0
    %361 = vmatprep.subr.bf16.mxu0 0
    %362 = vmatpush1.bf16.msra.mxu0 0
    %363 = vmatprep.mubr.bf16.mxu0 0
    %364 = vmatmul.mubr.bf16.gmra.mrb[0].mxu0 %v157
    %v365 = vpop.f32.mrb[0].mxu0
    %v366 = vadd.f32 %v194, %v365
    %v367 = vpop.f32.mrb[0].mxu0
    %v368 = vadd.f32 %v198, %v367
    %v369 = vpop.f32.mrb[0].mxu0
    %v370 = vadd.f32 %v194, %v369
    %v371 = vpop.f32.mrb[0].mxu0
    %v372 = vadd.f32 %v198, %v371
    %373 = vmatprep.mubr.bf16.mxu0 0
    %374 = vmatmul.mubr.bf16.gmra.mrb[0].mxu0 %v158
    %v375 = vpop.f32.mrb[0].mxu0
    %v376 = vadd.f32 %v194, %v375
    %v377 = vpop.f32.mrb[0].mxu0
    %v378 = vadd.f32 %v198, %v377
    %v379 = vpop.f32.mrb[0].mxu0
    %v380 = vadd.f32 %v194, %v379
    %v381 = vpop.f32.mrb[0].mxu0
    %v382 = vadd.f32 %v198, %v381
    %383 = vdwg.mxu0
    %384 = vmatprep.subr.bf16.mxu0 0
    %385 = vmatpush1.bf16.msra.mxu0 %v285
    %386 = vmatprep.subr.bf16.mxu0 0
    %387 = vmatpush1.bf16.msra.mxu0 %v288
    %388 = vmatprep.subr.bf16.mxu0 0
    %389 = vmatpush1.bf16.msra.mxu0 %v291
    %390 = vmatprep.subr.bf16.mxu0 0
    %391 = vmatpush1.bf16.msra.mxu0 %v294
    %392 = vmatprep.subr.bf16.mxu0 0
    %393 = vmatpush1.bf16.msra.mxu0 %v297
    %394 = vmatprep.subr.bf16.mxu0 0
    %395 = vmatpush1.bf16.msra.mxu0 %v300
    %396 = vmatprep.subr.bf16.mxu0 0
    %397 = vmatpush1.bf16.msra.mxu0 %v303
    %398 = vmatprep.subr.bf16.mxu0 0
    %399 = vmatpush1.bf16.msra.mxu0 %v306
    %400 = vmatprep.subr.bf16.mxu0 0
    %401 = vmatpush1.bf16.msra.mxu0 0
    %402 = vmatprep.subr.bf16.mxu0 0
    %403 = vmatpush1.bf16.msra.mxu0 0
    %404 = vmatprep.subr.bf16.mxu0 0
    %405 = vmatpush1.bf16.msra.mxu0 0
    %406 = vmatprep.subr.bf16.mxu0 0
    %407 = vmatpush1.bf16.msra.mxu0 0
    %408 = vmatprep.subr.bf16.mxu0 0
    %409 = vmatpush1.bf16.msra.mxu0 0
    %410 = vmatprep.subr.bf16.mxu0 0
    %411 = vmatpush1.bf16.msra.mxu0 0
    %412 = vmatprep.subr.bf16.mxu0 0
    %413 = vmatpush1.bf16.msra.mxu0 0
    %414 = vmatprep.subr.bf16.mxu0 0
    %415 = vmatpush1.bf16.msra.mxu0 0
    %416 = vmatprep.mubr.bf16.mxu0 0
    %417 = vmatmul.mubr.bf16.gmra.mrb[0].mxu0 %v157
    %v418 = vpop.f32.mrb[0].mxu0
    %v419 = vadd.f32 %v202, %v418
    %v420 = vpop.f32.mrb[0].mxu0
    %v421 = vpop.f32.mrb[0].mxu0
    %v422 = vadd.f32 %v202, %v421
    %v423 = vpop.f32.mrb[0].mxu0
    %424 = vmatprep.mubr.bf16.mxu0 0
    %425 = vmatmul.mubr.bf16.gmra.mrb[0].mxu0 %v158
    %v426 = vpop.f32.mrb[0].mxu0
    %v427 = vadd.f32 %v202, %v426
    %v428 = vpop.f32.mrb[0].mxu0
    %v429 = vpop.f32.mrb[0].mxu0
    %v430 = vadd.f32 %v202, %v429
    %v431 = vpop.f32.mrb[0].mxu0
    %432 = vdwg.mxu0
    %v433 = vpack.c.bf16 %v370, %v366
    %v434 = vpack.c.bf16 %v372, %v368
    %v435 = vpack.c.bf16 %v422, %v419
    %v436 = vpack.c.bf16 %v380, %v376
    %v437 = vpack.c.bf16 %v382, %v378
    %v438 = vpack.c.bf16 %v430, %v427
    %440 = vrot.lane.b32.xlu0 %v433, 64
    %v441 = vpop.permute.xlu0 %440
    %443 = vrot.lane.b32.xlu0 %v436, 64
    %v444 = vpop.permute.xlu0 %443
    %446 = vrot.lane.b32.xlu0 %v434, 64
    %v447 = vpop.permute.xlu0 %446
    %449 = vrot.lane.b32.xlu0 %v437, 64
    %v450 = vpop.permute.xlu0 %449
    %452 = vrot.lane.b32.xlu0 %v435, 64
    %v453 = vpop.permute.xlu0 %452
    %456 = vrot.lane.b32.xlu0 %v438, 64
    %v457 = vpop.permute.xlu0 %456
    %vm459 = vcmask 523264
    %v461 = vsel %vm459, %v433, 0
    %v464 = vsel %vm459, %v441, 0
    %v467 = vsel %vm459, %v436, 0
    %v470 = vsel %vm459, %v444, 0
    %v473 = vsel %vm459, %v434, 0
    %v476 = vsel %vm459, %v447, 0
    %v479 = vsel %vm459, %v437, 0
    %v482 = vsel %vm459, %v450, 0
    %484 = vmatprep.subr.bf16.mxu0 0
    %485 = vmatpush1.bf16.xpose.msra.mxu0 %v473
    %486 = vmatprep.subr.bf16.mxu0 0
    %487 = vmatpush1.bf16.xpose.msra.mxu0 %v476
    %488 = vmatprep.subr.bf16.mxu0 0
    %489 = vmatpush1.bf16.xpose.msra.mxu0 %v479
    %490 = vmatprep.subr.bf16.mxu0 0
    %491 = vmatpush1.bf16.xpose.msra.mxu0 %v482
    %492 = vmatprep.subr.bf16.mxu0 0
    %493 = vmatpush1.bf16.xpose.msra.mxu0 0
    %494 = vmatprep.subr.bf16.mxu0 0
    %495 = vmatpush1.bf16.xpose.msra.mxu0 0
    %496 = vmatprep.subr.bf16.mxu0 0
    %497 = vmatpush1.bf16.xpose.msra.mxu0 0
    %498 = vmatprep.subr.bf16.mxu0 0
    %499 = vmatpush1.bf16.xpose.msra.mxu0 0
    %500 = vmatprep.subr.bf16.mxu0 0
    %501 = vmatpush1.bf16.xpose.msra.mxu0 0
    %502 = vmatprep.subr.bf16.mxu0 0
    %503 = vmatpush1.bf16.xpose.msra.mxu0 0
    %504 = vmatprep.subr.bf16.mxu0 0
    %505 = vmatpush1.bf16.xpose.msra.mxu0 0
    %506 = vmatprep.subr.bf16.mxu0 0
    %507 = vmatpush1.bf16.xpose.msra.mxu0 0
    %508 = vmatprep.subr.bf16.mxu0 0
    %509 = vmatpush1.bf16.xpose.msra.mxu0 0
    %510 = vmatprep.subr.bf16.mxu0 0
    %511 = vmatpush1.bf16.xpose.msra.mxu0 0
    %512 = vmatprep.subr.bf16.mxu0 0
    %513 = vmatpush1.bf16.xpose.msra.mxu0 0
    %514 = vmatprep.subr.bf16.mxu0 0
    %515 = vmatpush1.bf16.xpose.msra.mxu0 0
    %516 = vmatprep.mubr.bf16.mxu0 0
    %517 = vmatmul.mubr.bf16.gmra.mrb[0].mxu0 %v461
    %v518 = vpop.f32.mrb[0].mxu0
    %v519 = vadd.f32 0.0, %v518
    %v520 = vpop.f32.mrb[0].mxu0
    %v521 = vpop.f32.mrb[0].mxu0
    %v522 = vadd.f32 0.0, %v521
    %v523 = vpop.f32.mrb[0].mxu0
    %524 = vmatprep.mubr.bf16.mxu0 0
    %525 = vmatmul.mubr.bf16.gmra.mrb[0].mxu0 %v464
    %v526 = vpop.f32.mrb[0].mxu0
    %v527 = vadd.f32 0.0, %v526
    %v528 = vpop.f32.mrb[0].mxu0
    %v529 = vpop.f32.mrb[0].mxu0
    %v530 = vadd.f32 0.0, %v529
    %v531 = vpop.f32.mrb[0].mxu0
    %532 = vmatprep.mubr.bf16.mxu0 0
    %533 = vmatmul.mubr.bf16.gmra.mrb[0].mxu0 %v467
    %v534 = vpop.f32.mrb[0].mxu0
    %v535 = vadd.f32 0.0, %v534
    %v536 = vpop.f32.mrb[0].mxu0
    %v537 = vpop.f32.mrb[0].mxu0
    %v538 = vadd.f32 0.0, %v537
    %v539 = vpop.f32.mrb[0].mxu0
    %540 = vmatprep.mubr.bf16.mxu0 0
    %541 = vmatmul.mubr.bf16.gmra.mrb[0].mxu0 %v470
    %v542 = vpop.f32.mrb[0].mxu0
    %v543 = vadd.f32 0.0, %v542
    %v544 = vpop.f32.mrb[0].mxu0
    %v545 = vpop.f32.mrb[0].mxu0
    %v546 = vadd.f32 0.0, %v545
    %v547 = vpop.f32.mrb[0].mxu0
    %548 = vdwg.mxu0
    %v549 = vmul.f32 %v519, 0.125
    %v550 = vmul.f32 %v522, 0.125
    %v551 = vmul.f32 %v527, 0.125
    %v552 = vmul.f32 %v530, 0.125
    %v553 = vmul.f32 %v535, 0.125
    %v554 = vmul.f32 %v538, 0.125
    %v555 = vmul.f32 %v543, 0.125
    %v556 = vmul.f32 %v546, 0.125
    %v557 = vadd.f32 %v549, %v146
    %v558 = vadd.f32 %v550, %v147
    %v559 = vadd.f32 %v551, %v148
    %v560 = vadd.f32 %v552, %v149
    %v561 = vadd.f32 %v553, %v150
    %v562 = vadd.f32 %v554, %v151
    %v563 = vadd.f32 %v555, %v152
    %v564 = vadd.f32 %v556, %v153
    %v565 = vsel %vm459, %v557, -inf
    %566 = vmax.xlane.f32.xlu0 %v565
    %v567 = vpop.xlane.xlu0 %566
    %v568 = vsel %vm459, %v558, -inf
    %569 = vmax.xlane.f32.xlu0 %v568
    %v570 = vpop.xlane.xlu0 %569
    %v571 = vsel %vm459, %v559, -inf
    %572 = vmax.xlane.f32.xlu0 %v571
    %v573 = vpop.xlane.xlu0 %572
    %v574 = vsel %vm459, %v560, -inf
    %575 = vmax.xlane.f32.xlu0 %v574
    %v576 = vpop.xlane.xlu0 %575
    %v577 = vsel %vm459, %v561, -inf
    %578 = vmax.xlane.f32.xlu0 %v577
    %v579 = vpop.xlane.xlu0 %578
    %v580 = vsel %vm459, %v562, -inf
    %581 = vmax.xlane.f32.xlu0 %v580
    %v582 = vpop.xlane.xlu0 %581
    %v583 = vsel %vm459, %v563, -inf
    %584 = vmax.xlane.f32.xlu0 %v583
    %v585 = vpop.xlane.xlu0 %584
    %v586 = vsel %vm459, %v564, -inf
    %587 = vmax.xlane.f32.xlu0 %v586
    %v588 = vpop.xlane.xlu0 %587
    %v589 = vsub.f32 %v557, %v567
    %v590 = vsub.f32 %v558, %v570
    %v591 = vsub.f32 %v559, %v573
    %v592 = vsub.f32 %v560, %v576
    %v593 = vsub.f32 %v561, %v579
    %v594 = vsub.f32 %v562, %v582
    %v595 = vsub.f32 %v563, %v585
    %v596 = vsub.f32 %v564, %v588
    %v597 = vmul.f32 %v589, 1.442695
    %v598 = vpow.pop %v597
    %v599 = vmul.f32 %v590, 1.442695
    %v600 = vpow.pop %v599
    %v601 = vmul.f32 %v591, 1.442695
    %v602 = vpow.pop %v601
    %v603 = vmul.f32 %v592, 1.442695
    %v604 = vpow.pop %v603
    %v605 = vmul.f32 %v593, 1.442695
    %v606 = vpow.pop %v605
    %v607 = vmul.f32 %v594, 1.442695
    %v608 = vpow.pop %v607
    %v609 = vmul.f32 %v595, 1.442695
    %v610 = vpow.pop %v609
    %v611 = vmul.f32 %v596, 1.442695
    %v612 = vpow.pop %v611
    %v613 = vsel %vm459, %v598, 0.0
    %614 = vadd.xlane.f32.xlu0 %v613
    %v615 = vpop.xlane.xlu0 %614
    %v616 = vsel %vm459, %v600, 0.0
    %617 = vadd.xlane.f32.xlu0 %v616
    %v618 = vpop.xlane.xlu0 %617
    %v619 = vsel %vm459, %v602, 0.0
    %620 = vadd.xlane.f32.xlu0 %v619
    %v621 = vpop.xlane.xlu0 %620
    %v622 = vsel %vm459, %v604, 0.0
    %623 = vadd.xlane.f32.xlu0 %v622
    %v624 = vpop.xlane.xlu0 %623
    %v625 = vsel %vm459, %v606, 0.0
    %626 = vadd.xlane.f32.xlu0 %v625
    %v627 = vpop.xlane.xlu0 %626
    %v628 = vsel %vm459, %v608, 0.0
    %629 = vadd.xlane.f32.xlu0 %v628
    %v630 = vpop.xlane.xlu0 %629
    %v631 = vsel %vm459, %v610, 0.0
    %632 = vadd.xlane.f32.xlu0 %v631
    %v633 = vpop.xlane.xlu0 %632
    %v634 = vsel %vm459, %v612, 0.0
    %635 = vadd.xlane.f32.xlu0 %v634
    %v636 = vpop.xlane.xlu0 %635
    %v637 = vrcp.pop %v615
    %v638 = vrcp.pop %v618
    %v639 = vrcp.pop %v621
    %v640 = vrcp.pop %v624
    %v641 = vrcp.pop %v627
    %v642 = vrcp.pop %v630
    %v643 = vrcp.pop %v633
    %v644 = vrcp.pop %v636
    %v645 = vmul.f32 %v598, %v637
    %v646 = vmul.f32 %v600, %v638
    %v647 = vmul.f32 %v602, %v639
    %v648 = vmul.f32 %v604, %v640
    %v649 = vmul.f32 %v606, %v641
    %v650 = vmul.f32 %v608, %v642
    %v651 = vmul.f32 %v610, %v643
    %v652 = vmul.f32 %v612, %v644
    %v653 = vpack.c.bf16 %v646, %v645
    %v654 = vpack.c.bf16 %v648, %v647
    %v655 = vpack.c.bf16 %v650, %v649
    %v656 = vpack.c.bf16 %v652, %v651
    %v658 = vsel %vm459, %v653, 0
    %v661 = vsel %vm459, %v654, 0
    %v664 = vsel %vm459, %v655, 0
    %v667 = vsel %vm459, %v656, 0
    %669 = vmatprep.subr.bf16.mxu0 0
    %670 = vmatpush1.bf16.msra.mxu0 %v435
    %671 = vmatprep.subr.bf16.mxu0 0
    %672 = vmatpush1.bf16.msra.mxu0 %v453
    %673 = vmatprep.subr.bf16.mxu0 0
    %674 = vmatpush1.bf16.msra.mxu0 %v438
    %675 = vmatprep.subr.bf16.mxu0 0
    %676 = vmatpush1.bf16.msra.mxu0 %v457
    %677 = vmatprep.subr.bf16.mxu0 0
    %678 = vmatpush1.bf16.msra.mxu0 0
    %679 = vmatprep.subr.bf16.mxu0 0
    %680 = vmatpush1.bf16.msra.mxu0 0
    %681 = vmatprep.subr.bf16.mxu0 0
    %682 = vmatpush1.bf16.msra.mxu0 0
    %683 = vmatprep.subr.bf16.mxu0 0
    %684 = vmatpush1.bf16.msra.mxu0 0
    %685 = vmatprep.subr.bf16.mxu0 0
    %686 = vmatpush1.bf16.msra.mxu0 0
    %687 = vmatprep.subr.bf16.mxu0 0
    %688 = vmatpush1.bf16.msra.mxu0 0
    %689 = vmatprep.subr.bf16.mxu0 0
    %690 = vmatpush1.bf16.msra.mxu0 0
    %691 = vmatprep.subr.bf16.mxu0 0
    %692 = vmatpush1.bf16.msra.mxu0 0
    %693 = vmatprep.subr.bf16.mxu0 0
    %694 = vmatpush1.bf16.msra.mxu0 0
    %695 = vmatprep.subr.bf16.mxu0 0
    %696 = vmatpush1.bf16.msra.mxu0 0
    %697 = vmatprep.subr.bf16.mxu0 0
    %698 = vmatpush1.bf16.msra.mxu0 0
    %699 = vmatprep.subr.bf16.mxu0 0
    %700 = vmatpush1.bf16.msra.mxu0 0
    %701 = vmatprep.mubr.bf16.mxu0 0
    %702 = vmatmul.mubr.bf16.gmra.mrb[0].mxu0 %v658
    %v703 = vpop.f32.mrb[0].mxu0
    %v704 = vadd.f32 0.0, %v703
    %v705 = vpop.f32.mrb[0].mxu0
    %v706 = vpop.f32.mrb[0].mxu0
    %v707 = vadd.f32 0.0, %v706
    %v708 = vpop.f32.mrb[0].mxu0
    %709 = vmatprep.mubr.bf16.mxu0 0
    %710 = vmatmul.mubr.bf16.gmra.mrb[0].mxu0 %v661
    %v711 = vpop.f32.mrb[0].mxu0
    %v712 = vadd.f32 0.0, %v711
    %v713 = vpop.f32.mrb[0].mxu0
    %v714 = vpop.f32.mrb[0].mxu0
    %v715 = vadd.f32 0.0, %v714
    %v716 = vpop.f32.mrb[0].mxu0
    %717 = vmatprep.mubr.bf16.mxu0 0
    %718 = vmatmul.mubr.bf16.gmra.mrb[0].mxu0 %v664
    %v719 = vpop.f32.mrb[0].mxu0
    %v720 = vadd.f32 0.0, %v719
    %v721 = vpop.f32.mrb[0].mxu0
    %v722 = vpop.f32.mrb[0].mxu0
    %v723 = vadd.f32 0.0, %v722
    %v724 = vpop.f32.mrb[0].mxu0
    %725 = vmatprep.mubr.bf16.mxu0 0
    %726 = vmatmul.mubr.bf16.gmra.mrb[0].mxu0 %v667
    %v727 = vpop.f32.mrb[0].mxu0
    %v728 = vadd.f32 0.0, %v727
    %v729 = vpop.f32.mrb[0].mxu0
    %v730 = vpop.f32.mrb[0].mxu0
    %v731 = vadd.f32 0.0, %v730
    %v732 = vpop.f32.mrb[0].mxu0
    %733 = vdwg.mxu0
    %736 = vrot.lane.b32.xlu0 %v712, 64
    %v737 = vpop.permute.xlu0 %736
    %738 = vrot.lane.b32.xlu0 %v715, 64
    %v739 = vpop.permute.xlu0 %738
    %v742 = vsel %vm459, %v704, %v737
    %v743 = vsel %vm459, %v707, %v739
    %746 = vrot.lane.b32.xlu0 %v728, 64
    %v747 = vpop.permute.xlu0 %746
    %748 = vrot.lane.b32.xlu0 %v731, 64
    %v749 = vpop.permute.xlu0 %748
    %v752 = vsel %vm459, %v720, %v747
    %v753 = vsel %vm459, %v723, %v749
    %v754 = vpack.c.bf16 %v743, %v742
    %v755 = vpack.c.bf16 %v753, %v752
    %v756 = vld [vmem:[#allocation3] sm:$0xf]
    %v757 = vld [vmem:[#allocation3 + $0x4] sm:$0xf]
    %v758 = vld [vmem:[#allocation3 + $0x8] sm:$0xf]
    %v759 = vld [vmem:[#allocation3 + $0xc] sm:$0xf]
    %v760 = vld [vmem:[#allocation3 + $0x10] sm:$0xf]
    %v761 = vld [vmem:[#allocation3 + $0x14] sm:$0xf]
    %v762 = vld [vmem:[#allocation3 + $0x18] sm:$0xf]
    %v763 = vld [vmem:[#allocation3 + $0x1c] sm:$0xf]
    %v764 = vld [vmem:[#allocation3 + $0x20] sm:$0xf]
    %v765 = vld [vmem:[#allocation3 + $0x24] sm:$0xf]
    %v766 = vld [vmem:[#allocation3 + $0x28] sm:$0xf]
    %v767 = vld [vmem:[#allocation3 + $0x2c] sm:$0xf]
    %v768 = vld [vmem:[#allocation3 + $0x30] sm:$0xf]
    %v769 = vld [vmem:[#allocation3 + $0x34] sm:$0xf]
    %v770 = vld [vmem:[#allocation3 + $0x38] sm:$0xf]
    %v771 = vld [vmem:[#allocation3 + $0x3c] sm:$0xf]
    %v772 = vlaneseq
    %v773 = vshrl.u32 %v772, 7
    %v774 = vsub.s32 1, %v773
    %v775 = vrot.slane %v154, %v774
    %v792 = vunpack.c.l.b16 %v756
    %v793 = vunpack.c.l.b16 %v757
    %v794 = vunpack.c.l.b16 %v758
    %v795 = vunpack.c.l.b16 %v759
    %v796 = vunpack.c.l.b16 %v760
    %v797 = vunpack.c.l.b16 %v761
    %v798 = vunpack.c.l.b16 %v762
    %v799 = vunpack.c.l.b16 %v763
    %v800 = vunpack.c.l.b16 %v764
    %v801 = vunpack.c.l.b16 %v765
    %v802 = vunpack.c.l.b16 %v766
    %v803 = vunpack.c.l.b16 %v767
    %v804 = vunpack.c.l.b16 %v768
    %v805 = vunpack.c.l.b16 %v769
    %v806 = vunpack.c.l.b16 %v770
    %v807 = vunpack.c.l.b16 %v771
    %v808 = vpack.c.b16 %v793, %v792
    %v809 = vpack.c.b16 %v795, %v794
    %v810 = vpack.c.b16 %v797, %v796
    %v811 = vpack.c.b16 %v799, %v798
    %v812 = vpack.c.b16 %v801, %v800
    %v813 = vpack.c.b16 %v803, %v802
    %v814 = vpack.c.b16 %v805, %v804
    %v815 = vpack.c.b16 %v807, %v806
    %824 = vmatprep.subr.bf16.mxu0 0
    %825 = vmatpush1.bf16.msra.mxu0 %v808
    %826 = vmatprep.subr.bf16.mxu0 0
    %827 = vmatpush1.bf16.msra.mxu0 %v809
    %828 = vmatprep.subr.bf16.mxu0 0
    %829 = vmatpush1.bf16.msra.mxu0 %v810
    %830 = vmatprep.subr.bf16.mxu0 0
    %831 = vmatpush1.bf16.msra.mxu0 %v811
    %832 = vmatprep.subr.bf16.mxu0 0
    %833 = vmatpush1.bf16.msra.mxu0 %v812
    %834 = vmatprep.subr.bf16.mxu0 0
    %835 = vmatpush1.bf16.msra.mxu0 %v813
    %836 = vmatprep.subr.bf16.mxu0 0
    %837 = vmatpush1.bf16.msra.mxu0 %v814
    %838 = vmatprep.subr.bf16.mxu0 0
    %839 = vmatpush1.bf16.msra.mxu0 %v815
    %840 = vmatprep.subr.bf16.mxu0 0
    %841 = vmatpush1.bf16.msra.mxu0 0
    %842 = vmatprep.subr.bf16.mxu0 0
    %843 = vmatpush1.bf16.msra.mxu0 0
    %844 = vmatprep.subr.bf16.mxu0 0
    %845 = vmatpush1.bf16.msra.mxu0 0
    %846 = vmatprep.subr.bf16.mxu0 0
    %847 = vmatpush1.bf16.msra.mxu0 0
    %848 = vmatprep.subr.bf16.mxu0 0
    %849 = vmatpush1.bf16.msra.mxu0 0
    %850 = vmatprep.subr.bf16.mxu0 0
    %851 = vmatpush1.bf16.msra.mxu0 0
    %852 = vmatprep.subr.bf16.mxu0 0
    %853 = vmatpush1.bf16.msra.mxu0 0
    %854 = vmatprep.subr.bf16.mxu0 0
    %855 = vmatpush1.bf16.msra.mxu0 0
    %856 = vmatprep.mubr.bf16.mxu0 0
    %857 = vmatmul.mubr.bf16.gmra.mrb[0].mxu0 %v754
    %v858 = vpop.f32.mrb[0].mxu0
    %v859 = vadd.f32 %v775, %v858
    %v860 = vpop.f32.mrb[0].mxu0
    %v861 = vpop.f32.mrb[0].mxu0
    %v862 = vadd.f32 %v775, %v861
    %v863 = vpop.f32.mrb[0].mxu0
    %864 = vmatprep.mubr.bf16.mxu0 0
    %865 = vmatmul.mubr.bf16.gmra.mrb[0].mxu0 %v755
    %v866 = vpop.f32.mrb[0].mxu0
    %v867 = vadd.f32 %v775, %v866
    %v868 = vpop.f32.mrb[0].mxu0
    %v869 = vpop.f32.mrb[0].mxu0
    %v870 = vadd.f32 %v775, %v869
    %v871 = vpop.f32.mrb[0].mxu0
    %872 = vdwg.mxu0
    %v873 = vadd.f32 %v859, %v142
    %v874 = vadd.f32 %v862, %v143
    %v875 = vadd.f32 %v867, %v144
    %v876 = vadd.f32 %v870, %v145
    %877 = vadd.xlane.f32.xlu0 %v873
    %v878 = vpop.xlane.xlu0 %877
    %879 = vadd.xlane.f32.xlu0 %v874
    %v880 = vpop.xlane.xlu0 %879
    %881 = vadd.xlane.f32.xlu0 %v875
    %v882 = vpop.xlane.xlu0 %881
    %883 = vadd.xlane.f32.xlu0 %v876
    %v884 = vpop.xlane.xlu0 %883
    %v885 = vmul.f32 %v878, %v89
    %v886 = vmul.f32 %v880, %v89
    %v887 = vmul.f32 %v882, %v89
    %v888 = vmul.f32 %v884, %v89
    %v889 = vsub.f32 %v873, %v885
    %v890 = vsub.f32 %v874, %v886
    %v891 = vsub.f32 %v875, %v887
    %v892 = vsub.f32 %v876, %v888
    %v893 = vmul.f32 %v889, %v889
    %v894 = vmul.f32 %v890, %v890
    %v895 = vmul.f32 %v891, %v891
    %v896 = vmul.f32 %v892, %v892
    %897 = vadd.xlane.f32.xlu0 %v893
    %v898 = vpop.xlane.xlu0 %897
    %899 = vadd.xlane.f32.xlu0 %v894
    %v900 = vpop.xlane.xlu0 %899
    %901 = vadd.xlane.f32.xlu0 %v895
    %v902 = vpop.xlane.xlu0 %901
    %903 = vadd.xlane.f32.xlu0 %v896
    %v904 = vpop.xlane.xlu0 %903
    %v905 = vmul.f32 %v898, %v89
    %v906 = vmul.f32 %v900, %v89
    %v907 = vmul.f32 %v902, %v89
    %v908 = vmul.f32 %v904, %v89
    %v909 = vadd.f32 %v905, 1e-12
    %v910 = vadd.f32 %v906, 1e-12
    %v911 = vadd.f32 %v907, 1e-12
    %v912 = vadd.f32 %v908, 1e-12
    %v913 = vrsqrt.pop %v909
    %v914 = vrsqrt.pop %v910
    %v915 = vrsqrt.pop %v911
    %v916 = vrsqrt.pop %v912
    %v917 = vmul.f32 %v889, %v913
    %v918 = vmul.f32 %v890, %v914
    %v919 = vmul.f32 %v891, %v915
    %v920 = vmul.f32 %v892, %v916
    %v921 = vlaneseq
    %v922 = vshrl.u32 %v921, 7
    %v923 = vsub.s32 2, %v922
    %v924 = vrot.slane %v154, %v923
    %v925 = vmul.f32 %v917, %v924
    %v926 = vmul.f32 %v918, %v924
    %v927 = vmul.f32 %v919, %v924
    %v928 = vmul.f32 %v920, %v924
    %v929 = vlaneseq
    %v930 = vshrl.u32 %v929, 7
    %v931 = vsub.s32 3, %v930
    %v932 = vrot.slane %v154, %v931
    %v933 = vadd.f32 %v925, %v932
    %v934 = vadd.f32 %v926, %v932
    %v935 = vadd.f32 %v927, %v932
    %v936 = vadd.f32 %v928, %v932
    %v937 = vpack.c.bf16 %v934, %v933
    %v938 = vpack.c.bf16 %v936, %v935
    %v939 = vld [vmem:[%s6] sm:$0xff]
    %v940 = vld [vmem:[%s6 + $0x8] sm:$0xff]
    %v941 = vld [vmem:[%s6 + $0x10] sm:$0xff]
    %v942 = vld [vmem:[%s6 + $0x18] sm:$0xff]
    %v943 = vld [vmem:[%s6 + $0x20] sm:$0xff]
    %v944 = vld [vmem:[%s6 + $0x28] sm:$0xff]
    %v945 = vld [vmem:[%s6 + $0x30] sm:$0xff]
    %v946 = vld [vmem:[%s6 + $0x38] sm:$0xff]
    %v947 = vld [vmem:[%s6 + $0x40] sm:$0xff]
    %v948 = vld [vmem:[%s6 + $0x48] sm:$0xff]
    %v949 = vld [vmem:[%s6 + $0x50] sm:$0xff]
    %v950 = vld [vmem:[%s6 + $0x58] sm:$0xff]
    %v951 = vld [vmem:[%s6 + $0x60] sm:$0xff]
    %v952 = vld [vmem:[%s6 + $0x68] sm:$0xff]
    %v953 = vld [vmem:[%s6 + $0x70] sm:$0xff]
    %v954 = vld [vmem:[%s6 + $0x78] sm:$0xff]
    %v955 = vlaneseq
    %v956 = vshrl.u32 %v955, 7
    %v957 = vsub.s32 4, %v956
    %v958 = vrot.slane %v154, %v957
    %v959 = vlaneseq
    %v960 = vshrl.u32 %v959, 7
    %v961 = vsub.s32 4, %v960
    %v962 = vrot.slane %v155, %v961
    %v979 = vunpack.c.l.b16 %v939
    %v980 = vunpack.c.h.b16 %v939
    %v981 = vunpack.c.l.b16 %v940
    %v982 = vunpack.c.h.b16 %v940
    %v983 = vunpack.c.l.b16 %v941
    %v984 = vunpack.c.h.b16 %v941
    %v985 = vunpack.c.l.b16 %v942
    %v986 = vunpack.c.h.b16 %v942
    %v987 = vunpack.c.l.b16 %v943
    %v988 = vunpack.c.h.b16 %v943
    %v989 = vunpack.c.l.b16 %v944
    %v990 = vunpack.c.h.b16 %v944
    %v991 = vunpack.c.l.b16 %v945
    %v992 = vunpack.c.h.b16 %v945
    %v993 = vunpack.c.l.b16 %v946
    %v994 = vunpack.c.h.b16 %v946
    %v995 = vunpack.c.l.b16 %v947
    %v996 = vunpack.c.h.b16 %v947
    %v997 = vunpack.c.l.b16 %v948
    %v998 = vunpack.c.h.b16 %v948
    %v999 = vunpack.c.l.b16 %v949
    %v1000 = vunpack.c.h.b16 %v949
    %v1001 = vunpack.c.l.b16 %v950
    %v1002 = vunpack.c.h.b16 %v950
    %v1003 = vunpack.c.l.b16 %v951
    %v1004 = vunpack.c.h.b16 %v951
    %v1005 = vunpack.c.l.b16 %v952
    %v1006 = vunpack.c.h.b16 %v952
    %v1007 = vunpack.c.l.b16 %v953
    %v1008 = vunpack.c.h.b16 %v953
    %v1009 = vunpack.c.l.b16 %v954
    %v1010 = vunpack.c.h.b16 %v954
    %v1011 = vpack.c.b16 %v981, %v979
    %v1012 = vpack.c.b16 %v982, %v980
    %v1013 = vpack.c.b16 %v985, %v983
    %v1014 = vpack.c.b16 %v986, %v984
    %v1015 = vpack.c.b16 %v989, %v987
    %v1016 = vpack.c.b16 %v990, %v988
    %v1017 = vpack.c.b16 %v993, %v991
    %v1018 = vpack.c.b16 %v994, %v992
    %v1019 = vpack.c.b16 %v997, %v995
    %v1020 = vpack.c.b16 %v998, %v996
    %v1021 = vpack.c.b16 %v1001, %v999
    %v1022 = vpack.c.b16 %v1002, %v1000
    %v1023 = vpack.c.b16 %v1005, %v1003
    %v1024 = vpack.c.b16 %v1006, %v1004
    %v1025 = vpack.c.b16 %v1009, %v1007
    %v1026 = vpack.c.b16 %v1010, %v1008
    %1043 = vmatprep.subr.bf16.mxu0 %v1012
    %1044 = vmatpush1.bf16.msra.mxu0 %v1011
    %1045 = vmatprep.subr.bf16.mxu0 %v1014
    %1046 = vmatpush1.bf16.msra.mxu0 %v1013
    %1047 = vmatprep.subr.bf16.mxu0 %v1016
    %1048 = vmatpush1.bf16.msra.mxu0 %v1015
    %1049 = vmatprep.subr.bf16.mxu0 %v1018
    %1050 = vmatpush1.bf16.msra.mxu0 %v1017
    %1051 = vmatprep.subr.bf16.mxu0 %v1020
    %1052 = vmatpush1.bf16.msra.mxu0 %v1019
    %1053 = vmatprep.subr.bf16.mxu0 %v1022
    %1054 = vmatpush1.bf16.msra.mxu0 %v1021
    %1055 = vmatprep.subr.bf16.mxu0 %v1024
    %1056 = vmatpush1.bf16.msra.mxu0 %v1023
    %1057 = vmatprep.subr.bf16.mxu0 %v1026
    %1058 = vmatpush1.bf16.msra.mxu0 %v1025
    %1059 = vmatprep.subr.bf16.mxu0 0
    %1060 = vmatpush1.bf16.msra.mxu0 0
    %1061 = vmatprep.subr.bf16.mxu0 0
    %1062 = vmatpush1.bf16.msra.mxu0 0
    %1063 = vmatprep.subr.bf16.mxu0 0
    %1064 = vmatpush1.bf16.msra.mxu0 0
    %1065 = vmatprep.subr.bf16.mxu0 0
    %1066 = vmatpush1.bf16.msra.mxu0 0
    %1067 = vmatprep.subr.bf16.mxu0 0
    %1068 = vmatpush1.bf16.msra.mxu0 0
    %1069 = vmatprep.subr.bf16.mxu0 0
    %1070 = vmatpush1.bf16.msra.mxu0 0
    %1071 = vmatprep.subr.bf16.mxu0 0
    %1072 = vmatpush1.bf16.msra.mxu0 0
    %1073 = vmatprep.subr.bf16.mxu0 0
    %1074 = vmatpush1.bf16.msra.mxu0 0
    %1075 = vmatprep.mubr.bf16.mxu0 0
    %1076 = vmatmul.mubr.bf16.gmra.mrb[0].mxu0 %v937
    %v1077 = vpop.f32.mrb[0].mxu0
    %v1078 = vadd.f32 %v958, %v1077
    %v1079 = vpop.f32.mrb[0].mxu0
    %v1080 = vadd.f32 %v962, %v1079
    %v1081 = vpop.f32.mrb[0].mxu0
    %v1082 = vadd.f32 %v958, %v1081
    %v1083 = vpop.f32.mrb[0].mxu0
    %v1084 = vadd.f32 %v962, %v1083
    %1085 = vmatprep.mubr.bf16.mxu0 0
    %1086 = vmatmul.mubr.bf16.gmra.mrb[0].mxu0 %v938
    %v1087 = vpop.f32.mrb[0].mxu0
    %v1088 = vadd.f32 %v958, %v1087
    %v1089 = vpop.f32.mrb[0].mxu0
    %v1090 = vadd.f32 %v962, %v1089
    %v1091 = vpop.f32.mrb[0].mxu0
    %v1092 = vadd.f32 %v958, %v1091
    %v1093 = vpop.f32.mrb[0].mxu0
    %v1094 = vadd.f32 %v962, %v1093
    %1095 = vdwg.mxu0
    %v1096 = vmul.f32 %v1078, %v1078
    %v1097 = vmul.f32 %v1080, %v1080
    %v1098 = vmul.f32 %v1082, %v1082
    %v1099 = vmul.f32 %v1084, %v1084
    %v1100 = vmul.f32 %v1088, %v1088
    %v1101 = vmul.f32 %v1090, %v1090
    %v1102 = vmul.f32 %v1092, %v1092
    %v1103 = vmul.f32 %v1094, %v1094
    %v1104 = vmul.f32 %v1078, %v1096
    %v1105 = vmul.f32 %v1080, %v1097
    %v1106 = vmul.f32 %v1082, %v1098
    %v1107 = vmul.f32 %v1084, %v1099
    %v1108 = vmul.f32 %v1088, %v1100
    %v1109 = vmul.f32 %v1090, %v1101
    %v1110 = vmul.f32 %v1092, %v1102
    %v1111 = vmul.f32 %v1094, %v1103
    %v1112 = vmul.f32 %v1104, 0.044715
    %v1113 = vmul.f32 %v1105, 0.044715
    %v1114 = vmul.f32 %v1106, 0.044715
    %v1115 = vmul.f32 %v1107, 0.044715
    %v1116 = vmul.f32 %v1108, 0.044715
    %v1117 = vmul.f32 %v1109, 0.044715
    %v1118 = vmul.f32 %v1110, 0.044715
    %v1119 = vmul.f32 %v1111, 0.044715
    %v1120 = vadd.f32 %v1078, %v1112
    %v1121 = vadd.f32 %v1080, %v1113
    %v1122 = vadd.f32 %v1082, %v1114
    %v1123 = vadd.f32 %v1084, %v1115
    %v1124 = vadd.f32 %v1088, %v1116
    %v1125 = vadd.f32 %v1090, %v1117
    %v1126 = vadd.f32 %v1092, %v1118
    %v1127 = vadd.f32 %v1094, %v1119
    %v1128 = vmul.f32 %v1120, 0.7978846
    %v1129 = vmul.f32 %v1121, 0.7978846
    %v1130 = vmul.f32 %v1122, 0.7978846
    %v1131 = vmul.f32 %v1123, 0.7978846
    %v1132 = vmul.f32 %v1124, 0.7978846
    %v1133 = vmul.f32 %v1125, 0.7978846
    %v1134 = vmul.f32 %v1126, 0.7978846
    %v1135 = vmul.f32 %v1127, 0.7978846
    %v1136 = vtanh.pop %v1128
    %v1137 = vtanh.pop %v1129
    %v1138 = vtanh.pop %v1130
    %v1139 = vtanh.pop %v1131
    %v1140 = vtanh.pop %v1132
    %v1141 = vtanh.pop %v1133
    %v1142 = vtanh.pop %v1134
    %v1143 = vtanh.pop %v1135
    %v1144 = vadd.f32 %v1136, 1.0
    %v1145 = vadd.f32 %v1137, 1.0
    %v1146 = vadd.f32 %v1138, 1.0
    %v1147 = vadd.f32 %v1139, 1.0
    %v1148 = vadd.f32 %v1140, 1.0
    %v1149 = vadd.f32 %v1141, 1.0
    %v1150 = vadd.f32 %v1142, 1.0
    %v1151 = vadd.f32 %v1143, 1.0
    %v1152 = vmul.f32 %v1144, 0.5
    %v1153 = vmul.f32 %v1145, 0.5
    %v1154 = vmul.f32 %v1146, 0.5
    %v1155 = vmul.f32 %v1147, 0.5
    %v1156 = vmul.f32 %v1148, 0.5
    %v1157 = vmul.f32 %v1149, 0.5
    %v1158 = vmul.f32 %v1150, 0.5
    %v1159 = vmul.f32 %v1151, 0.5
    %v1160 = vmul.f32 %v1078, %v1152
    %v1161 = vmul.f32 %v1080, %v1153
    %v1162 = vmul.f32 %v1082, %v1154
    %v1163 = vmul.f32 %v1084, %v1155
    %v1164 = vmul.f32 %v1088, %v1156
    %v1165 = vmul.f32 %v1090, %v1157
    %v1166 = vmul.f32 %v1092, %v1158
    %v1167 = vmul.f32 %v1094, %v1159
    %v1168 = vpack.c.bf16 %v1162, %v1160
    %v1169 = vpack.c.bf16 %v1163, %v1161
    %v1170 = vpack.c.bf16 %v1166, %v1164
    %v1171 = vpack.c.bf16 %v1167, %v1165
    %v1172 = vld [vmem:[#allocation5] sm:$0xf]
    %v1173 = vld [vmem:[#allocation5 + $0x4] sm:$0xf]
    %v1174 = vld [vmem:[#allocation5 + $0x8] sm:$0xf]
    %v1175 = vld [vmem:[#allocation5 + $0xc] sm:$0xf]
    %v1176 = vld [vmem:[#allocation5 + $0x10] sm:$0xf]
    %v1177 = vld [vmem:[#allocation5 + $0x14] sm:$0xf]
    %v1178 = vld [vmem:[#allocation5 + $0x18] sm:$0xf]
    %v1179 = vld [vmem:[#allocation5 + $0x1c] sm:$0xf]
    %v1180 = vld [vmem:[#allocation5 + $0x20] sm:$0xf]
    %v1181 = vld [vmem:[#allocation5 + $0x24] sm:$0xf]
    %v1182 = vld [vmem:[#allocation5 + $0x28] sm:$0xf]
    %v1183 = vld [vmem:[#allocation5 + $0x2c] sm:$0xf]
    %v1184 = vld [vmem:[#allocation5 + $0x30] sm:$0xf]
    %v1185 = vld [vmem:[#allocation5 + $0x34] sm:$0xf]
    %v1186 = vld [vmem:[#allocation5 + $0x38] sm:$0xf]
    %v1187 = vld [vmem:[#allocation5 + $0x3c] sm:$0xf]
    %v1188 = vld [vmem:[#allocation5 + $0x40] sm:$0xf]
    %v1189 = vld [vmem:[#allocation5 + $0x44] sm:$0xf]
    %v1190 = vld [vmem:[#allocation5 + $0x48] sm:$0xf]
    %v1191 = vld [vmem:[#allocation5 + $0x4c] sm:$0xf]
    %v1192 = vld [vmem:[#allocation5 + $0x50] sm:$0xf]
    %v1193 = vld [vmem:[#allocation5 + $0x54] sm:$0xf]
    %v1194 = vld [vmem:[#allocation5 + $0x58] sm:$0xf]
    %v1195 = vld [vmem:[#allocation5 + $0x5c] sm:$0xf]
    %v1196 = vld [vmem:[#allocation5 + $0x60] sm:$0xf]
    %v1197 = vld [vmem:[#allocation5 + $0x64] sm:$0xf]
    %v1198 = vld [vmem:[#allocation5 + $0x68] sm:$0xf]
    %v1199 = vld [vmem:[#allocation5 + $0x6c] sm:$0xf]
    %v1200 = vld [vmem:[#allocation5 + $0x70] sm:$0xf]
    %v1201 = vld [vmem:[#allocation5 + $0x74] sm:$0xf]
    %v1202 = vld [vmem:[#allocation5 + $0x78] sm:$0xf]
    %v1203 = vld [vmem:[#allocation5 + $0x7c] sm:$0xf]
    %v1204 = vlaneseq
    %v1205 = vshrl.u32 %v1204, 7
    %v1206 = vsub.s32 5, %v1205
    %v1207 = vrot.slane %v154, %v1206
    %v1240 = vunpack.c.l.b16 %v1172
    %v1241 = vunpack.c.l.b16 %v1173
    %v1242 = vunpack.c.l.b16 %v1174
    %v1243 = vunpack.c.l.b16 %v1175
    %v1244 = vunpack.c.l.b16 %v1176
    %v1245 = vunpack.c.l.b16 %v1177
    %v1246 = vunpack.c.l.b16 %v1178
    %v1247 = vunpack.c.l.b16 %v1179
    %v1248 = vunpack.c.l.b16 %v1180
    %v1249 = vunpack.c.l.b16 %v1181
    %v1250 = vunpack.c.l.b16 %v1182
    %v1251 = vunpack.c.l.b16 %v1183
    %v1252 = vunpack.c.l.b16 %v1184
    %v1253 = vunpack.c.l.b16 %v1185
    %v1254 = vunpack.c.l.b16 %v1186
    %v1255 = vunpack.c.l.b16 %v1187
    %v1256 = vunpack.c.l.b16 %v1188
    %v1257 = vunpack.c.l.b16 %v1189
    %v1258 = vunpack.c.l.b16 %v1190
    %v1259 = vunpack.c.l.b16 %v1191
    %v1260 = vunpack.c.l.b16 %v1192
    %v1261 = vunpack.c.l.b16 %v1193
    %v1262 = vunpack.c.l.b16 %v1194
    %v1263 = vunpack.c.l.b16 %v1195
    %v1264 = vunpack.c.l.b16 %v1196
    %v1265 = vunpack.c.l.b16 %v1197
    %v1266 = vunpack.c.l.b16 %v1198
    %v1267 = vunpack.c.l.b16 %v1199
    %v1268 = vunpack.c.l.b16 %v1200
    %v1269 = vunpack.c.l.b16 %v1201
    %v1270 = vunpack.c.l.b16 %v1202
    %v1271 = vunpack.c.l.b16 %v1203
    %v1272 = vpack.c.b16 %v1241, %v1240
    %v1273 = vpack.c.b16 %v1243, %v1242
    %v1274 = vpack.c.b16 %v1245, %v1244
    %v1275 = vpack.c.b16 %v1247, %v1246
    %v1276 = vpack.c.b16 %v1249, %v1248
    %v1277 = vpack.c.b16 %v1251, %v1250
    %v1278 = vpack.c.b16 %v1253, %v1252
    %v1279 = vpack.c.b16 %v1255, %v1254
    %v1280 = vpack.c.b16 %v1257, %v1256
    %v1281 = vpack.c.b16 %v1259, %v1258
    %v1282 = vpack.c.b16 %v1261, %v1260
    %v1283 = vpack.c.b16 %v1263, %v1262
    %v1284 = vpack.c.b16 %v1265, %v1264
    %v1285 = vpack.c.b16 %v1267, %v1266
    %v1286 = vpack.c.b16 %v1269, %v1268
    %v1287 = vpack.c.b16 %v1271, %v1270
    %1304 = vmatprep.subr.bf16.mxu0 0
    %1305 = vmatpush1.bf16.msra.mxu0 %v1272
    %1306 = vmatprep.subr.bf16.mxu0 0
    %1307 = vmatpush1.bf16.msra.mxu0 %v1273
    %1308 = vmatprep.subr.bf16.mxu0 0
    %1309 = vmatpush1.bf16.msra.mxu0 %v1274
    %1310 = vmatprep.subr.bf16.mxu0 0
    %1311 = vmatpush1.bf16.msra.mxu0 %v1275
    %1312 = vmatprep.subr.bf16.mxu0 0
    %1313 = vmatpush1.bf16.msra.mxu0 %v1276
    %1314 = vmatprep.subr.bf16.mxu0 0
    %1315 = vmatpush1.bf16.msra.mxu0 %v1277
    %1316 = vmatprep.subr.bf16.mxu0 0
    %1317 = vmatpush1.bf16.msra.mxu0 %v1278
    %1318 = vmatprep.subr.bf16.mxu0 0
    %1319 = vmatpush1.bf16.msra.mxu0 %v1279
    %1320 = vmatprep.subr.bf16.mxu0 0
    %1321 = vmatpush1.bf16.msra.mxu0 %v1280
    %1322 = vmatprep.subr.bf16.mxu0 0
    %1323 = vmatpush1.bf16.msra.mxu0 %v1281
    %1324 = vmatprep.subr.bf16.mxu0 0
    %1325 = vmatpush1.bf16.msra.mxu0 %v1282
    %1326 = vmatprep.subr.bf16.mxu0 0
    %1327 = vmatpush1.bf16.msra.mxu0 %v1283
    %1328 = vmatprep.subr.bf16.mxu0 0
    %1329 = vmatpush1.bf16.msra.mxu0 %v1284
    %1330 = vmatprep.subr.bf16.mxu0 0
    %1331 = vmatpush1.bf16.msra.mxu0 %v1285
    %1332 = vmatprep.subr.bf16.mxu0 0
    %1333 = vmatpush1.bf16.msra.mxu0 %v1286
    %1334 = vmatprep.subr.bf16.mxu0 0
    %1335 = vmatpush1.bf16.msra.mxu0 %v1287
    %1336 = vmatprep.mubr.bf16.mxu0 %v1169
    %1337 = vmatmul.mubr.bf16.gmra.mrb[0].mxu0 %v1168
    %v1338 = vpop.f32.mrb[0].mxu0
    %v1339 = vadd.f32 %v1207, %v1338
    %v1340 = vpop.f32.mrb[0].mxu0
    %v1341 = vpop.f32.mrb[0].mxu0
    %v1342 = vadd.f32 %v1207, %v1341
    %v1343 = vpop.f32.mrb[0].mxu0
    %1344 = vmatprep.mubr.bf16.mxu0 %v1171
    %1345 = vmatmul.mubr.bf16.gmra.mrb[0].mxu0 %v1170
    %v1346 = vpop.f32.mrb[0].mxu0
    %v1347 = vadd.f32 %v1207, %v1346
    %v1348 = vpop.f32.mrb[0].mxu0
    %v1349 = vpop.f32.mrb[0].mxu0
    %v1350 = vadd.f32 %v1207, %v1349
    %v1351 = vpop.f32.mrb[0].mxu0
    %1352 = vdwg.mxu0
    %v1353 = vadd.f32 %v1339, %v933
    %v1354 = vadd.f32 %v1342, %v934
    %v1355 = vadd.f32 %v1347, %v935
    %v1356 = vadd.f32 %v1350, %v936
    %1357 = vadd.xlane.f32.xlu0 %v1353
    %v1358 = vpop.xlane.xlu0 %1357
    %1359 = vadd.xlane.f32.xlu0 %v1354
    %v1360 = vpop.xlane.xlu0 %1359
    %1361 = vadd.xlane.f32.xlu0 %v1355
    %v1362 = vpop.xlane.xlu0 %1361
    %1363 = vadd.xlane.f32.xlu0 %v1356
    %v1364 = vpop.xlane.xlu0 %1363
    %v1365 = vmul.f32 %v1358, %v89
    %v1366 = vmul.f32 %v1360, %v89
    %v1367 = vmul.f32 %v1362, %v89
    %v1368 = vmul.f32 %v1364, %v89
    %v1369 = vsub.f32 %v1353, %v1365
    %v1370 = vsub.f32 %v1354, %v1366
    %v1371 = vsub.f32 %v1355, %v1367
    %v1372 = vsub.f32 %v1356, %v1368
    %v1373 = vmul.f32 %v1369, %v1369
    %v1374 = vmul.f32 %v1370, %v1370
    %v1375 = vmul.f32 %v1371, %v1371
    %v1376 = vmul.f32 %v1372, %v1372
    %1377 = vadd.xlane.f32.xlu0 %v1373
    %v1378 = vpop.xlane.xlu0 %1377
    %1379 = vadd.xlane.f32.xlu0 %v1374
    %v1380 = vpop.xlane.xlu0 %1379
    %1381 = vadd.xlane.f32.xlu0 %v1375
    %v1382 = vpop.xlane.xlu0 %1381
    %1383 = vadd.xlane.f32.xlu0 %v1376
    %v1384 = vpop.xlane.xlu0 %1383
    %v1385 = vmul.f32 %v1378, %v89
    %v1386 = vmul.f32 %v1380, %v89
    %v1387 = vmul.f32 %v1382, %v89
    %v1388 = vmul.f32 %v1384, %v89
    %v1389 = vadd.f32 %v1385, 1e-12
    %v1390 = vadd.f32 %v1386, 1e-12
    %v1391 = vadd.f32 %v1387, 1e-12
    %v1392 = vadd.f32 %v1388, 1e-12
    %v1393 = vrsqrt.pop %v1389
    %v1394 = vrsqrt.pop %v1390
    %v1395 = vrsqrt.pop %v1391
    %v1396 = vrsqrt.pop %v1392
    %v1397 = vmul.f32 %v1369, %v1393
    %v1398 = vmul.f32 %v1370, %v1394
    %v1399 = vmul.f32 %v1371, %v1395
    %v1400 = vmul.f32 %v1372, %v1396
    %v1401 = vlaneseq
    %v1402 = vshrl.u32 %v1401, 7
    %v1403 = vsub.s32 6, %v1402
    %v1404 = vrot.slane %v154, %v1403
    %v1405 = vmul.f32 %v1397, %v1404
    %v1406 = vmul.f32 %v1398, %v1404
    %v1407 = vmul.f32 %v1399, %v1404
    %v1408 = vmul.f32 %v1400, %v1404
    %v1409 = vlaneseq
    %v1410 = vshrl.u32 %v1409, 7
    %v1411 = vsub.s32 7, %v1410
    %v1412 = vrot.slane %v154, %v1411
    %v1413 = vadd.f32 %v1405, %v1412
    %v1414 = vadd.f32 %v1406, %v1412
    %v1415 = vadd.f32 %v1407, %v1412
    %v1416 = vadd.f32 %v1408, %v1412
    %s1417 = scalar_lea.vmem %s8, 24
    %v1418 = vld [vmem:[%s1417] sm:$0xff]
    %v1419 = vld [vmem:[%s1417 + $0x8] sm:$0xff]
    %v1420 = vld [vmem:[%s1417 + $0x10] sm:$0xff]
    %v1421 = vpack.c.bf16 %v1414, %v1413
    %v1422 = vpack.c.bf16 %v1416, %v1415
    %s1423 = scalar_lea.vmem %s4, 192
    %v1424 = vld [vmem:[%s1423] sm:$0xff]
    %v1425 = vld [vmem:[%s1423 + $0x8] sm:$0xf]
    %v1426 = vld [vmem:[%s1423 + $0xc] sm:$0xff]
    %v1427 = vld [vmem:[%s1423 + $0x14] sm:$0xf]
    %v1428 = vld [vmem:[%s1423 + $0x18] sm:$0xff]
    %v1429 = vld [vmem:[%s1423 + $0x20] sm:$0xf]
    %v1430 = vld [vmem:[%s1423 + $0x24] sm:$0xff]
    %v1431 = vld [vmem:[%s1423 + $0x2c] sm:$0xf]
    %v1432 = vld [vmem:[%s1423 + $0x30] sm:$0xff]
    %v1433 = vld [vmem:[%s1423 + $0x38] sm:$0xf]
    %v1434 = vld [vmem:[%s1423 + $0x3c] sm:$0xff]
    %v1435 = vld [vmem:[%s1423 + $0x44] sm:$0xf]
    %v1436 = vld [vmem:[%s1423 + $0x48] sm:$0xff]
    %v1437 = vld [vmem:[%s1423 + $0x50] sm:$0xf]
    %v1438 = vld [vmem:[%s1423 + $0x54] sm:$0xff]
    %v1439 = vld [vmem:[%s1423 + $0x5c] sm:$0xf]
    %v1440 = vld [vmem:[%s1423 + $0x60] sm:$0xff]
    %v1441 = vld [vmem:[%s1423 + $0x68] sm:$0xf]
    %v1442 = vld [vmem:[%s1423 + $0x6c] sm:$0xff]
    %v1443 = vld [vmem:[%s1423 + $0x74] sm:$0xf]
    %v1444 = vld [vmem:[%s1423 + $0x78] sm:$0xff]
    %v1445 = vld [vmem:[%s1423 + $0x80] sm:$0xf]
    %v1446 = vld [vmem:[%s1423 + $0x84] sm:$0xff]
    %v1447 = vld [vmem:[%s1423 + $0x8c] sm:$0xf]
    %v1448 = vld [vmem:[%s1423 + $0x90] sm:$0xff]
    %v1449 = vld [vmem:[%s1423 + $0x98] sm:$0xf]
    %v1450 = vld [vmem:[%s1423 + $0x9c] sm:$0xff]
    %v1451 = vld [vmem:[%s1423 + $0xa4] sm:$0xf]
    %v1452 = vld [vmem:[%s1423 + $0xa8] sm:$0xff]
    %v1453 = vld [vmem:[%s1423 + $0xb0] sm:$0xf]
    %v1454 = vld [vmem:[%s1423 + $0xb4] sm:$0xff]
    %v1455 = vld [vmem:[%s1423 + $0xbc] sm:$0xf]
    %v1456 = vlaneseq
    %v1457 = vshrl.u32 %v1456, 7
    %v1458 = vsub.s32 0, %v1457
    %v1459 = vrot.slane %v1418, %v1458
    %v1460 = vlaneseq
    %v1461 = vshrl.u32 %v1460, 7
    %v1462 = vsub.s32 0, %v1461
    %v1463 = vrot.slane %v1419, %v1462
    %v1464 = vlaneseq
    %v1465 = vshrl.u32 %v1464, 7
    %v1466 = vsub.s32 0, %v1465
    %v1467 = vrot.slane %v1420, %v1466
    %v1500 = vunpack.c.l.b16 %v1424
    %v1501 = vunpack.c.h.b16 %v1424
    %v1502 = vunpack.c.l.b16 %v1425
    %v1503 = vunpack.c.l.b16 %v1426
    %v1504 = vunpack.c.h.b16 %v1426
    %v1505 = vunpack.c.l.b16 %v1427
    %v1506 = vunpack.c.l.b16 %v1428
    %v1507 = vunpack.c.h.b16 %v1428
    %v1508 = vunpack.c.l.b16 %v1429
    %v1509 = vunpack.c.l.b16 %v1430
    %v1510 = vunpack.c.h.b16 %v1430
    %v1511 = vunpack.c.l.b16 %v1431
    %v1512 = vunpack.c.l.b16 %v1432
    %v1513 = vunpack.c.h.b16 %v1432
    %v1514 = vunpack.c.l.b16 %v1433
    %v1515 = vunpack.c.l.b16 %v1434
    %v1516 = vunpack.c.h.b16 %v1434
    %v1517 = vunpack.c.l.b16 %v1435
    %v1518 = vunpack.c.l.b16 %v1436
    %v1519 = vunpack.c.h.b16 %v1436
    %v1520 = vunpack.c.l.b16 %v1437
    %v1521 = vunpack.c.l.b16 %v1438
    %v1522 = vunpack.c.h.b16 %v1438
    %v1523 = vunpack.c.l.b16 %v1439
    %v1524 = vunpack.c.l.b16 %v1440
    %v1525 = vunpack.c.h.b16 %v1440
    %v1526 = vunpack.c.l.b16 %v1441
    %v1527 = vunpack.c.l.b16 %v1442
    %v1528 = vunpack.c.h.b16 %v1442
    %v1529 = vunpack.c.l.b16 %v1443
    %v1530 = vunpack.c.l.b16 %v1444
    %v1531 = vunpack.c.h.b16 %v1444
    %v1532 = vunpack.c.l.b16 %v1445
    %v1533 = vunpack.c.l.b16 %v1446
    %v1534 = vunpack.c.h.b16 %v1446
    %v1535 = vunpack.c.l.b16 %v1447
    %v1536 = vunpack.c.l.b16 %v1448
    %v1537 = vunpack.c.h.b16 %v1448
    %v1538 = vunpack.c.l.b16 %v1449
    %v1539 = vunpack.c.l.b16 %v1450
    %v1540 = vunpack.c.h.b16 %v1450
    %v1541 = vunpack.c.l.b16 %v1451
    %v1542 = vunpack.c.l.b16 %v1452
    %v1543 = vunpack.c.h.b16 %v1452
    %v1544 = vunpack.c.l.b16 %v1453
    %v1545 = vunpack.c.l.b16 %v1454
    %v1546 = vunpack.c.h.b16 %v1454
    %v1547 = vunpack.c.l.b16 %v1455
    %v1548 = vpack.c.b16 %v1503, %v1500
    %v1549 = vpack.c.b16 %v1504, %v1501
    %v1550 = vpack.c.b16 %v1505, %v1502
    %v1551 = vpack.c.b16 %v1509, %v1506
    %v1552 = vpack.c.b16 %v1510, %v1507
    %v1553 = vpack.c.b16 %v1511, %v1508
    %v1554 = vpack.c.b16 %v1515, %v1512
    %v1555 = vpack.c.b16 %v1516, %v1513
    %v1556 = vpack.c.b16 %v1517, %v1514
    %v1557 = vpack.c.b16 %v1521, %v1518
    %v1558 = vpack.c.b16 %v1522, %v1519
    %v1559 = vpack.c.b16 %v1523, %v1520
    %v1560 = vpack.c.b16 %v1527, %v1524
    %v1561 = vpack.c.b16 %v1528, %v1525
    %v1562 = vpack.c.b16 %v1529, %v1526
    %v1563 = vpack.c.b16 %v1533, %v1530
    %v1564 = vpack.c.b16 %v1534, %v1531
    %v1565 = vpack.c.b16 %v1535, %v1532
    %v1566 = vpack.c.b16 %v1539, %v1536
    %v1567 = vpack.c.b16 %v1540, %v1537
    %v1568 = vpack.c.b16 %v1541, %v1538
    %v1569 = vpack.c.b16 %v1545, %v1542
    %v1570 = vpack.c.b16 %v1546, %v1543
    %v1571 = vpack.c.b16 %v1547, %v1544
    %1596 = vmatprep.subr.bf16.mxu0 %v1549
    %1597 = vmatpush1.bf16.msra.mxu0 %v1548
    %1598 = vmatprep.subr.bf16.mxu0 %v1552
    %1599 = vmatpush1.bf16.msra.mxu0 %v1551
    %1600 = vmatprep.subr.bf16.mxu0 %v1555
    %1601 = vmatpush1.bf16.msra.mxu0 %v1554
    %1602 = vmatprep.subr.bf16.mxu0 %v1558
    %1603 = vmatpush1.bf16.msra.mxu0 %v1557
    %1604 = vmatprep.subr.bf16.mxu0 %v1561
    %1605 = vmatpush1.bf16.msra.mxu0 %v1560
    %1606 = vmatprep.subr.bf16.mxu0 %v1564
    %1607 = vmatpush1.bf16.msra.mxu0 %v1563
    %1608 = vmatprep.subr.bf16.mxu0 %v1567
    %1609 = vmatpush1.bf16.msra.mxu0 %v1566
    %1610 = vmatprep.subr.bf16.mxu0 %v1570
    %1611 = vmatpush1.bf16.msra.mxu0 %v1569
    %1612 = vmatprep.subr.bf16.mxu0 0
    %1613 = vmatpush1.bf16.msra.mxu0 0
    %1614 = vmatprep.subr.bf16.mxu0 0
    %1615 = vmatpush1.bf16.msra.mxu0 0
    %1616 = vmatprep.subr.bf16.mxu0 0
    %1617 = vmatpush1.bf16.msra.mxu0 0
    %1618 = vmatprep.subr.bf16.mxu0 0
    %1619 = vmatpush1.bf16.msra.mxu0 0
    %1620 = vmatprep.subr.bf16.mxu0 0
    %1621 = vmatpush1.bf16.msra.mxu0 0
    %1622 = vmatprep.subr.bf16.mxu0 0
    %1623 = vmatpush1.bf16.msra.mxu0 0
    %1624 = vmatprep.subr.bf16.mxu0 0
    %1625 = vmatpush1.bf16.msra.mxu0 0
    %1626 = vmatprep.subr.bf16.mxu0 0
    %1627 = vmatpush1.bf16.msra.mxu0 0
    %1628 = vmatprep.mubr.bf16.mxu0 0
    %1629 = vmatmul.mubr.bf16.gmra.mrb[0].mxu0 %v1421
    %v1630 = vpop.f32.mrb[0].mxu0
    %v1631 = vadd.f32 %v1459, %v1630
    %v1632 = vpop.f32.mrb[0].mxu0
    %v1633 = vadd.f32 %v1463, %v1632
    %v1634 = vpop.f32.mrb[0].mxu0
    %v1635 = vadd.f32 %v1459, %v1634
    %v1636 = vpop.f32.mrb[0].mxu0
    %v1637 = vadd.f32 %v1463, %v1636
    %1638 = vmatprep.mubr.bf16.mxu0 0
    %1639 = vmatmul.mubr.bf16.gmra.mrb[0].mxu0 %v1422
    %v1640 = vpop.f32.mrb[0].mxu0
    %v1641 = vadd.f32 %v1459, %v1640
    %v1642 = vpop.f32.mrb[0].mxu0
    %v1643 = vadd.f32 %v1463, %v1642
    %v1644 = vpop.f32.mrb[0].mxu0
    %v1645 = vadd.f32 %v1459, %v1644
    %v1646 = vpop.f32.mrb[0].mxu0
    %v1647 = vadd.f32 %v1463, %v1646
    %1648 = vdwg.mxu0
    %1649 = vmatprep.subr.bf16.mxu0 0
    %1650 = vmatpush1.bf16.msra.mxu0 %v1550
    %1651 = vmatprep.subr.bf16.mxu0 0
    %1652 = vmatpush1.bf16.msra.mxu0 %v1553
    %1653 = vmatprep.subr.bf16.mxu0 0
    %1654 = vmatpush1.bf16.msra.mxu0 %v1556
    %1655 = vmatprep.subr.bf16.mxu0 0
    %1656 = vmatpush1.bf16.msra.mxu0 %v1559
    %1657 = vmatprep.subr.bf16.mxu0 0
    %1658 = vmatpush1.bf16.msra.mxu0 %v1562
    %1659 = vmatprep.subr.bf16.mxu0 0
    %1660 = vmatpush1.bf16.msra.mxu0 %v1565
    %1661 = vmatprep.subr.bf16.mxu0 0
    %1662 = vmatpush1.bf16.msra.mxu0 %v1568
    %1663 = vmatprep.subr.bf16.mxu0 0
    %1664 = vmatpush1.bf16.msra.mxu0 %v1571
    %1665 = vmatprep.subr.bf16.mxu0 0
    %1666 = vmatpush1.bf16.msra.mxu0 0
    %1667 = vmatprep.subr.bf16.mxu0 0
    %1668 = vmatpush1.bf16.msra.mxu0 0
    %1669 = vmatprep.subr.bf16.mxu0 0
    %1670 = vmatpush1.bf16.msra.mxu0 0
    %1671 = vmatprep.subr.bf16.mxu0 0
    %1672 = vmatpush1.bf16.msra.mxu0 0
    %1673 = vmatprep.subr.bf16.mxu0 0
    %1674 = vmatpush1.bf16.msra.mxu0 0
    %1675 = vmatprep.subr.bf16.mxu0 0
    %1676 = vmatpush1.bf16.msra.mxu0 0
    %1677 = vmatprep.subr.bf16.mxu0 0
    %1678 = vmatpush1.bf16.msra.mxu0 0
    %1679 = vmatprep.subr.bf16.mxu0 0
    %1680 = vmatpush1.bf16.msra.mxu0 0
    %1681 = vmatprep.mubr.bf16.mxu0 0
    %1682 = vmatmul.mubr.bf16.gmra.mrb[0].mxu0 %v1421
    %v1683 = vpop.f32.mrb[0].mxu0
    %v1684 = vadd.f32 %v1467, %v1683
    %v1685 = vpop.f32.mrb[0].mxu0
    %v1686 = vpop.f32.mrb[0].mxu0
    %v1687 = vadd.f32 %v1467, %v1686
    %v1688 = vpop.f32.mrb[0].mxu0
    %1689 = vmatprep.mubr.bf16.mxu0 0
    %1690 = vmatmul.mubr.bf16.gmra.mrb[0].mxu0 %v1422
    %v1691 = vpop.f32.mrb[0].mxu0
    %v1692 = vadd.f32 %v1467, %v1691
    %v1693 = vpop.f32.mrb[0].mxu0
    %v1694 = vpop.f32.mrb[0].mxu0
    %v1695 = vadd.f32 %v1467, %v1694
    %v1696 = vpop.f32.mrb[0].mxu0
    %1697 = vdwg.mxu0
    %v1698 = vpack.c.bf16 %v1635, %v1631
    %v1699 = vpack.c.bf16 %v1637, %v1633
    %v1700 = vpack.c.bf16 %v1687, %v1684
    %v1701 = vpack.c.bf16 %v1645, %v1641
    %v1702 = vpack.c.bf16 %v1647, %v1643
    %v1703 = vpack.c.bf16 %v1695, %v1692
    %1705 = vrot.lane.b32.xlu0 %v1698, 64
    %v1706 = vpop.permute.xlu0 %1705
    %1708 = vrot.lane.b32.xlu0 %v1701, 64
    %v1709 = vpop.permute.xlu0 %1708
    %1711 = vrot.lane.b32.xlu0 %v1699, 64
    %v1712 = vpop.permute.xlu0 %1711
    %1714 = vrot.lane.b32.xlu0 %v1702, 64
    %v1715 = vpop.permute.xlu0 %1714
    %1717 = vrot.lane.b32.xlu0 %v1700, 64
    %v1718 = vpop.permute.xlu0 %1717
    %1721 = vrot.lane.b32.xlu0 %v1703, 64
    %v1722 = vpop.permute.xlu0 %1721
    %v1725 = vsel %vm459, %v1698, 0
    %v1728 = vsel %vm459, %v1706, 0
    %v1731 = vsel %vm459, %v1701, 0
    %v1734 = vsel %vm459, %v1709, 0
    %v1737 = vsel %vm459, %v1699, 0
    %v1740 = vsel %vm459, %v1712, 0
    %v1743 = vsel %vm459, %v1702, 0
    %v1746 = vsel %vm459, %v1715, 0
    %1748 = vmatprep.subr.bf16.mxu0 0
    %1749 = vmatpush1.bf16.xpose.msra.mxu0 %v1737
    %1750 = vmatprep.subr.bf16.mxu0 0
    %1751 = vmatpush1.bf16.xpose.msra.mxu0 %v1740
    %1752 = vmatprep.subr.bf16.mxu0 0
    %1753 = vmatpush1.bf16.xpose.msra.mxu0 %v1743
    %1754 = vmatprep.subr.bf16.mxu0 0
    %1755 = vmatpush1.bf16.xpose.msra.mxu0 %v1746
    %1756 = vmatprep.subr.bf16.mxu0 0
    %1757 = vmatpush1.bf16.xpose.msra.mxu0 0
    %1758 = vmatprep.subr.bf16.mxu0 0
    %1759 = vmatpush1.bf16.xpose.msra.mxu0 0
    %1760 = vmatprep.subr.bf16.mxu0 0
    %1761 = vmatpush1.bf16.xpose.msra.mxu0 0
    %1762 = vmatprep.subr.bf16.mxu0 0
    %1763 = vmatpush1.bf16.xpose.msra.mxu0 0
    %1764 = vmatprep.subr.bf16.mxu0 0
    %1765 = vmatpush1.bf16.xpose.msra.mxu0 0
    %1766 = vmatprep.subr.bf16.mxu0 0
    %1767 = vmatpush1.bf16.xpose.msra.mxu0 0
    %1768 = vmatprep.subr.bf16.mxu0 0
    %1769 = vmatpush1.bf16.xpose.msra.mxu0 0
    %1770 = vmatprep.subr.bf16.mxu0 0
    %1771 = vmatpush1.bf16.xpose.msra.mxu0 0
    %1772 = vmatprep.subr.bf16.mxu0 0
    %1773 = vmatpush1.bf16.xpose.msra.mxu0 0
    %1774 = vmatprep.subr.bf16.mxu0 0
    %1775 = vmatpush1.bf16.xpose.msra.mxu0 0
    %1776 = vmatprep.subr.bf16.mxu0 0
    %1777 = vmatpush1.bf16.xpose.msra.mxu0 0
    %1778 = vmatprep.subr.bf16.mxu0 0
    %1779 = vmatpush1.bf16.xpose.msra.mxu0 0
    %1780 = vmatprep.mubr.bf16.mxu0 0
    %1781 = vmatmul.mubr.bf16.gmra.mrb[0].mxu0 %v1725
    %v1782 = vpop.f32.mrb[0].mxu0
    %v1783 = vadd.f32 0.0, %v1782
    %v1784 = vpop.f32.mrb[0].mxu0
    %v1785 = vpop.f32.mrb[0].mxu0
    %v1786 = vadd.f32 0.0, %v1785
    %v1787 = vpop.f32.mrb[0].mxu0
    %1788 = vmatprep.mubr.bf16.mxu0 0
    %1789 = vmatmul.mubr.bf16.gmra.mrb[0].mxu0 %v1728
    %v1790 = vpop.f32.mrb[0].mxu0
    %v1791 = vadd.f32 0.0, %v1790
    %v1792 = vpop.f32.mrb[0].mxu0
    %v1793 = vpop.f32.mrb[0].mxu0
    %v1794 = vadd.f32 0.0, %v1793
    %v1795 = vpop.f32.mrb[0].mxu0
    %1796 = vmatprep.mubr.bf16.mxu0 0
    %1797 = vmatmul.mubr.bf16.gmra.mrb[0].mxu0 %v1731
    %v1798 = vpop.f32.mrb[0].mxu0
    %v1799 = vadd.f32 0.0, %v1798
    %v1800 = vpop.f32.mrb[0].mxu0
    %v1801 = vpop.f32.mrb[0].mxu0
    %v1802 = vadd.f32 0.0, %v1801
    %v1803 = vpop.f32.mrb[0].mxu0
    %1804 = vmatprep.mubr.bf16.mxu0 0
    %1805 = vmatmul.mubr.bf16.gmra.mrb[0].mxu0 %v1734
    %v1806 = vpop.f32.mrb[0].mxu0
    %v1807 = vadd.f32 0.0, %v1806
    %v1808 = vpop.f32.mrb[0].mxu0
    %v1809 = vpop.f32.mrb[0].mxu0
    %v1810 = vadd.f32 0.0, %v1809
    %v1811 = vpop.f32.mrb[0].mxu0
    %1812 = vdwg.mxu0
    %v1813 = vmul.f32 %v1783, 0.125
    %v1814 = vmul.f32 %v1786, 0.125
    %v1815 = vmul.f32 %v1791, 0.125
    %v1816 = vmul.f32 %v1794, 0.125
    %v1817 = vmul.f32 %v1799, 0.125
    %v1818 = vmul.f32 %v1802, 0.125
    %v1819 = vmul.f32 %v1807, 0.125
    %v1820 = vmul.f32 %v1810, 0.125
    %v1821 = vadd.f32 %v1813, %v146
    %v1822 = vadd.f32 %v1814, %v147
    %v1823 = vadd.f32 %v1815, %v148
    %v1824 = vadd.f32 %v1816, %v149
    %v1825 = vadd.f32 %v1817, %v150
    %v1826 = vadd.f32 %v1818, %v151
    %v1827 = vadd.f32 %v1819, %v152
    %v1828 = vadd.f32 %v1820, %v153
    %v1829 = vsel %vm459, %v1821, -inf
    %1830 = vmax.xlane.f32.xlu0 %v1829
    %v1831 = vpop.xlane.xlu0 %1830
    %v1832 = vsel %vm459, %v1822, -inf
    %1833 = vmax.xlane.f32.xlu0 %v1832
    %v1834 = vpop.xlane.xlu0 %1833
    %v1835 = vsel %vm459, %v1823, -inf
    %1836 = vmax.xlane.f32.xlu0 %v1835
    %v1837 = vpop.xlane.xlu0 %1836
    %v1838 = vsel %vm459, %v1824, -inf
    %1839 = vmax.xlane.f32.xlu0 %v1838
    %v1840 = vpop.xlane.xlu0 %1839
    %v1841 = vsel %vm459, %v1825, -inf
    %1842 = vmax.xlane.f32.xlu0 %v1841
    %v1843 = vpop.xlane.xlu0 %1842
    %v1844 = vsel %vm459, %v1826, -inf
    %1845 = vmax.xlane.f32.xlu0 %v1844
    %v1846 = vpop.xlane.xlu0 %1845
    %v1847 = vsel %vm459, %v1827, -inf
    %1848 = vmax.xlane.f32.xlu0 %v1847
    %v1849 = vpop.xlane.xlu0 %1848
    %v1850 = vsel %vm459, %v1828, -inf
    %1851 = vmax.xlane.f32.xlu0 %v1850
    %v1852 = vpop.xlane.xlu0 %1851
    %v1853 = vsub.f32 %v1821, %v1831
    %v1854 = vsub.f32 %v1822, %v1834
    %v1855 = vsub.f32 %v1823, %v1837
    %v1856 = vsub.f32 %v1824, %v1840
    %v1857 = vsub.f32 %v1825, %v1843
    %v1858 = vsub.f32 %v1826, %v1846
    %v1859 = vsub.f32 %v1827, %v1849
    %v1860 = vsub.f32 %v1828, %v1852
    %v1861 = vmul.f32 %v1853, 1.442695
    %v1862 = vpow.pop %v1861
    %v1863 = vmul.f32 %v1854, 1.442695
    %v1864 = vpow.pop %v1863
    %v1865 = vmul.f32 %v1855, 1.442695
    %v1866 = vpow.pop %v1865
    %v1867 = vmul.f32 %v1856, 1.442695
    %v1868 = vpow.pop %v1867
    %v1869 = vmul.f32 %v1857, 1.442695
    %v1870 = vpow.pop %v1869
    %v1871 = vmul.f32 %v1858, 1.442695
    %v1872 = vpow.pop %v1871
    %v1873 = vmul.f32 %v1859, 1.442695
    %v1874 = vpow.pop %v1873
    %v1875 = vmul.f32 %v1860, 1.442695
    %v1876 = vpow.pop %v1875
    %v1877 = vsel %vm459, %v1862, 0.0
    %1878 = vadd.xlane.f32.xlu0 %v1877
    %v1879 = vpop.xlane.xlu0 %1878
    %v1880 = vsel %vm459, %v1864, 0.0
    %1881 = vadd.xlane.f32.xlu0 %v1880
    %v1882 = vpop.xlane.xlu0 %1881
    %v1883 = vsel %vm459, %v1866, 0.0
    %1884 = vadd.xlane.f32.xlu0 %v1883
    %v1885 = vpop.xlane.xlu0 %1884
    %v1886 = vsel %vm459, %v1868, 0.0
    %1887 = vadd.xlane.f32.xlu0 %v1886
    %v1888 = vpop.xlane.xlu0 %1887
    %v1889 = vsel %vm459, %v1870, 0.0
    %1890 = vadd.xlane.f32.xlu0 %v1889
    %v1891 = vpop.xlane.xlu0 %1890
    %v1892 = vsel %vm459, %v1872, 0.0
    %1893 = vadd.xlane.f32.xlu0 %v1892
    %v1894 = vpop.xlane.xlu0 %1893
    %v1895 = vsel %vm459, %v1874, 0.0
    %1896 = vadd.xlane.f32.xlu0 %v1895
    %v1897 = vpop.xlane.xlu0 %1896
    %v1898 = vsel %vm459, %v1876, 0.0
    %1899 = vadd.xlane.f32.xlu0 %v1898
    %v1900 = vpop.xlane.xlu0 %1899
    %v1901 = vrcp.pop %v1879
    %v1902 = vrcp.pop %v1882
    %v1903 = vrcp.pop %v1885
    %v1904 = vrcp.pop %v1888
    %v1905 = vrcp.pop %v1891
    %v1906 = vrcp.pop %v1894
    %v1907 = vrcp.pop %v1897
    %v1908 = vrcp.pop %v1900
    %v1909 = vmul.f32 %v1862, %v1901
    %v1910 = vmul.f32 %v1864, %v1902
    %v1911 = vmul.f32 %v1866, %v1903
    %v1912 = vmul.f32 %v1868, %v1904
    %v1913 = vmul.f32 %v1870, %v1905
    %v1914 = vmul.f32 %v1872, %v1906
    %v1915 = vmul.f32 %v1874, %v1907
    %v1916 = vmul.f32 %v1876, %v1908
    %v1917 = vpack.c.bf16 %v1910, %v1909
    %v1918 = vpack.c.bf16 %v1912, %v1911
    %v1919 = vpack.c.bf16 %v1914, %v1913
    %v1920 = vpack.c.bf16 %v1916, %v1915
    %v1922 = vsel %vm459, %v1917, 0
    %v1925 = vsel %vm459, %v1918, 0
    %v1928 = vsel %vm459, %v1919, 0
    %v1931 = vsel %vm459, %v1920, 0
    %1933 = vmatprep.subr.bf16.mxu0 0
    %1934 = vmatpush1.bf16.msra.mxu0 %v1700
    %1935 = vmatprep.subr.bf16.mxu0 0
    %1936 = vmatpush1.bf16.msra.mxu0 %v1718
    %1937 = vmatprep.subr.bf16.mxu0 0
    %1938 = vmatpush1.bf16.msra.mxu0 %v1703
    %1939 = vmatprep.subr.bf16.mxu0 0
    %1940 = vmatpush1.bf16.msra.mxu0 %v1722
    %1941 = vmatprep.subr.bf16.mxu0 0
    %1942 = vmatpush1.bf16.msra.mxu0 0
    %1943 = vmatprep.subr.bf16.mxu0 0
    %1944 = vmatpush1.bf16.msra.mxu0 0
    %1945 = vmatprep.subr.bf16.mxu0 0
    %1946 = vmatpush1.bf16.msra.mxu0 0
    %1947 = vmatprep.subr.bf16.mxu0 0
    %1948 = vmatpush1.bf16.msra.mxu0 0
    %1949 = vmatprep.subr.bf16.mxu0 0
    %1950 = vmatpush1.bf16.msra.mxu0 0
    %1951 = vmatprep.subr.bf16.mxu0 0
    %1952 = vmatpush1.bf16.msra.mxu0 0
    %1953 = vmatprep.subr.bf16.mxu0 0
    %1954 = vmatpush1.bf16.msra.mxu0 0
    %1955 = vmatprep.subr.bf16.mxu0 0
    %1956 = vmatpush1.bf16.msra.mxu0 0
    %1957 = vmatprep.subr.bf16.mxu0 0
    %1958 = vmatpush1.bf16.msra.mxu0 0
    %1959 = vmatprep.subr.bf16.mxu0 0
    %1960 = vmatpush1.bf16.msra.mxu0 0
    %1961 = vmatprep.subr.bf16.mxu0 0
    %1962 = vmatpush1.bf16.msra.mxu0 0
    %1963 = vmatprep.subr.bf16.mxu0 0
    %1964 = vmatpush1.bf16.msra.mxu0 0
    %1965 = vmatprep.mubr.bf16.mxu0 0
    %1966 = vmatmul.mubr.bf16.gmra.mrb[0].mxu0 %v1922
    %v1967 = vpop.f32.mrb[0].mxu0
    %v1968 = vadd.f32 0.0, %v1967
    %v1969 = vpop.f32.mrb[0].mxu0
    %v1970 = vpop.f32.mrb[0].mxu0
    %v1971 = vadd.f32 0.0, %v1970
    %v1972 = vpop.f32.mrb[0].mxu0
    %1973 = vmatprep.mubr.bf16.mxu0 0
    %1974 = vmatmul.mubr.bf16.gmra.mrb[0].mxu0 %v1925
    %v1975 = vpop.f32.mrb[0].mxu0
    %v1976 = vadd.f32 0.0, %v1975
    %v1977 = vpop.f32.mrb[0].mxu0
    %v1978 = vpop.f32.mrb[0].mxu0
    %v1979 = vadd.f32 0.0, %v1978
    %v1980 = vpop.f32.mrb[0].mxu0
    %1981 = vmatprep.mubr.bf16.mxu0 0
    %1982 = vmatmul.mubr.bf16.gmra.mrb[0].mxu0 %v1928
    %v1983 = vpop.f32.mrb[0].mxu0
    %v1984 = vadd.f32 0.0, %v1983
    %v1985 = vpop.f32.mrb[0].mxu0
    %v1986 = vpop.f32.mrb[0].mxu0
    %v1987 = vadd.f32 0.0, %v1986
    %v1988 = vpop.f32.mrb[0].mxu0
    %1989 = vmatprep.mubr.bf16.mxu0 0
    %1990 = vmatmul.mubr.bf16.gmra.mrb[0].mxu0 %v1931
    %v1991 = vpop.f32.mrb[0].mxu0
    %v1992 = vadd.f32 0.0, %v1991
    %v1993 = vpop.f32.mrb[0].mxu0
    %v1994 = vpop.f32.mrb[0].mxu0
    %v1995 = vadd.f32 0.0, %v1994
    %v1996 = vpop.f32.mrb[0].mxu0
    %1997 = vdwg.mxu0
    %2000 = vrot.lane.b32.xlu0 %v1976, 64
    %v2001 = vpop.permute.xlu0 %2000
    %2002 = vrot.lane.b32.xlu0 %v1979, 64
    %v2003 = vpop.permute.xlu0 %2002
    %v2006 = vsel %vm459, %v1968, %v2001
    %v2007 = vsel %vm459, %v1971, %v2003
    %2010 = vrot.lane.b32.xlu0 %v1992, 64
    %v2011 = vpop.permute.xlu0 %2010
    %2012 = vrot.lane.b32.xlu0 %v1995, 64
    %v2013 = vpop.permute.xlu0 %2012
    %v2016 = vsel %vm459, %v1984, %v2011
    %v2017 = vsel %vm459, %v1987, %v2013
    %v2018 = vpack.c.bf16 %v2007, %v2006
    %v2019 = vpack.c.bf16 %v2017, %v2016
    %s2020 = scalar_lea.vmem [#allocation3], 64
    %v2021 = vld [vmem:[%s2020] sm:$0xf]
    %v2022 = vld [vmem:[%s2020 + $0x4] sm:$0xf]
    %v2023 = vld [vmem:[%s2020 + $0x8] sm:$0xf]
    %v2024 = vld [vmem:[%s2020 + $0xc] sm:$0xf]
    %v2025 = vld [vmem:[%s2020 + $0x10] sm:$0xf]
    %v2026 = vld [vmem:[%s2020 + $0x14] sm:$0xf]
    %v2027 = vld [vmem:[%s2020 + $0x18] sm:$0xf]
    %v2028 = vld [vmem:[%s2020 + $0x1c] sm:$0xf]
    %v2029 = vld [vmem:[%s2020 + $0x20] sm:$0xf]
    %v2030 = vld [vmem:[%s2020 + $0x24] sm:$0xf]
    %v2031 = vld [vmem:[%s2020 + $0x28] sm:$0xf]
    %v2032 = vld [vmem:[%s2020 + $0x2c] sm:$0xf]
    %v2033 = vld [vmem:[%s2020 + $0x30] sm:$0xf]
    %v2034 = vld [vmem:[%s2020 + $0x34] sm:$0xf]
    %v2035 = vld [vmem:[%s2020 + $0x38] sm:$0xf]
    %v2036 = vld [vmem:[%s2020 + $0x3c] sm:$0xf]
    %v2037 = vlaneseq
    %v2038 = vshrl.u32 %v2037, 7
    %v2039 = vsub.s32 1, %v2038
    %v2040 = vrot.slane %v1418, %v2039
    %v2057 = vunpack.c.l.b16 %v2021
    %v2058 = vunpack.c.l.b16 %v2022
    %v2059 = vunpack.c.l.b16 %v2023
    %v2060 = vunpack.c.l.b16 %v2024
    %v2061 = vunpack.c.l.b16 %v2025
    %v2062 = vunpack.c.l.b16 %v2026
    %v2063 = vunpack.c.l.b16 %v2027
    %v2064 = vunpack.c.l.b16 %v2028
    %v2065 = vunpack.c.l.b16 %v2029
    %v2066 = vunpack.c.l.b16 %v2030
    %v2067 = vunpack.c.l.b16 %v2031
    %v2068 = vunpack.c.l.b16 %v2032
    %v2069 = vunpack.c.l.b16 %v2033
    %v2070 = vunpack.c.l.b16 %v2034
    %v2071 = vunpack.c.l.b16 %v2035
    %v2072 = vunpack.c.l.b16 %v2036
    %v2073 = vpack.c.b16 %v2058, %v2057
    %v2074 = vpack.c.b16 %v2060, %v2059
    %v2075 = vpack.c.b16 %v2062, %v2061
    %v2076 = vpack.c.b16 %v2064, %v2063
    %v2077 = vpack.c.b16 %v2066, %v2065
    %v2078 = vpack.c.b16 %v2068, %v2067
    %v2079 = vpack.c.b16 %v2070, %v2069
    %v2080 = vpack.c.b16 %v2072, %v2071
    %2089 = vmatprep.subr.bf16.mxu0 0
    %2090 = vmatpush1.bf16.msra.mxu0 %v2073
    %2091 = vmatprep.subr.bf16.mxu0 0
    %2092 = vmatpush1.bf16.msra.mxu0 %v2074
    %2093 = vmatprep.subr.bf16.mxu0 0
    %2094 = vmatpush1.bf16.msra.mxu0 %v2075
    %2095 = vmatprep.subr.bf16.mxu0 0
    %2096 = vmatpush1.bf16.msra.mxu0 %v2076
    %2097 = vmatprep.subr.bf16.mxu0 0
    %2098 = vmatpush1.bf16.msra.mxu0 %v2077
    %2099 = vmatprep.subr.bf16.mxu0 0
    %2100 = vmatpush1.bf16.msra.mxu0 %v2078
    %2101 = vmatprep.subr.bf16.mxu0 0
    %2102 = vmatpush1.bf16.msra.mxu0 %v2079
    %2103 = vmatprep.subr.bf16.mxu0 0
    %2104 = vmatpush1.bf16.msra.mxu0 %v2080
    %2105 = vmatprep.subr.bf16.mxu0 0
    %2106 = vmatpush1.bf16.msra.mxu0 0
    %2107 = vmatprep.subr.bf16.mxu0 0
    %2108 = vmatpush1.bf16.msra.mxu0 0
    %2109 = vmatprep.subr.bf16.mxu0 0
    %2110 = vmatpush1.bf16.msra.mxu0 0
    %2111 = vmatprep.subr.bf16.mxu0 0
    %2112 = vmatpush1.bf16.msra.mxu0 0
    %2113 = vmatprep.subr.bf16.mxu0 0
    %2114 = vmatpush1.bf16.msra.mxu0 0
    %2115 = vmatprep.subr.bf16.mxu0 0
    %2116 = vmatpush1.bf16.msra.mxu0 0
    %2117 = vmatprep.subr.bf16.mxu0 0
    %2118 = vmatpush1.bf16.msra.mxu0 0
    %2119 = vmatprep.subr.bf16.mxu0 0
    %2120 = vmatpush1.bf16.msra.mxu0 0
    %2121 = vmatprep.mubr.bf16.mxu0 0
    %2122 = vmatmul.mubr.bf16.gmra.mrb[0].mxu0 %v2018
    %v2123 = vpop.f32.mrb[0].mxu0
    %v2124 = vadd.f32 %v2040, %v2123
    %v2125 = vpop.f32.mrb[0].mxu0
    %v2126 = vpop.f32.mrb[0].mxu0
    %v2127 = vadd.f32 %v2040, %v2126
    %v2128 = vpop.f32.mrb[0].mxu0
    %2129 = vmatprep.mubr.bf16.mxu0 0
    %2130 = vmatmul.mubr.bf16.gmra.mrb[0].mxu0 %v2019
    %v2131 = vpop.f32.mrb[0].mxu0
    %v2132 = vadd.f32 %v2040, %v2131
    %v2133 = vpop.f32.mrb[0].mxu0
    %v2134 = vpop.f32.mrb[0].mxu0
    %v2135 = vadd.f32 %v2040, %v2134
    %v2136 = vpop.f32.mrb[0].mxu0
    %2137 = vdwg.mxu0
    %v2138 = vadd.f32 %v2124, %v1413
    %v2139 = vadd.f32 %v2127, %v1414
    %v2140 = vadd.f32 %v2132, %v1415
    %v2141 = vadd.f32 %v2135, %v1416
    %2142 = vadd.xlane.f32.xlu0 %v2138
    %v2143 = vpop.xlane.xlu0 %2142
    %2144 = vadd.xlane.f32.xlu0 %v2139
    %v2145 = vpop.xlane.xlu0 %2144
    %2146 = vadd.xlane.f32.xlu0 %v2140
    %v2147 = vpop.xlane.xlu0 %2146
    %2148 = vadd.xlane.f32.xlu0 %v2141
    %v2149 = vpop.xlane.xlu0 %2148
    %v2150 = vmul.f32 %v2143, %v89
    %v2151 = vmul.f32 %v2145, %v89
    %v2152 = vmul.f32 %v2147, %v89
    %v2153 = vmul.f32 %v2149, %v89
    %v2154 = vsub.f32 %v2138, %v2150
    %v2155 = vsub.f32 %v2139, %v2151
    %v2156 = vsub.f32 %v2140, %v2152
    %v2157 = vsub.f32 %v2141, %v2153
    %v2158 = vmul.f32 %v2154, %v2154
    %v2159 = vmul.f32 %v2155, %v2155
    %v2160 = vmul.f32 %v2156, %v2156
    %v2161 = vmul.f32 %v2157, %v2157
    %2162 = vadd.xlane.f32.xlu0 %v2158
    %v2163 = vpop.xlane.xlu0 %2162
    %2164 = vadd.xlane.f32.xlu0 %v2159
    %v2165 = vpop.xlane.xlu0 %2164
    %2166 = vadd.xlane.f32.xlu0 %v2160
    %v2167 = vpop.xlane.xlu0 %2166
    %2168 = vadd.xlane.f32.xlu0 %v2161
    %v2169 = vpop.xlane.xlu0 %2168
    %v2170 = vmul.f32 %v2163, %v89
    %v2171 = vmul.f32 %v2165, %v89
    %v2172 = vmul.f32 %v2167, %v89
    %v2173 = vmul.f32 %v2169, %v89
    %v2174 = vadd.f32 %v2170, 1e-12
    %v2175 = vadd.f32 %v2171, 1e-12
    %v2176 = vadd.f32 %v2172, 1e-12
    %v2177 = vadd.f32 %v2173, 1e-12
    %v2178 = vrsqrt.pop %v2174
    %v2179 = vrsqrt.pop %v2175
    %v2180 = vrsqrt.pop %v2176
    %v2181 = vrsqrt.pop %v2177
    %v2182 = vmul.f32 %v2154, %v2178
    %v2183 = vmul.f32 %v2155, %v2179
    %v2184 = vmul.f32 %v2156, %v2180
    %v2185 = vmul.f32 %v2157, %v2181
    %v2186 = vlaneseq
    %v2187 = vshrl.u32 %v2186, 7
    %v2188 = vsub.s32 2, %v2187
    %v2189 = vrot.slane %v1418, %v2188
    %v2190 = vmul.f32 %v2182, %v2189
    %v2191 = vmul.f32 %v2183, %v2189
    %v2192 = vmul.f32 %v2184, %v2189
    %v2193 = vmul.f32 %v2185, %v2189
    %v2194 = vlaneseq
    %v2195 = vshrl.u32 %v2194, 7
    %v2196 = vsub.s32 3, %v2195
    %v2197 = vrot.slane %v1418, %v2196
    %v2198 = vadd.f32 %v2190, %v2197
    %v2199 = vadd.f32 %v2191, %v2197
    %v2200 = vadd.f32 %v2192, %v2197
    %v2201 = vadd.f32 %v2193, %v2197
    %v2202 = vpack.c.bf16 %v2199, %v2198
    %v2203 = vpack.c.bf16 %v2201, %v2200
    %s2204 = scalar_lea.vmem %s6, 128
    %v2205 = vld [vmem:[%s2204] sm:$0xff]
    %v2206 = vld [vmem:[%s2204 + $0x8] sm:$0xff]
    %v2207 = vld [vmem:[%s2204 + $0x10] sm:$0xff]
    %v2208 = vld [vmem:[%s2204 + $0x18] sm:$0xff]
    %v2209 = vld [vmem:[%s2204 + $0x20] sm:$0xff]
    %v2210 = vld [vmem:[%s2204 + $0x28] sm:$0xff]
    %v2211 = vld [vmem:[%s2204 + $0x30] sm:$0xff]
    %v2212 = vld [vmem:[%s2204 + $0x38] sm:$0xff]
    %v2213 = vld [vmem:[%s2204 + $0x40] sm:$0xff]
    %v2214 = vld [vmem:[%s2204 + $0x48] sm:$0xff]
    %v2215 = vld [vmem:[%s2204 + $0x50] sm:$0xff]
    %v2216 = vld [vmem:[%s2204 + $0x58] sm:$0xff]
    %v2217 = vld [vmem:[%s2204 + $0x60] sm:$0xff]
    %v2218 = vld [vmem:[%s2204 + $0x68] sm:$0xff]
    %v2219 = vld [vmem:[%s2204 + $0x70] sm:$0xff]
    %v2220 = vld [vmem:[%s2204 + $0x78] sm:$0xff]
    %v2221 = vlaneseq
    %v2222 = vshrl.u32 %v2221, 7
    %v2223 = vsub.s32 4, %v2222
    %v2224 = vrot.slane %v1418, %v2223
    %v2225 = vlaneseq
    %v2226 = vshrl.u32 %v2225, 7
    %v2227 = vsub.s32 4, %v2226
    %v2228 = vrot.slane %v1419, %v2227
    %v2245 = vunpack.c.l.b16 %v2205
    %v2246 = vunpack.c.h.b16 %v2205
    %v2247 = vunpack.c.l.b16 %v2206
    %v2248 = vunpack.c.h.b16 %v2206
    %v2249 = vunpack.c.l.b16 %v2207
    %v2250 = vunpack.c.h.b16 %v2207
    %v2251 = vunpack.c.l.b16 %v2208
    %v2252 = vunpack.c.h.b16 %v2208
    %v2253 = vunpack.c.l.b16 %v2209
    %v2254 = vunpack.c.h.b16 %v2209
    %v2255 = vunpack.c.l.b16 %v2210
    %v2256 = vunpack.c.h.b16 %v2210
    %v2257 = vunpack.c.l.b16 %v2211
    %v2258 = vunpack.c.h.b16 %v2211
    %v2259 = vunpack.c.l.b16 %v2212
    %v2260 = vunpack.c.h.b16 %v2212
    %v2261 = vunpack.c.l.b16 %v2213
    %v2262 = vunpack.c.h.b16 %v2213
    %v2263 = vunpack.c.l.b16 %v2214
    %v2264 = vunpack.c.h.b16 %v2214
    %v2265 = vunpack.c.l.b16 %v2215
    %v2266 = vunpack.c.h.b16 %v2215
    %v2267 = vunpack.c.l.b16 %v2216
    %v2268 = vunpack.c.h.b16 %v2216
    %v2269 = vunpack.c.l.b16 %v2217
    %v2270 = vunpack.c.h.b16 %v2217
    %v2271 = vunpack.c.l.b16 %v2218
    %v2272 = vunpack.c.h.b16 %v2218
    %v2273 = vunpack.c.l.b16 %v2219
    %v2274 = vunpack.c.h.b16 %v2219
    %v2275 = vunpack.c.l.b16 %v2220
    %v2276 = vunpack.c.h.b16 %v2220
    %v2277 = vpack.c.b16 %v2247, %v2245
    %v2278 = vpack.c.b16 %v2248, %v2246
    %v2279 = vpack.c.b16 %v2251, %v2249
    %v2280 = vpack.c.b16 %v2252, %v2250
    %v2281 = vpack.c.b16 %v2255, %v2253
    %v2282 = vpack.c.b16 %v2256, %v2254
    %v2283 = vpack.c.b16 %v2259, %v2257
    %v2284 = vpack.c.b16 %v2260, %v2258
    %v2285 = vpack.c.b16 %v2263, %v2261
    %v2286 = vpack.c.b16 %v2264, %v2262
    %v2287 = vpack.c.b16 %v2267, %v2265
    %v2288 = vpack.c.b16 %v2268, %v2266
    %v2289 = vpack.c.b16 %v2271, %v2269
    %v2290 = vpack.c.b16 %v2272, %v2270
    %v2291 = vpack.c.b16 %v2275, %v2273
    %v2292 = vpack.c.b16 %v2276, %v2274
    %2309 = vmatprep.subr.bf16.mxu0 %v2278
    %2310 = vmatpush1.bf16.msra.mxu0 %v2277
    %2311 = vmatprep.subr.bf16.mxu0 %v2280
    %2312 = vmatpush1.bf16.msra.mxu0 %v2279
    %2313 = vmatprep.subr.bf16.mxu0 %v2282
    %2314 = vmatpush1.bf16.msra.mxu0 %v2281
    %2315 = vmatprep.subr.bf16.mxu0 %v2284
    %2316 = vmatpush1.bf16.msra.mxu0 %v2283
    %2317 = vmatprep.subr.bf16.mxu0 %v2286
    %2318 = vmatpush1.bf16.msra.mxu0 %v2285
    %2319 = vmatprep.subr.bf16.mxu0 %v2288
    %2320 = vmatpush1.bf16.msra.mxu0 %v2287
    %2321 = vmatprep.subr.bf16.mxu0 %v2290
    %2322 = vmatpush1.bf16.msra.mxu0 %v2289
    %2323 = vmatprep.subr.bf16.mxu0 %v2292
    %2324 = vmatpush1.bf16.msra.mxu0 %v2291
    %2325 = vmatprep.subr.bf16.mxu0 0
    %2326 = vmatpush1.bf16.msra.mxu0 0
    %2327 = vmatprep.subr.bf16.mxu0 0
    %2328 = vmatpush1.bf16.msra.mxu0 0
    %2329 = vmatprep.subr.bf16.mxu0 0
    %2330 = vmatpush1.bf16.msra.mxu0 0
    %2331 = vmatprep.subr.bf16.mxu0 0
    %2332 = vmatpush1.bf16.msra.mxu0 0
    %2333 = vmatprep.subr.bf16.mxu0 0
    %2334 = vmatpush1.bf16.msra.mxu0 0
    %2335 = vmatprep.subr.bf16.mxu0 0
    %2336 = vmatpush1.bf16.msra.mxu0 0
    %2337 = vmatprep.subr.bf16.mxu0 0
    %2338 = vmatpush1.bf16.msra.mxu0 0
    %2339 = vmatprep.subr.bf16.mxu0 0
    %2340 = vmatpush1.bf16.msra.mxu0 0
    %2341 = vmatprep.mubr.bf16.mxu0 0
    %2342 = vmatmul.mubr.bf16.gmra.mrb[0].mxu0 %v2202
    %v2343 = vpop.f32.mrb[0].mxu0
    %v2344 = vadd.f32 %v2224, %v2343
    %v2345 = vpop.f32.mrb[0].mxu0
    %v2346 = vadd.f32 %v2228, %v2345
    %v2347 = vpop.f32.mrb[0].mxu0
    %v2348 = vadd.f32 %v2224, %v2347
    %v2349 = vpop.f32.mrb[0].mxu0
    %v2350 = vadd.f32 %v2228, %v2349
    %2351 = vmatprep.mubr.bf16.mxu0 0
    %2352 = vmatmul.mubr.bf16.gmra.mrb[0].mxu0 %v2203
    %v2353 = vpop.f32.mrb[0].mxu0
    %v2354 = vadd.f32 %v2224, %v2353
    %v2355 = vpop.f32.mrb[0].mxu0
    %v2356 = vadd.f32 %v2228, %v2355
    %v2357 = vpop.f32.mrb[0].mxu0
    %v2358 = vadd.f32 %v2224, %v2357
    %v2359 = vpop.f32.mrb[0].mxu0
    %v2360 = vadd.f32 %v2228, %v2359
    %2361 = vdwg.mxu0
    %v2362 = vmul.f32 %v2344, %v2344
    %v2363 = vmul.f32 %v2346, %v2346
    %v2364 = vmul.f32 %v2348, %v2348
    %v2365 = vmul.f32 %v2350, %v2350
    %v2366 = vmul.f32 %v2354, %v2354
    %v2367 = vmul.f32 %v2356, %v2356
    %v2368 = vmul.f32 %v2358, %v2358
    %v2369 = vmul.f32 %v2360, %v2360
    %v2370 = vmul.f32 %v2344, %v2362
    %v2371 = vmul.f32 %v2346, %v2363
    %v2372 = vmul.f32 %v2348, %v2364
    %v2373 = vmul.f32 %v2350, %v2365
    %v2374 = vmul.f32 %v2354, %v2366
    %v2375 = vmul.f32 %v2356, %v2367
    %v2376 = vmul.f32 %v2358, %v2368
    %v2377 = vmul.f32 %v2360, %v2369
    %v2378 = vmul.f32 %v2370, 0.044715
    %v2379 = vmul.f32 %v2371, 0.044715
    %v2380 = vmul.f32 %v2372, 0.044715
    %v2381 = vmul.f32 %v2373, 0.044715
    %v2382 = vmul.f32 %v2374, 0.044715
    %v2383 = vmul.f32 %v2375, 0.044715
    %v2384 = vmul.f32 %v2376, 0.044715
    %v2385 = vmul.f32 %v2377, 0.044715
    %v2386 = vadd.f32 %v2344, %v2378
    %v2387 = vadd.f32 %v2346, %v2379
    %v2388 = vadd.f32 %v2348, %v2380
    %v2389 = vadd.f32 %v2350, %v2381
    %v2390 = vadd.f32 %v2354, %v2382
    %v2391 = vadd.f32 %v2356, %v2383
    %v2392 = vadd.f32 %v2358, %v2384
    %v2393 = vadd.f32 %v2360, %v2385
    %v2394 = vmul.f32 %v2386, 0.7978846
    %v2395 = vmul.f32 %v2387, 0.7978846
    %v2396 = vmul.f32 %v2388, 0.7978846
    %v2397 = vmul.f32 %v2389, 0.7978846
    %v2398 = vmul.f32 %v2390, 0.7978846
    %v2399 = vmul.f32 %v2391, 0.7978846
    %v2400 = vmul.f32 %v2392, 0.7978846
    %v2401 = vmul.f32 %v2393, 0.7978846
    %v2402 = vtanh.pop %v2394
    %v2403 = vtanh.pop %v2395
    %v2404 = vtanh.pop %v2396
    %v2405 = vtanh.pop %v2397
    %v2406 = vtanh.pop %v2398
    %v2407 = vtanh.pop %v2399
    %v2408 = vtanh.pop %v2400
    %v2409 = vtanh.pop %v2401
    %v2410 = vadd.f32 %v2402, 1.0
    %v2411 = vadd.f32 %v2403, 1.0
    %v2412 = vadd.f32 %v2404, 1.0
    %v2413 = vadd.f32 %v2405, 1.0
    %v2414 = vadd.f32 %v2406, 1.0
    %v2415 = vadd.f32 %v2407, 1.0
    %v2416 = vadd.f32 %v2408, 1.0
    %v2417 = vadd.f32 %v2409, 1.0
    %v2418 = vmul.f32 %v2410, 0.5
    %v2419 = vmul.f32 %v2411, 0.5
    %v2420 = vmul.f32 %v2412, 0.5
    %v2421 = vmul.f32 %v2413, 0.5
    %v2422 = vmul.f32 %v2414, 0.5
    %v2423 = vmul.f32 %v2415, 0.5
    %v2424 = vmul.f32 %v2416, 0.5
    %v2425 = vmul.f32 %v2417, 0.5
    %v2426 = vmul.f32 %v2344, %v2418
    %v2427 = vmul.f32 %v2346, %v2419
    %v2428 = vmul.f32 %v2348, %v2420
    %v2429 = vmul.f32 %v2350, %v2421
    %v2430 = vmul.f32 %v2354, %v2422
    %v2431 = vmul.f32 %v2356, %v2423
    %v2432 = vmul.f32 %v2358, %v2424
    %v2433 = vmul.f32 %v2360, %v2425
    %v2434 = vpack.c.bf16 %v2428, %v2426
    %v2435 = vpack.c.bf16 %v2429, %v2427
    %v2436 = vpack.c.bf16 %v2432, %v2430
    %v2437 = vpack.c.bf16 %v2433, %v2431
    %s2438 = scalar_lea.vmem [#allocation5], 128
    %v2439 = vld [vmem:[%s2438] sm:$0xf]
    %v2440 = vld [vmem:[%s2438 + $0x4] sm:$0xf]
    %v2441 = vld [vmem:[%s2438 + $0x8] sm:$0xf]
    %v2442 = vld [vmem:[%s2438 + $0xc] sm:$0xf]
    %v2443 = vld [vmem:[%s2438 + $0x10] sm:$0xf]
    %v2444 = vld [vmem:[%s2438 + $0x14] sm:$0xf]
    %v2445 = vld [vmem:[%s2438 + $0x18] sm:$0xf]
    %v2446 = vld [vmem:[%s2438 + $0x1c] sm:$0xf]
    %v2447 = vld [vmem:[%s2438 + $0x20] sm:$0xf]
    %v2448 = vld [vmem:[%s2438 + $0x24] sm:$0xf]
    %v2449 = vld [vmem:[%s2438 + $0x28] sm:$0xf]
    %v2450 = vld [vmem:[%s2438 + $0x2c] sm:$0xf]
    %v2451 = vld [vmem:[%s2438 + $0x30] sm:$0xf]
    %v2452 = vld [vmem:[%s2438 + $0x34] sm:$0xf]
    %v2453 = vld [vmem:[%s2438 + $0x38] sm:$0xf]
    %v2454 = vld [vmem:[%s2438 + $0x3c] sm:$0xf]
    %v2455 = vld [vmem:[%s2438 + $0x40] sm:$0xf]
    %v2456 = vld [vmem:[%s2438 + $0x44] sm:$0xf]
    %v2457 = vld [vmem:[%s2438 + $0x48] sm:$0xf]
    %v2458 = vld [vmem:[%s2438 + $0x4c] sm:$0xf]
    %v2459 = vld [vmem:[%s2438 + $0x50] sm:$0xf]
    %v2460 = vld [vmem:[%s2438 + $0x54] sm:$0xf]
    %v2461 = vld [vmem:[%s2438 + $0x58] sm:$0xf]
    %v2462 = vld [vmem:[%s2438 + $0x5c] sm:$0xf]
    %v2463 = vld [vmem:[%s2438 + $0x60] sm:$0xf]
    %v2464 = vld [vmem:[%s2438 + $0x64] sm:$0xf]
    %v2465 = vld [vmem:[%s2438 + $0x68] sm:$0xf]
    %v2466 = vld [vmem:[%s2438 + $0x6c] sm:$0xf]
    %v2467 = vld [vmem:[%s2438 + $0x70] sm:$0xf]
    %v2468 = vld [vmem:[%s2438 + $0x74] sm:$0xf]
    %v2469 = vld [vmem:[%s2438 + $0x78] sm:$0xf]
    %v2470 = vld [vmem:[%s2438 + $0x7c] sm:$0xf]
    %v2471 = vlaneseq
    %v2472 = vshrl.u32 %v2471, 7
    %v2473 = vsub.s32 5, %v2472
    %v2474 = vrot.slane %v1418, %v2473
    %v2507 = vunpack.c.l.b16 %v2439
    %v2508 = vunpack.c.l.b16 %v2440
    %v2509 = vunpack.c.l.b16 %v2441
    %v2510 = vunpack.c.l.b16 %v2442
    %v2511 = vunpack.c.l.b16 %v2443
    %v2512 = vunpack.c.l.b16 %v2444
    %v2513 = vunpack.c.l.b16 %v2445
    %v2514 = vunpack.c.l.b16 %v2446
    %v2515 = vunpack.c.l.b16 %v2447
    %v2516 = vunpack.c.l.b16 %v2448
    %v2517 = vunpack.c.l.b16 %v2449
    %v2518 = vunpack.c.l.b16 %v2450
    %v2519 = vunpack.c.l.b16 %v2451
    %v2520 = vunpack.c.l.b16 %v2452
    %v2521 = vunpack.c.l.b16 %v2453
    %v2522 = vunpack.c.l.b16 %v2454
    %v2523 = vunpack.c.l.b16 %v2455
    %v2524 = vunpack.c.l.b16 %v2456
    %v2525 = vunpack.c.l.b16 %v2457
    %v2526 = vunpack.c.l.b16 %v2458
    %v2527 = vunpack.c.l.b16 %v2459
    %v2528 = vunpack.c.l.b16 %v2460
    %v2529 = vunpack.c.l.b16 %v2461
    %v2530 = vunpack.c.l.b16 %v2462
    %v2531 = vunpack.c.l.b16 %v2463
    %v2532 = vunpack.c.l.b16 %v2464
    %v2533 = vunpack.c.l.b16 %v2465
    %v2534 = vunpack.c.l.b16 %v2466
    %v2535 = vunpack.c.l.b16 %v2467
    %v2536 = vunpack.c.l.b16 %v2468
    %v2537 = vunpack.c.l.b16 %v2469
    %v2538 = vunpack.c.l.b16 %v2470
    %v2539 = vpack.c.b16 %v2508, %v2507
    %v2540 = vpack.c.b16 %v2510, %v2509
    %v2541 = vpack.c.b16 %v2512, %v2511
    %v2542 = vpack.c.b16 %v2514, %v2513
    %v2543 = vpack.c.b16 %v2516, %v2515
    %v2544 = vpack.c.b16 %v2518, %v2517
    %v2545 = vpack.c.b16 %v2520, %v2519
    %v2546 = vpack.c.b16 %v2522, %v2521
    %v2547 = vpack.c.b16 %v2524, %v2523
    %v2548 = vpack.c.b16 %v2526, %v2525
    %v2549 = vpack.c.b16 %v2528, %v2527
    %v2550 = vpack.c.b16 %v2530, %v2529
    %v2551 = vpack.c.b16 %v2532, %v2531
    %v2552 = vpack.c.b16 %v2534, %v2533
    %v2553 = vpack.c.b16 %v2536, %v2535
    %v2554 = vpack.c.b16 %v2538, %v2537
    %2571 = vmatprep.subr.bf16.mxu0 0
    %2572 = vmatpush1.bf16.msra.mxu0 %v2539
    %2573 = vmatprep.subr.bf16.mxu0 0
    %2574 = vmatpush1.bf16.msra.mxu0 %v2540
    %2575 = vmatprep.subr.bf16.mxu0 0
    %2576 = vmatpush1.bf16.msra.mxu0 %v2541
    %2577 = vmatprep.subr.bf16.mxu0 0
    %2578 = vmatpush1.bf16.msra.mxu0 %v2542
    %2579 = vmatprep.subr.bf16.mxu0 0
    %2580 = vmatpush1.bf16.msra.mxu0 %v2543
    %2581 = vmatprep.subr.bf16.mxu0 0
    %2582 = vmatpush1.bf16.msra.mxu0 %v2544
    %2583 = vmatprep.subr.bf16.mxu0 0
    %2584 = vmatpush1.bf16.msra.mxu0 %v2545
    %2585 = vmatprep.subr.bf16.mxu0 0
    %2586 = vmatpush1.bf16.msra.mxu0 %v2546
    %2587 = vmatprep.subr.bf16.mxu0 0
    %2588 = vmatpush1.bf16.msra.mxu0 %v2547
    %2589 = vmatprep.subr.bf16.mxu0 0
    %2590 = vmatpush1.bf16.msra.mxu0 %v2548
    %2591 = vmatprep.subr.bf16.mxu0 0
    %2592 = vmatpush1.bf16.msra.mxu0 %v2549
    %2593 = vmatprep.subr.bf16.mxu0 0
    %2594 = vmatpush1.bf16.msra.mxu0 %v2550
    %2595 = vmatprep.subr.bf16.mxu0 0
    %2596 = vmatpush1.bf16.msra.mxu0 %v2551
    %2597 = vmatprep.subr.bf16.mxu0 0
    %2598 = vmatpush1.bf16.msra.mxu0 %v2552
    %2599 = vmatprep.subr.bf16.mxu0 0
    %2600 = vmatpush1.bf16.msra.mxu0 %v2553
    %2601 = vmatprep.subr.bf16.mxu0 0
    %2602 = vmatpush1.bf16.msra.mxu0 %v2554
    %2603 = vmatprep.mubr.bf16.mxu0 %v2435
    %2604 = vmatmul.mubr.bf16.gmra.mrb[0].mxu0 %v2434
    %v2605 = vpop.f32.mrb[0].mxu0
    %v2606 = vadd.f32 %v2474, %v2605
    %v2607 = vpop.f32.mrb[0].mxu0
    %v2608 = vpop.f32.mrb[0].mxu0
    %v2609 = vpop.f32.mrb[0].mxu0
    %2610 = vmatprep.mubr.bf16.mxu0 %v2437
    %2611 = vmatmul.mubr.bf16.gmra.mrb[0].mxu0 %v2436
    %v2612 = vpop.f32.mrb[0].mxu0
    %v2613 = vadd.f32 %v2474, %v2612
    %v2614 = vpop.f32.mrb[0].mxu0
    %v2615 = vpop.f32.mrb[0].mxu0
    %v2616 = vpop.f32.mrb[0].mxu0
    %2617 = vdwg.mxu0
    %v2618 = vadd.f32 %v2606, %v2198
    %v2619 = vadd.f32 %v2613, %v2200
    %2620 = vadd.xlane.f32.xlu0 %v2618
    %v2621 = vpop.xlane.xlu0 %2620
    %2622 = vadd.xlane.f32.xlu0 %v2619
    %v2623 = vpop.xlane.xlu0 %2622
    %v2624 = vmul.f32 %v2621, %v89
    %v2625 = vmul.f32 %v2623, %v89
    %v2626 = vsub.f32 %v2618, %v2624
    %v2627 = vsub.f32 %v2619, %v2625
    %v2628 = vmul.f32 %v2626, %v2626
    %v2629 = vmul.f32 %v2627, %v2627
    %2630 = vadd.xlane.f32.xlu0 %v2628
    %v2631 = vpop.xlane.xlu0 %2630
    %2632 = vadd.xlane.f32.xlu0 %v2629
    %v2633 = vpop.xlane.xlu0 %2632
    %v2634 = vmul.f32 %v2631, %v89
    %v2635 = vmul.f32 %v2633, %v89
    %v2636 = vadd.f32 %v2634, 1e-12
    %v2637 = vadd.f32 %v2635, 1e-12
    %v2638 = vrsqrt.pop %v2636
    %v2639 = vrsqrt.pop %v2637
    %v2640 = vmul.f32 %v2626, %v2638
    %v2641 = vmul.f32 %v2627, %v2639
    %v2642 = vlaneseq
    %v2643 = vshrl.u32 %v2642, 7
    %v2644 = vsub.s32 6, %v2643
    %v2645 = vrot.slane %v1418, %v2644
    %v2646 = vmul.f32 %v2640, %v2645
    %v2647 = vmul.f32 %v2641, %v2645
    %v2648 = vlaneseq
    %v2649 = vshrl.u32 %v2648, 7
    %v2650 = vsub.s32 7, %v2649
    %v2651 = vrot.slane %v1418, %v2650
    %v2652 = vadd.f32 %v2646, %v2651
    %v2653 = vadd.f32 %v2647, %v2651
    %v2655 = vrot.slane %v2653, 7
    %vm2657 = vcmask 1040384
    %v2658 = vsel %vm2657, %v2652, %v2655
    %v2659 = vpack.c.bf16 %v2658, %v2658
    %v2660 = vld [vmem:[%s9] sm:$0xf]
    %v2661 = vld [vmem:[%s9 + $0x4] sm:$0xf]
    %v2662 = vld [vmem:[%s9 + $0x8] sm:$0xf]
    %v2663 = vld [vmem:[%s9 + $0xc] sm:$0xf]
    %v2664 = vld [vmem:[%s9 + $0x10] sm:$0xf]
    %v2665 = vld [vmem:[%s9 + $0x14] sm:$0xf]
    %v2666 = vld [vmem:[%s9 + $0x18] sm:$0xf]
    %v2667 = vld [vmem:[%s9 + $0x1c] sm:$0xf]
    %v2668 = vld [vmem:[%s9 + $0x20] sm:$0xf]
    %v2669 = vld [vmem:[%s9 + $0x24] sm:$0xf]
    %v2670 = vld [vmem:[%s9 + $0x28] sm:$0xf]
    %v2671 = vld [vmem:[%s9 + $0x2c] sm:$0xf]
    %v2672 = vld [vmem:[%s9 + $0x30] sm:$0xf]
    %v2673 = vld [vmem:[%s9 + $0x34] sm:$0xf]
    %v2674 = vld [vmem:[%s9 + $0x38] sm:$0xf]
    %v2675 = vld [vmem:[%s9 + $0x3c] sm:$0xf]
    %v2676 = vld [vmem:[%s10] sm:$0x1]
    %v2678 = vlaneseq
    %v2679 = vshrl.u32 %v2678, 7
    %v2680 = vsub.s32 0, %v2679
    %v2681 = vrot.slane %v2676, %v2680
    %v2699 = vunpack.c.l.b16 %v2660
    %v2700 = vunpack.c.l.b16 %v2661
    %v2701 = vunpack.c.l.b16 %v2662
    %v2702 = vunpack.c.l.b16 %v2663
    %v2703 = vunpack.c.l.b16 %v2664
    %v2704 = vunpack.c.l.b16 %v2665
    %v2705 = vunpack.c.l.b16 %v2666
    %v2706 = vunpack.c.l.b16 %v2667
    %v2707 = vunpack.c.l.b16 %v2668
    %v2708 = vunpack.c.l.b16 %v2669
    %v2709 = vunpack.c.l.b16 %v2670
    %v2710 = vunpack.c.l.b16 %v2671
    %v2711 = vunpack.c.l.b16 %v2672
    %v2712 = vunpack.c.l.b16 %v2673
    %v2713 = vunpack.c.l.b16 %v2674
    %v2714 = vunpack.c.l.b16 %v2675
    %v2715 = vpack.c.b16 %v2700, %v2699
    %v2716 = vpack.c.b16 %v2702, %v2701
    %v2717 = vpack.c.b16 %v2704, %v2703
    %v2718 = vpack.c.b16 %v2706, %v2705
    %v2719 = vpack.c.b16 %v2708, %v2707
    %v2720 = vpack.c.b16 %v2710, %v2709
    %v2721 = vpack.c.b16 %v2712, %v2711
    %v2722 = vpack.c.b16 %v2714, %v2713
    %2731 = vmatprep.subr.bf16.mxu0 0
    %2732 = vmatpush1.bf16.msra.mxu0 %v2715
    %2733 = vmatprep.subr.bf16.mxu0 0
    %2734 = vmatpush1.bf16.msra.mxu0 %v2716
    %2735 = vmatprep.subr.bf16.mxu0 0
    %2736 = vmatpush1.bf16.msra.mxu0 %v2717
    %2737 = vmatprep.subr.bf16.mxu0 0
    %2738 = vmatpush1.bf16.msra.mxu0 %v2718
    %2739 = vmatprep.subr.bf16.mxu0 0
    %2740 = vmatpush1.bf16.msra.mxu0 %v2719
    %2741 = vmatprep.subr.bf16.mxu0 0
    %2742 = vmatpush1.bf16.msra.mxu0 %v2720
    %2743 = vmatprep.subr.bf16.mxu0 0
    %2744 = vmatpush1.bf16.msra.mxu0 %v2721
    %2745 = vmatprep.subr.bf16.mxu0 0
    %2746 = vmatpush1.bf16.msra.mxu0 %v2722
    %2747 = vmatprep.subr.bf16.mxu0 0
    %2748 = vmatpush1.bf16.msra.mxu0 0
    %2749 = vmatprep.subr.bf16.mxu0 0
    %2750 = vmatpush1.bf16.msra.mxu0 0
    %2751 = vmatprep.subr.bf16.mxu0 0
    %2752 = vmatpush1.bf16.msra.mxu0 0
    %2753 = vmatprep.subr.bf16.mxu0 0
    %2754 = vmatpush1.bf16.msra.mxu0 0
    %2755 = vmatprep.subr.bf16.mxu0 0
    %2756 = vmatpush1.bf16.msra.mxu0 0
    %2757 = vmatprep.subr.bf16.mxu0 0
    %2758 = vmatpush1.bf16.msra.mxu0 0
    %2759 = vmatprep.subr.bf16.mxu0 0
    %2760 = vmatpush1.bf16.msra.mxu0 0
    %2761 = vmatprep.subr.bf16.mxu0 0
    %2762 = vmatpush1.bf16.msra.mxu0 0
    %2763 = vmatprep.mubr.bf16.mxu0 0
    %2764 = vmatmul.mubr.bf16.gmra.mrb[0].mxu0 %v2659
    %v2765 = vpop.f32.mrb[0].mxu0
    %v2766 = vadd.f32 %v2681, %v2765
    %v2767 = vpop.f32.mrb[0].mxu0
    %v2768 = vpop.f32.mrb[0].mxu0
    %v2769 = vpop.f32.mrb[0].mxu0
    %2770 = vdwg.mxu0
    %v2771 = vtanh.pop %v2766
    %v2772 = vld [vmem:[%s11] sm:$0x1]
    %v2774 = vlaneseq
    %v2775 = vshrl.u32 %v2774, 7
    %v2776 = vsub.s32 0, %v2775
    %v2777 = vrot.slane %v2772, %v2776
    %v2779 = vmul.f32 %v2771, %v2777
    %vm2780 = vcmask 1041408
    %v2781 = vsel %vm2780, %v2779, 0.0
    %2782 = vadd.xlane.f32.xlu0 %v2781
    %v2783 = vpop.xlane.xlu0 %2782
    %v2784 = vld [vmem:[#allocation2] sm:$0x1]
    %v2786 = vlaneseq
    %v2787 = vshrl.u32 %v2786, 7
    %v2788 = vsub.s32 0, %v2787
    %v2789 = vrot.slane %v2784, %v2788
    %v2791 = vadd.f32 %v2783, %v2789
    %v2792 = vxor.u32 %v2791, 2147483648
    %v2793 = vmul.f32 %v2792, 1.442695
    %v2794 = vpow.pop %v2793
    %v2795 = vadd.f32 %v2794, 1.0
    %v2796 = vrcp.pop %v2795
    %v2797 = vmul.f32 1.0, %v2796
    %v2798 = vmul.f32 %v2797, 5.0
    %2800 = vset.pattern.permute.xlu0 0
    %2801 = vperm.xlu0 %2800, %v2798
    %v2802 = vpop.permute.xlu0 %2801
    %2804 = vst [vmem:[%s13] sm:$0x3] %v2802
    // Predicated region
    $region62: #{bert_stsb_forward.1} parent=1 // pred_check
      _
    $region63: #{bert_stsb_forward.1} parent=1 // pred_check_branch
      %2806 = sbr.rel (0) target = $region65
    $region64: #{bert_stsb_forward.1} parent=1 // pred_region
      _
    $region65: #{bert_stsb_forward.1} parent=1 // pred_fallthru
      _
    // Predicated region
    $region66: #{bert_stsb_forward.1} parent=1 // pred_check
      _
    $region67: #{bert_stsb_forward.1} parent=1 // pred_check_branch
      %2808 = sbr.rel (0) target = $region69
    $region68: #{bert_stsb_forward.1} parent=1 // pred_region
      _
    $region69: #{bert_stsb_forward.1} parent=1 // pred_fallthru
      _
    %2809 = vsyncpa [#allocation4], 1
    %2810 = vsyncpa [#allocation6], 1

</llo_original>
